<compile_context>
chip_gen: v6e
topology: v6e:2x2x1
jax: 0.10.0
libtpu: 0.0.40
codegen_flags: <defaults>
</compile_context>

<pallas_src>
import jax
import jax.numpy as jnp
from jax.experimental import pallas as pl
from jax.experimental.pallas import tpu as pltpu

EPS = 1e-5  # PyTorch InstanceNorm2d default eps (affine=False, track_stats=False)


# ---------------------------------------------------------------------------
# Pallas kernel: one image per grid step (grid axis = batch, "parallel").
# Channels-last layout: at production CycleGAN sizes (C=256) the channel axis
# is lane-dense; at tiny C the kernel is DMA/vst bound and the unpadded real-C
# layout minimizes exactly that traffic.
# ---------------------------------------------------------------------------
def _residual_block_kernel(x_ref, w1_ref, b1_ref, w2_ref, b2_ref, o_ref,
                           xpad_ref, col_ref):
    _, H, W, C = x_ref.shape
    HW = H * W

    x = x_ref[0]                                      # (H, W, C) f32

    def reflect_pad_to_scratch(img):                  # img: (H, W, C) f32
        # ReflectionPad2d(1), written directly into the padded VMEM scratch.
        xpad_ref[1:H + 1, 1:W + 1, :] = img
        xpad_ref[0:1, 1:W + 1, :] = img[1:2]
        xpad_ref[H + 1:H + 2, 1:W + 1, :] = img[H - 2:H - 1]
        # Columns (and corners) reflect from the already row-padded scratch.
        xpad_ref[:, 0:1, :] = xpad_ref[:, 2:3, :]
        xpad_ref[:, W + 1:W + 2, :] = xpad_ref[:, W - 1:W, :]

    def conv_instance_norm(img, w_ref, b_ref, relu):
        # ReflectionPad2d(1) + Conv2d(3x3): one im2col matmul with the REAL
        # 9*C contraction (bf16 operands, f32 accumulation on the MXU), then a
        # fused InstanceNorm (+ optional ReLU).
        reflect_pad_to_scratch(img)
        # TODO(synk): for production shapes (C=256, H=W=64) tile this im2col +
        # matmul over HW row chunks so the col scratch fits v7x's 64 MiB VMEM.
        for dy in range(3):
            for dx in range(3):
                t = dy * 3 + dx
                col_ref[:, t * C:(t + 1) * C] = (
                    xpad_ref[dy:dy + H, dx:dx + W, :].reshape(HW, C))
        y = jnp.dot(col_ref[...].astype(jnp.bfloat16), w_ref[...],
                    preferred_element_type=jnp.float32)        # (HW, C) f32
        y = y + b_ref[...]
        # InstanceNorm2d (affine=False, biased variance), centered two-pass.
        mean = jnp.sum(y, axis=0, keepdims=True) * (1.0 / HW)
        yc = y - mean
        var = jnp.sum(yc * yc, axis=0, keepdims=True) * (1.0 / HW)
        out = yc * jax.lax.rsqrt(var + EPS)
        if relu:
            out = jnp.maximum(out, 0.0)
        return out                                             # (HW, C) f32

    # Block 1: pad -> conv -> instance-norm -> ReLU
    y = conv_instance_norm(x, w1_ref, b1_ref, relu=True)
    # Block 2: pad -> conv -> instance-norm
    z = conv_instance_norm(y.reshape(H, W, C), w2_ref, b2_ref, relu=False)
    # Residual add (f32).
    o_ref[0] = x + z.reshape(H, W, C)


# ---------------------------------------------------------------------------
# pallas_call wrapper (NHWC, real channel count everywhere)
# ---------------------------------------------------------------------------
def _vmem_limit_bytes(H, W, C):
    blk = H * W * C * 4                       # one f32 x / out block
    wgt = 9 * C * C * 2 + C * 4               # bf16 weights + f32 bias
    xpad = (H + 2) * (W + 2) * C * 4
    col = H * W * 9 * C * 4
    # x and out blocks double-buffered by the pipeline; weights/bias too.
    need = 2 * 2 * blk + 2 * 2 * wgt + xpad + col
    # Generous headroom for lane/sublane layout padding and Mosaic internals,
    # capped at v7x's 64 MiB physical VMEM.
    return int(min(max(4 * need + (8 << 20), 32 << 20), 64 << 20))


def _residual_block_nhwc(x_nhwc, w1_mat, b1_row, w2_mat, b2_row):
    N, H, W, C = x_nhwc.shape
    HW = H * W

    cost = pl.CostEstimate(
        flops=N * 2 * 2 * HW * 9 * C * C,                 # 2 convs per image
        transcendentals=N * 2 * C,                        # rsqrt per channel
        bytes_accessed=2 * N * HW * C * 4 + 2 * (9 * C * C * 2 + C * 4),
    )

    grid_spec = pltpu.PrefetchScalarGridSpec(
        num_scalar_prefetch=0,
        grid=(N,),
        in_specs=[
            pl.BlockSpec((1, H, W, C), lambda n: (n, 0, 0, 0)),   # x
            pl.BlockSpec((9 * C, C), lambda n: (0, 0)),           # w1 (im2col)
            pl.BlockSpec((1, C), lambda n: (0, 0)),               # b1
            pl.BlockSpec((9 * C, C), lambda n: (0, 0)),           # w2 (im2col)
            pl.BlockSpec((1, C), lambda n: (0, 0)),               # b2
        ],
        out_specs=pl.BlockSpec((1, H, W, C), lambda n: (n, 0, 0, 0)),
        scratch_shapes=[
            pltpu.VMEM((H + 2, W + 2, C), jnp.float32),   # reflect-padded img
            pltpu.VMEM((HW, 9 * C), jnp.float32),         # im2col matrix
        ],
    )

    return pl.pallas_call(
        _residual_block_kernel,
        out_shape=jax.ShapeDtypeStruct((N, H, W, C), jnp.float32),
        grid_spec=grid_spec,
        cost_estimate=cost,
        compiler_params=pltpu.CompilerParams(
            dimension_semantics=("parallel",),
            vmem_limit_bytes=_vmem_limit_bytes(H, W, C),
        ),
    )(x_nhwc, w1_mat, b1_row, w2_mat, b2_row)


@jax.jit  # jit caches by shape/dtype: no per-call re-lower / re-compile.
def residual_block(x_nchw, w1_oihw, b1, w2_oihw, b2):
    """PyTorch-facing forward: NCHW f32 in, NCHW f32 out."""
    N, C, H, W = x_nchw.shape
    x = jnp.transpose(x_nchw, (0, 2, 3, 1))           # NCHW -> NHWC (real C)

    def prep_w(w_oihw):
        w = jnp.transpose(w_oihw, (2, 3, 1, 0))       # OIHW -> (3, 3, I, O)
        # Row index = (dy*3 + dx)*C + ci, matching the in-kernel im2col.
        return w.reshape(9 * C, C).astype(jnp.bfloat16)

    def prep_b(b):
        return b.reshape(1, C).astype(jnp.float32)

    out = _residual_block_nhwc(x, prep_w(w1_oihw), prep_b(b1),
                               prep_w(w2_oihw), prep_b(b2))
    return jnp.transpose(out, (0, 3, 1, 2))           # NHWC -> NCHW


# ---------------------------------------------------------------------------
# Pure-JAX references (for correctness checks)
# ---------------------------------------------------------------------------
def reference_forward(x_nchw, w1_oihw, b1, w2_oihw, b2, matmul_dtype):
    """matmul_dtype=float32 -> exact module semantics; bfloat16 -> same math
    as the kernel's MXU path (bf16 operands, f32 accumulation)."""
    x = jnp.transpose(x_nchw, (0, 2, 3, 1))

    def conv(inp, w_oihw, b):
        p = jnp.pad(inp, ((0, 0), (1, 1), (1, 1), (0, 0)), mode="reflect")
        w = jnp.transpose(w_oihw, (2, 3, 1, 0))
        y = jax.lax.conv_general_dilated(
            p.astype(matmul_dtype), w.astype(matmul_dtype), (1, 1), "VALID",
            dimension_numbers=("NHWC", "HWIO", "NHWC"),
            preferred_element_type=jnp.float32,
            precision=jax.lax.Precision.HIGHEST)
        return y + b

    def inorm(y):
        m = jnp.mean(y, axis=(1, 2), keepdims=True)
        v = jnp.mean((y - m) ** 2, axis=(1, 2), keepdims=True)
        return (y - m) * jax.lax.rsqrt(v + EPS)

    y = jnp.maximum(inorm(conv(x, w1_oihw, b1)), 0.0)
    z = inorm(conv(y, w2_oihw, b2))
    return jnp.transpose(x + z, (0, 3, 1, 2))


# ---------------------------------------------------------------------------
if __name__ == "__main__":
    N, C, H, W = 2, 4, 16, 16   # in_features = C = 4

    key = jax.random.PRNGKey(0)
    kx, kw1, kb1, kw2, kb2 = jax.random.split(key, 5)

    x = jax.random.normal(kx, (N, C, H, W), dtype=jnp.float32)
    # Conv2d(C, C, 3) weights: (Cout, Cin, 3, 3) + bias (Cout,)
    w1 = 0.1 * jax.random.normal(kw1, (C, C, 3, 3), dtype=jnp.float32)
    b1 = 0.1 * jax.random.normal(kb1, (C,), dtype=jnp.float32)
    w2 = 0.1 * jax.random.normal(kw2, (C, C, 3, 3), dtype=jnp.float32)
    b2 = 0.1 * jax.random.normal(kb2, (C,), dtype=jnp.float32)

    out = jax.block_until_ready(residual_block(x, w1, b1, w2, b2))
    assert out.shape == (N, C, H, W), out.shape
    assert out.dtype == jnp.float32, out.dtype

    # Second call exercises the jit compile cache (no re-compilation).
    out2 = jax.block_until_ready(residual_block(x, w1, b1, w2, b2))
    assert bool(jnp.all(out == out2))

    # Tight check vs. a reference using the same bf16-operand / f32-accumulate
    # matmul math as the kernel (validates structure: padding, conv, norm,
    # relu, residual).
    ref_bf16 = jax.block_until_ready(
        reference_forward(x, w1, b1, w2, b2, jnp.bfloat16))
    err_tight = float(jnp.max(jnp.abs(out - ref_bf16)))
    assert jnp.allclose(out, ref_bf16, atol=1e-2, rtol=1e-2), err_tight

    # Loose check vs. the full-f32 module semantics (bf16 MXU precision only).
    ref_f32 = jax.block_until_ready(
        reference_forward(x, w1, b1, w2, b2, jnp.float32))
    err_loose = float(jnp.max(jnp.abs(out - ref_f32)))
    assert jnp.allclose(out, ref_f32, atol=1e-1, rtol=1e-1), err_loose

    print("KERNEL_OK")
</pallas_src>

<mosaic_0001>
module attributes {stable_mosaic.version = 11 : i64} {
  func.func @_residual_block_kernel(%arg0: i32, %arg1: memref<1x16x16x4xf32, #tpu.memory_space<vmem>>, %arg2: memref<36x4xbf16, #tpu.memory_space<vmem>>, %arg3: memref<1x4xf32, #tpu.memory_space<vmem>>, %arg4: memref<36x4xbf16, #tpu.memory_space<vmem>>, %arg5: memref<1x4xf32, #tpu.memory_space<vmem>>, %arg6: memref<1x16x16x4xf32, #tpu.memory_space<vmem>>, %arg7: memref<18x18x4xf32, #tpu.memory_space<vmem>>, %arg8: memref<256x36xf32, #tpu.memory_space<vmem>>) attributes {dimension_semantics = [#tpu.dimension_semantics<parallel>], iteration_bounds = array<i64: 2>, scalar_prefetch = 0 : i64, scratch_operands = 2 : i64, tpu.core_type = #tpu.core_type<tc>, window_params = [{transform_indices = @transform_0, window_bounds = array<i64: 1, 16, 16, 4>}, {pipeline_mode = #tpu.pipeline_mode<synchronous>, transform_indices = @transform_1, window_bounds = array<i64: 36, 4>}, {pipeline_mode = #tpu.pipeline_mode<synchronous>, transform_indices = @transform_2, window_bounds = array<i64: 1, 4>}, {pipeline_mode = #tpu.pipeline_mode<synchronous>, transform_indices = @transform_3, window_bounds = array<i64: 36, 4>}, {pipeline_mode = #tpu.pipeline_mode<synchronous>, transform_indices = @transform_4, window_bounds = array<i64: 1, 4>}, {transform_indices = @transform_5, window_bounds = array<i64: 1, 16, 16, 4>}]} {
    %c0 = arith.constant 0 : index
    %c0_0 = arith.constant 0 : index
    %c0_1 = arith.constant 0 : index
    %c0_2 = arith.constant 0 : index
    %0 = vector.load %arg1[%c0, %c0_0, %c0_1, %c0_2] : memref<1x16x16x4xf32, #tpu.memory_space<vmem>>, vector<1x16x16x4xf32>
    %1 = vector.shape_cast %0 : vector<1x16x16x4xf32> to vector<16x16x4xf32>
    %c1 = arith.constant 1 : index
    %c1_3 = arith.constant 1 : index
    %c0_4 = arith.constant 0 : index
    %2 = vector.load %arg7[%c1, %c1_3, %c0_4] : memref<18x18x4xf32, #tpu.memory_space<vmem>>, vector<16x16x4xf32>
    tpu.vector_store %arg7[%c1, %c1_3, %c0_4], %1 {strides = array<i32>} : memref<18x18x4xf32, #tpu.memory_space<vmem>>, vector<16x16x4xf32>,
    %3 = vector.extract_strided_slice %1 {offsets = [1, 0, 0], sizes = [1, 16, 4], strides = [1, 1, 1]} : vector<16x16x4xf32> to vector<1x16x4xf32>
    %c0_5 = arith.constant 0 : index
    %c1_6 = arith.constant 1 : index
    %c0_7 = arith.constant 0 : index
    %4 = vector.load %arg7[%c0_5, %c1_6, %c0_7] : memref<18x18x4xf32, #tpu.memory_space<vmem>>, vector<1x16x4xf32>
    tpu.vector_store %arg7[%c0_5, %c1_6, %c0_7], %3 {strides = array<i32>} : memref<18x18x4xf32, #tpu.memory_space<vmem>>, vector<1x16x4xf32>,
    %5 = vector.extract_strided_slice %1 {offsets = [14, 0, 0], sizes = [1, 16, 4], strides = [1, 1, 1]} : vector<16x16x4xf32> to vector<1x16x4xf32>
    %c17 = arith.constant 17 : index
    %c1_8 = arith.constant 1 : index
    %c0_9 = arith.constant 0 : index
    %6 = vector.load %arg7[%c17, %c1_8, %c0_9] : memref<18x18x4xf32, #tpu.memory_space<vmem>>, vector<1x16x4xf32>
    tpu.vector_store %arg7[%c17, %c1_8, %c0_9], %5 {strides = array<i32>} : memref<18x18x4xf32, #tpu.memory_space<vmem>>, vector<1x16x4xf32>,
    %c0_10 = arith.constant 0 : index
    %c2 = arith.constant 2 : index
    %c0_11 = arith.constant 0 : index
    %7 = vector.load %arg7[%c0_10, %c2, %c0_11] : memref<18x18x4xf32, #tpu.memory_space<vmem>>, vector<18x1x4xf32>
    %c0_12 = arith.constant 0 : index
    %c0_13 = arith.constant 0 : index
    %c0_14 = arith.constant 0 : index
    %8 = vector.load %arg7[%c0_12, %c0_13, %c0_14] : memref<18x18x4xf32, #tpu.memory_space<vmem>>, vector<18x1x4xf32>
    tpu.vector_store %arg7[%c0_12, %c0_13, %c0_14], %7 {strides = array<i32>} : memref<18x18x4xf32, #tpu.memory_space<vmem>>, vector<18x1x4xf32>,
    %c0_15 = arith.constant 0 : index
    %c15 = arith.constant 15 : index
    %c0_16 = arith.constant 0 : index
    %9 = vector.load %arg7[%c0_15, %c15, %c0_16] : memref<18x18x4xf32, #tpu.memory_space<vmem>>, vector<18x1x4xf32>
    %c0_17 = arith.constant 0 : index
    %c17_18 = arith.constant 17 : index
    %c0_19 = arith.constant 0 : index
    %10 = vector.load %arg7[%c0_17, %c17_18, %c0_19] : memref<18x18x4xf32, #tpu.memory_space<vmem>>, vector<18x1x4xf32>
    tpu.vector_store %arg7[%c0_17, %c17_18, %c0_19], %9 {strides = array<i32>} : memref<18x18x4xf32, #tpu.memory_space<vmem>>, vector<18x1x4xf32>,
    %c0_20 = arith.constant 0 : index
    %c0_21 = arith.constant 0 : index
    %c0_22 = arith.constant 0 : index
    %11 = vector.load %arg7[%c0_20, %c0_21, %c0_22] : memref<18x18x4xf32, #tpu.memory_space<vmem>>, vector<16x16x4xf32>
    %12 = vector.shape_cast %11 : vector<16x16x4xf32> to vector<256x4xf32>
    %c0_23 = arith.constant 0 : index
    %c0_24 = arith.constant 0 : index
    %13 = vector.load %arg8[%c0_23, %c0_24] : memref<256x36xf32, #tpu.memory_space<vmem>>, vector<256x4xf32>
    tpu.vector_store %arg8[%c0_23, %c0_24], %12 {strides = array<i32>} : memref<256x36xf32, #tpu.memory_space<vmem>>, vector<256x4xf32>,
    %c0_25 = arith.constant 0 : index
    %c1_26 = arith.constant 1 : index
    %c0_27 = arith.constant 0 : index
    %14 = vector.load %arg7[%c0_25, %c1_26, %c0_27] : memref<18x18x4xf32, #tpu.memory_space<vmem>>, vector<16x16x4xf32>
    %15 = vector.shape_cast %14 : vector<16x16x4xf32> to vector<256x4xf32>
    %c0_28 = arith.constant 0 : index
    %c4 = arith.constant 4 : index
    %16 = vector.load %arg8[%c0_28, %c4] : memref<256x36xf32, #tpu.memory_space<vmem>>, vector<256x4xf32>
    tpu.vector_store %arg8[%c0_28, %c4], %15 {strides = array<i32>} : memref<256x36xf32, #tpu.memory_space<vmem>>, vector<256x4xf32>,
    %c0_29 = arith.constant 0 : index
    %c2_30 = arith.constant 2 : index
    %c0_31 = arith.constant 0 : index
    %17 = vector.load %arg7[%c0_29, %c2_30, %c0_31] : memref<18x18x4xf32, #tpu.memory_space<vmem>>, vector<16x16x4xf32>
    %18 = vector.shape_cast %17 : vector<16x16x4xf32> to vector<256x4xf32>
    %c0_32 = arith.constant 0 : index
    %c8 = arith.constant 8 : index
    %19 = vector.load %arg8[%c0_32, %c8] : memref<256x36xf32, #tpu.memory_space<vmem>>, vector<256x4xf32>
    tpu.vector_store %arg8[%c0_32, %c8], %18 {strides = array<i32>} : memref<256x36xf32, #tpu.memory_space<vmem>>, vector<256x4xf32>,
    %c1_33 = arith.constant 1 : index
    %c0_34 = arith.constant 0 : index
    %c0_35 = arith.constant 0 : index
    %20 = vector.load %arg7[%c1_33, %c0_34, %c0_35] : memref<18x18x4xf32, #tpu.memory_space<vmem>>, vector<16x16x4xf32>
    %21 = vector.shape_cast %20 : vector<16x16x4xf32> to vector<256x4xf32>
    %c0_36 = arith.constant 0 : index
    %c12 = arith.constant 12 : index
    %22 = vector.load %arg8[%c0_36, %c12] : memref<256x36xf32, #tpu.memory_space<vmem>>, vector<256x4xf32>
    tpu.vector_store %arg8[%c0_36, %c12], %21 {strides = array<i32>} : memref<256x36xf32, #tpu.memory_space<vmem>>, vector<256x4xf32>,
    %c1_37 = arith.constant 1 : index
    %c1_38 = arith.constant 1 : index
    %c0_39 = arith.constant 0 : index
    %23 = vector.load %arg7[%c1_37, %c1_38, %c0_39] : memref<18x18x4xf32, #tpu.memory_space<vmem>>, vector<16x16x4xf32>
    %24 = vector.shape_cast %23 : vector<16x16x4xf32> to vector<256x4xf32>
    %c0_40 = arith.constant 0 : index
    %c16 = arith.constant 16 : index
    %25 = vector.load %arg8[%c0_40, %c16] : memref<256x36xf32, #tpu.memory_space<vmem>>, vector<256x4xf32>
    tpu.vector_store %arg8[%c0_40, %c16], %24 {strides = array<i32>} : memref<256x36xf32, #tpu.memory_space<vmem>>, vector<256x4xf32>,
    %c1_41 = arith.constant 1 : index
    %c2_42 = arith.constant 2 : index
    %c0_43 = arith.constant 0 : index
    %26 = vector.load %arg7[%c1_41, %c2_42, %c0_43] : memref<18x18x4xf32, #tpu.memory_space<vmem>>, vector<16x16x4xf32>
    %27 = vector.shape_cast %26 : vector<16x16x4xf32> to vector<256x4xf32>
    %c0_44 = arith.constant 0 : index
    %c20 = arith.constant 20 : index
    %28 = vector.load %arg8[%c0_44, %c20] : memref<256x36xf32, #tpu.memory_space<vmem>>, vector<256x4xf32>
    tpu.vector_store %arg8[%c0_44, %c20], %27 {strides = array<i32>} : memref<256x36xf32, #tpu.memory_space<vmem>>, vector<256x4xf32>,
    %c2_45 = arith.constant 2 : index
    %c0_46 = arith.constant 0 : index
    %c0_47 = arith.constant 0 : index
    %29 = vector.load %arg7[%c2_45, %c0_46, %c0_47] : memref<18x18x4xf32, #tpu.memory_space<vmem>>, vector<16x16x4xf32>
    %30 = vector.shape_cast %29 : vector<16x16x4xf32> to vector<256x4xf32>
    %c0_48 = arith.constant 0 : index
    %c24 = arith.constant 24 : index
    %31 = vector.load %arg8[%c0_48, %c24] : memref<256x36xf32, #tpu.memory_space<vmem>>, vector<256x4xf32>
    tpu.vector_store %arg8[%c0_48, %c24], %30 {strides = array<i32>} : memref<256x36xf32, #tpu.memory_space<vmem>>, vector<256x4xf32>,
    %c2_49 = arith.constant 2 : index
    %c1_50 = arith.constant 1 : index
    %c0_51 = arith.constant 0 : index
    %32 = vector.load %arg7[%c2_49, %c1_50, %c0_51] : memref<18x18x4xf32, #tpu.memory_space<vmem>>, vector<16x16x4xf32>
    %33 = vector.shape_cast %32 : vector<16x16x4xf32> to vector<256x4xf32>
    %c0_52 = arith.constant 0 : index
    %c28 = arith.constant 28 : index
    %34 = vector.load %arg8[%c0_52, %c28] : memref<256x36xf32, #tpu.memory_space<vmem>>, vector<256x4xf32>
    tpu.vector_store %arg8[%c0_52, %c28], %33 {strides = array<i32>} : memref<256x36xf32, #tpu.memory_space<vmem>>, vector<256x4xf32>,
    %c2_53 = arith.constant 2 : index
    %c2_54 = arith.constant 2 : index
    %c0_55 = arith.constant 0 : index
    %35 = vector.load %arg7[%c2_53, %c2_54, %c0_55] : memref<18x18x4xf32, #tpu.memory_space<vmem>>, vector<16x16x4xf32>
    %36 = vector.shape_cast %35 : vector<16x16x4xf32> to vector<256x4xf32>
    %c0_56 = arith.constant 0 : index
    %c32 = arith.constant 32 : index
    %37 = vector.load %arg8[%c0_56, %c32] : memref<256x36xf32, #tpu.memory_space<vmem>>, vector<256x4xf32>
    tpu.vector_store %arg8[%c0_56, %c32], %36 {strides = array<i32>} : memref<256x36xf32, #tpu.memory_space<vmem>>, vector<256x4xf32>,
    %c0_57 = arith.constant 0 : index
    %c0_58 = arith.constant 0 : index
    %38 = vector.load %arg8[%c0_57, %c0_58] : memref<256x36xf32, #tpu.memory_space<vmem>>, vector<256x36xf32>
    %39 = arith.truncf %38 : vector<256x36xf32> to vector<256x36xbf16>
    %c0_59 = arith.constant 0 : index
    %c0_60 = arith.constant 0 : index
    %40 = vector.load %arg2[%c0_59, %c0_60] : memref<36x4xbf16, #tpu.memory_space<vmem>>, vector<36x4xbf16>
    %cst = arith.constant dense<0.000000e+00> : vector<256x4xf32>
    %41 = tpu.matmul %39, %40, %cst {dimension_numbers = #tpu.dot_dimension_numbers<[1], [0], [0], [1], [0, 0, 1, 1], [], []>} : vector<256x36xbf16>, vector<36x4xbf16>, vector<256x4xf32> -> vector<256x4xf32>
    %c0_61 = arith.constant 0 : index
    %c0_62 = arith.constant 0 : index
    %42 = vector.load %arg3[%c0_61, %c0_62] : memref<1x4xf32, #tpu.memory_space<vmem>>, vector<1x4xf32>
    %43 = vector.broadcast %42 : vector<1x4xf32> to vector<256x4xf32>
    %44 = arith.addf %41, %43 : vector<256x4xf32>
    %cst_63 = arith.constant dense<0.000000e+00> : vector<4xf32>
    %45 = vector.multi_reduction <add>, %44, %cst_63 [0] : vector<256x4xf32> to vector<4xf32>
    %46 = vector.shape_cast %45 : vector<4xf32> to vector<1x4xf32>
    %cst_64 = arith.constant 3.906250e-03 : f32
    %47 = vector.broadcast %cst_64 : f32 to vector<1x4xf32>
    %48 = arith.mulf %46, %47 : vector<1x4xf32>
    %49 = vector.broadcast %48 : vector<1x4xf32> to vector<256x4xf32>
    %50 = arith.subf %44, %49 : vector<256x4xf32>
    %51 = arith.mulf %50, %50 : vector<256x4xf32>
    %cst_65 = arith.constant dense<0.000000e+00> : vector<4xf32>
    %52 = vector.multi_reduction <add>, %51, %cst_65 [0] : vector<256x4xf32> to vector<4xf32>
    %53 = vector.shape_cast %52 : vector<4xf32> to vector<1x4xf32>
    %cst_66 = arith.constant 3.906250e-03 : f32
    %54 = vector.broadcast %cst_66 : f32 to vector<1x4xf32>
    %55 = arith.mulf %53, %54 : vector<1x4xf32>
    %cst_67 = arith.constant 9.99999974E-6 : f32
    %56 = vector.broadcast %cst_67 : f32 to vector<1x4xf32>
    %57 = arith.addf %55, %56 : vector<1x4xf32>
    %58 = math.rsqrt %57 : vector<1x4xf32>
    %59 = vector.broadcast %58 : vector<1x4xf32> to vector<256x4xf32>
    %60 = arith.mulf %50, %59 : vector<256x4xf32>
    %cst_68 = arith.constant 0.000000e+00 : f32
    %61 = vector.broadcast %cst_68 : f32 to vector<256x4xf32>
    %62 = arith.maximumf %60, %61 : vector<256x4xf32>
    %63 = vector.shape_cast %62 : vector<256x4xf32> to vector<16x16x4xf32>
    %c1_69 = arith.constant 1 : index
    %c1_70 = arith.constant 1 : index
    %c0_71 = arith.constant 0 : index
    %64 = vector.load %arg7[%c1_69, %c1_70, %c0_71] : memref<18x18x4xf32, #tpu.memory_space<vmem>>, vector<16x16x4xf32>
    tpu.vector_store %arg7[%c1_69, %c1_70, %c0_71], %63 {strides = array<i32>} : memref<18x18x4xf32, #tpu.memory_space<vmem>>, vector<16x16x4xf32>,
    %65 = vector.extract_strided_slice %63 {offsets = [1, 0, 0], sizes = [1, 16, 4], strides = [1, 1, 1]} : vector<16x16x4xf32> to vector<1x16x4xf32>
    %c0_72 = arith.constant 0 : index
    %c1_73 = arith.constant 1 : index
    %c0_74 = arith.constant 0 : index
    %66 = vector.load %arg7[%c0_72, %c1_73, %c0_74] : memref<18x18x4xf32, #tpu.memory_space<vmem>>, vector<1x16x4xf32>
    tpu.vector_store %arg7[%c0_72, %c1_73, %c0_74], %65 {strides = array<i32>} : memref<18x18x4xf32, #tpu.memory_space<vmem>>, vector<1x16x4xf32>,
    %67 = vector.extract_strided_slice %63 {offsets = [14, 0, 0], sizes = [1, 16, 4], strides = [1, 1, 1]} : vector<16x16x4xf32> to vector<1x16x4xf32>
    %c17_75 = arith.constant 17 : index
    %c1_76 = arith.constant 1 : index
    %c0_77 = arith.constant 0 : index
    %68 = vector.load %arg7[%c17_75, %c1_76, %c0_77] : memref<18x18x4xf32, #tpu.memory_space<vmem>>, vector<1x16x4xf32>
    tpu.vector_store %arg7[%c17_75, %c1_76, %c0_77], %67 {strides = array<i32>} : memref<18x18x4xf32, #tpu.memory_space<vmem>>, vector<1x16x4xf32>,
    %c0_78 = arith.constant 0 : index
    %c2_79 = arith.constant 2 : index
    %c0_80 = arith.constant 0 : index
    %69 = vector.load %arg7[%c0_78, %c2_79, %c0_80] : memref<18x18x4xf32, #tpu.memory_space<vmem>>, vector<18x1x4xf32>
    %c0_81 = arith.constant 0 : index
    %c0_82 = arith.constant 0 : index
    %c0_83 = arith.constant 0 : index
    %70 = vector.load %arg7[%c0_81, %c0_82, %c0_83] : memref<18x18x4xf32, #tpu.memory_space<vmem>>, vector<18x1x4xf32>
    tpu.vector_store %arg7[%c0_81, %c0_82, %c0_83], %69 {strides = array<i32>} : memref<18x18x4xf32, #tpu.memory_space<vmem>>, vector<18x1x4xf32>,
    %c0_84 = arith.constant 0 : index
    %c15_85 = arith.constant 15 : index
    %c0_86 = arith.constant 0 : index
    %71 = vector.load %arg7[%c0_84, %c15_85, %c0_86] : memref<18x18x4xf32, #tpu.memory_space<vmem>>, vector<18x1x4xf32>
    %c0_87 = arith.constant 0 : index
    %c17_88 = arith.constant 17 : index
    %c0_89 = arith.constant 0 : index
    %72 = vector.load %arg7[%c0_87, %c17_88, %c0_89] : memref<18x18x4xf32, #tpu.memory_space<vmem>>, vector<18x1x4xf32>
    tpu.vector_store %arg7[%c0_87, %c17_88, %c0_89], %71 {strides = array<i32>} : memref<18x18x4xf32, #tpu.memory_space<vmem>>, vector<18x1x4xf32>,
    %c0_90 = arith.constant 0 : index
    %c0_91 = arith.constant 0 : index
    %c0_92 = arith.constant 0 : index
    %73 = vector.load %arg7[%c0_90, %c0_91, %c0_92] : memref<18x18x4xf32, #tpu.memory_space<vmem>>, vector<16x16x4xf32>
    %74 = vector.shape_cast %73 : vector<16x16x4xf32> to vector<256x4xf32>
    %c0_93 = arith.constant 0 : index
    %c0_94 = arith.constant 0 : index
    %75 = vector.load %arg8[%c0_93, %c0_94] : memref<256x36xf32, #tpu.memory_space<vmem>>, vector<256x4xf32>
    tpu.vector_store %arg8[%c0_93, %c0_94], %74 {strides = array<i32>} : memref<256x36xf32, #tpu.memory_space<vmem>>, vector<256x4xf32>,
    %c0_95 = arith.constant 0 : index
    %c1_96 = arith.constant 1 : index
    %c0_97 = arith.constant 0 : index
    %76 = vector.load %arg7[%c0_95, %c1_96, %c0_97] : memref<18x18x4xf32, #tpu.memory_space<vmem>>, vector<16x16x4xf32>
    %77 = vector.shape_cast %76 : vector<16x16x4xf32> to vector<256x4xf32>
    %c0_98 = arith.constant 0 : index
    %c4_99 = arith.constant 4 : index
    %78 = vector.load %arg8[%c0_98, %c4_99] : memref<256x36xf32, #tpu.memory_space<vmem>>, vector<256x4xf32>
    tpu.vector_store %arg8[%c0_98, %c4_99], %77 {strides = array<i32>} : memref<256x36xf32, #tpu.memory_space<vmem>>, vector<256x4xf32>,
    %c0_100 = arith.constant 0 : index
    %c2_101 = arith.constant 2 : index
    %c0_102 = arith.constant 0 : index
    %79 = vector.load %arg7[%c0_100, %c2_101, %c0_102] : memref<18x18x4xf32, #tpu.memory_space<vmem>>, vector<16x16x4xf32>
    %80 = vector.shape_cast %79 : vector<16x16x4xf32> to vector<256x4xf32>
    %c0_103 = arith.constant 0 : index
    %c8_104 = arith.constant 8 : index
    %81 = vector.load %arg8[%c0_103, %c8_104] : memref<256x36xf32, #tpu.memory_space<vmem>>, vector<256x4xf32>
    tpu.vector_store %arg8[%c0_103, %c8_104], %80 {strides = array<i32>} : memref<256x36xf32, #tpu.memory_space<vmem>>, vector<256x4xf32>,
    %c1_105 = arith.constant 1 : index
    %c0_106 = arith.constant 0 : index
    %c0_107 = arith.constant 0 : index
    %82 = vector.load %arg7[%c1_105, %c0_106, %c0_107] : memref<18x18x4xf32, #tpu.memory_space<vmem>>, vector<16x16x4xf32>
    %83 = vector.shape_cast %82 : vector<16x16x4xf32> to vector<256x4xf32>
    %c0_108 = arith.constant 0 : index
    %c12_109 = arith.constant 12 : index
    %84 = vector.load %arg8[%c0_108, %c12_109] : memref<256x36xf32, #tpu.memory_space<vmem>>, vector<256x4xf32>
    tpu.vector_store %arg8[%c0_108, %c12_109], %83 {strides = array<i32>} : memref<256x36xf32, #tpu.memory_space<vmem>>, vector<256x4xf32>,
    %c1_110 = arith.constant 1 : index
    %c1_111 = arith.constant 1 : index
    %c0_112 = arith.constant 0 : index
    %85 = vector.load %arg7[%c1_110, %c1_111, %c0_112] : memref<18x18x4xf32, #tpu.memory_space<vmem>>, vector<16x16x4xf32>
    %86 = vector.shape_cast %85 : vector<16x16x4xf32> to vector<256x4xf32>
    %c0_113 = arith.constant 0 : index
    %c16_114 = arith.constant 16 : index
    %87 = vector.load %arg8[%c0_113, %c16_114] : memref<256x36xf32, #tpu.memory_space<vmem>>, vector<256x4xf32>
    tpu.vector_store %arg8[%c0_113, %c16_114], %86 {strides = array<i32>} : memref<256x36xf32, #tpu.memory_space<vmem>>, vector<256x4xf32>,
    %c1_115 = arith.constant 1 : index
    %c2_116 = arith.constant 2 : index
    %c0_117 = arith.constant 0 : index
    %88 = vector.load %arg7[%c1_115, %c2_116, %c0_117] : memref<18x18x4xf32, #tpu.memory_space<vmem>>, vector<16x16x4xf32>
    %89 = vector.shape_cast %88 : vector<16x16x4xf32> to vector<256x4xf32>
    %c0_118 = arith.constant 0 : index
    %c20_119 = arith.constant 20 : index
    %90 = vector.load %arg8[%c0_118, %c20_119] : memref<256x36xf32, #tpu.memory_space<vmem>>, vector<256x4xf32>
    tpu.vector_store %arg8[%c0_118, %c20_119], %89 {strides = array<i32>} : memref<256x36xf32, #tpu.memory_space<vmem>>, vector<256x4xf32>,
    %c2_120 = arith.constant 2 : index
    %c0_121 = arith.constant 0 : index
    %c0_122 = arith.constant 0 : index
    %91 = vector.load %arg7[%c2_120, %c0_121, %c0_122] : memref<18x18x4xf32, #tpu.memory_space<vmem>>, vector<16x16x4xf32>
    %92 = vector.shape_cast %91 : vector<16x16x4xf32> to vector<256x4xf32>
    %c0_123 = arith.constant 0 : index
    %c24_124 = arith.constant 24 : index
    %93 = vector.load %arg8[%c0_123, %c24_124] : memref<256x36xf32, #tpu.memory_space<vmem>>, vector<256x4xf32>
    tpu.vector_store %arg8[%c0_123, %c24_124], %92 {strides = array<i32>} : memref<256x36xf32, #tpu.memory_space<vmem>>, vector<256x4xf32>,
    %c2_125 = arith.constant 2 : index
    %c1_126 = arith.constant 1 : index
    %c0_127 = arith.constant 0 : index
    %94 = vector.load %arg7[%c2_125, %c1_126, %c0_127] : memref<18x18x4xf32, #tpu.memory_space<vmem>>, vector<16x16x4xf32>
    %95 = vector.shape_cast %94 : vector<16x16x4xf32> to vector<256x4xf32>
    %c0_128 = arith.constant 0 : index
    %c28_129 = arith.constant 28 : index
    %96 = vector.load %arg8[%c0_128, %c28_129] : memref<256x36xf32, #tpu.memory_space<vmem>>, vector<256x4xf32>
    tpu.vector_store %arg8[%c0_128, %c28_129], %95 {strides = array<i32>} : memref<256x36xf32, #tpu.memory_space<vmem>>, vector<256x4xf32>,
    %c2_130 = arith.constant 2 : index
    %c2_131 = arith.constant 2 : index
    %c0_132 = arith.constant 0 : index
    %97 = vector.load %arg7[%c2_130, %c2_131, %c0_132] : memref<18x18x4xf32, #tpu.memory_space<vmem>>, vector<16x16x4xf32>
    %98 = vector.shape_cast %97 : vector<16x16x4xf32> to vector<256x4xf32>
    %c0_133 = arith.constant 0 : index
    %c32_134 = arith.constant 32 : index
    %99 = vector.load %arg8[%c0_133, %c32_134] : memref<256x36xf32, #tpu.memory_space<vmem>>, vector<256x4xf32>
    tpu.vector_store %arg8[%c0_133, %c32_134], %98 {strides = array<i32>} : memref<256x36xf32, #tpu.memory_space<vmem>>, vector<256x4xf32>,
    %c0_135 = arith.constant 0 : index
    %c0_136 = arith.constant 0 : index
    %100 = vector.load %arg8[%c0_135, %c0_136] : memref<256x36xf32, #tpu.memory_space<vmem>>, vector<256x36xf32>
    %101 = arith.truncf %100 : vector<256x36xf32> to vector<256x36xbf16>
    %c0_137 = arith.constant 0 : index
    %c0_138 = arith.constant 0 : index
    %102 = vector.load %arg4[%c0_137, %c0_138] : memref<36x4xbf16, #tpu.memory_space<vmem>>, vector<36x4xbf16>
    %cst_139 = arith.constant dense<0.000000e+00> : vector<256x4xf32>
    %103 = tpu.matmul %101, %102, %cst_139 {dimension_numbers = #tpu.dot_dimension_numbers<[1], [0], [0], [1], [0, 0, 1, 1], [], []>} : vector<256x36xbf16>, vector<36x4xbf16>, vector<256x4xf32> -> vector<256x4xf32>
    %c0_140 = arith.constant 0 : index
    %c0_141 = arith.constant 0 : index
    %104 = vector.load %arg5[%c0_140, %c0_141] : memref<1x4xf32, #tpu.memory_space<vmem>>, vector<1x4xf32>
    %105 = vector.broadcast %104 : vector<1x4xf32> to vector<256x4xf32>
    %106 = arith.addf %103, %105 : vector<256x4xf32>
    %cst_142 = arith.constant dense<0.000000e+00> : vector<4xf32>
    %107 = vector.multi_reduction <add>, %106, %cst_142 [0] : vector<256x4xf32> to vector<4xf32>
    %108 = vector.shape_cast %107 : vector<4xf32> to vector<1x4xf32>
    %cst_143 = arith.constant 3.906250e-03 : f32
    %109 = vector.broadcast %cst_143 : f32 to vector<1x4xf32>
    %110 = arith.mulf %108, %109 : vector<1x4xf32>
    %111 = vector.broadcast %110 : vector<1x4xf32> to vector<256x4xf32>
    %112 = arith.subf %106, %111 : vector<256x4xf32>
    %113 = arith.mulf %112, %112 : vector<256x4xf32>
    %cst_144 = arith.constant dense<0.000000e+00> : vector<4xf32>
    %114 = vector.multi_reduction <add>, %113, %cst_144 [0] : vector<256x4xf32> to vector<4xf32>
    %115 = vector.shape_cast %114 : vector<4xf32> to vector<1x4xf32>
    %cst_145 = arith.constant 3.906250e-03 : f32
    %116 = vector.broadcast %cst_145 : f32 to vector<1x4xf32>
    %117 = arith.mulf %115, %116 : vector<1x4xf32>
    %cst_146 = arith.constant 9.99999974E-6 : f32
    %118 = vector.broadcast %cst_146 : f32 to vector<1x4xf32>
    %119 = arith.addf %117, %118 : vector<1x4xf32>
    %120 = math.rsqrt %119 : vector<1x4xf32>
    %121 = vector.broadcast %120 : vector<1x4xf32> to vector<256x4xf32>
    %122 = arith.mulf %112, %121 : vector<256x4xf32>
    %123 = vector.shape_cast %122 : vector<256x4xf32> to vector<16x16x4xf32>
    %124 = arith.addf %1, %123 : vector<16x16x4xf32>
    %c0_147 = arith.constant 0 : index
    %c0_148 = arith.constant 0 : index
    %c0_149 = arith.constant 0 : index
    %c0_150 = arith.constant 0 : index
    %125 = vector.load %arg6[%c0_147, %c0_148, %c0_149, %c0_150] : memref<1x16x16x4xf32, #tpu.memory_space<vmem>>, vector<1x16x16x4xf32>
    %126 = vector.shape_cast %125 : vector<1x16x16x4xf32> to vector<16x16x4xf32>
    %127 = vector.shape_cast %124 : vector<16x16x4xf32> to vector<1x16x16x4xf32>
    tpu.vector_store %arg6[%c0_147, %c0_148, %c0_149, %c0_150], %127 {strides = array<i32>} : memref<1x16x16x4xf32, #tpu.memory_space<vmem>>, vector<1x16x16x4xf32>,
    return
  }
  func.func @transform_0(%arg0: i32) -> (i32, i32, i32, i32) {
    %c0_i32 = arith.constant 0 : i32
    %c0_i32_0 = arith.constant 0 : i32
    %c0_i32_1 = arith.constant 0 : i32
    %c0_i32_2 = arith.constant 0 : i32
    return %arg0, %c0_i32, %c0_i32_0, %c0_i32_1 : i32, i32, i32, i32
  }
  func.func @transform_1(%arg0: i32) -> (i32, i32) {
    %c0_i32 = arith.constant 0 : i32
    %c0_i32_0 = arith.constant 0 : i32
    %c0_i32_1 = arith.constant 0 : i32
    return %c0_i32, %c0_i32_0 : i32, i32
  }
  func.func @transform_2(%arg0: i32) -> (i32, i32) {
    %c0_i32 = arith.constant 0 : i32
    %c0_i32_0 = arith.constant 0 : i32
    %c0_i32_1 = arith.constant 0 : i32
    return %c0_i32, %c0_i32_0 : i32, i32
  }
  func.func @transform_3(%arg0: i32) -> (i32, i32) {
    %c0_i32 = arith.constant 0 : i32
    %c0_i32_0 = arith.constant 0 : i32
    %c0_i32_1 = arith.constant 0 : i32
    return %c0_i32, %c0_i32_0 : i32, i32
  }
  func.func @transform_4(%arg0: i32) -> (i32, i32) {
    %c0_i32 = arith.constant 0 : i32
    %c0_i32_0 = arith.constant 0 : i32
    %c0_i32_1 = arith.constant 0 : i32
    return %c0_i32, %c0_i32_0 : i32, i32
  }
  func.func @transform_5(%arg0: i32) -> (i32, i32, i32, i32) {
    %c0_i32 = arith.constant 0 : i32
    %c0_i32_0 = arith.constant 0 : i32
    %c0_i32_1 = arith.constant 0 : i32
    %c0_i32_2 = arith.constant 0 : i32
    return %arg0, %c0_i32, %c0_i32_0, %c0_i32_1 : i32, i32, i32, i32
  }
}

</mosaic_0001>

<llo_original>
// kernel: residual_block.1
$region0: #{residual_block.1}
  #allocation0 [shape = 'u32[]', space=smem, size = 0x4, offset = 0x4, fixed_abs, tag = 'smem constant byte address 0x4 - core index']
  #allocation1 [shape = 'u32[144,128]{1,0:T(1,128)}', space=vmem, size = 0x12000, scoped, tag = 'internal scratch']
  #allocation2 [shape = 'f32[18,18,4]{2,1,0:T(8,128)}', space=vmem, size = 0x36000, scoped, tag = 'scratch operand']
  #allocation3 [shape = 'f32[256,36]{1,0:T(8,128)}', space=vmem, size = 0x20000, scoped, tag = 'scratch operand']
  %s0 = inlined_call_operand.vmem [shape: f32[2,16,16,4], index: 0, kind: input, shape index: {}]
  %s1 = inlined_call_operand.vmem [shape: bf16[36,4], index: 1, kind: input, shape index: {}]
  %s2 = inlined_call_operand.vmem [shape: f32[1,4], index: 2, kind: input, shape index: {}]
  %s3 = inlined_call_operand.vmem [shape: bf16[36,4], index: 3, kind: input, shape index: {}]
  %s4 = inlined_call_operand.vmem [shape: f32[1,4], index: 4, kind: input, shape index: {}]
  %s5 = inlined_call_operand.vmem [shape: f32[2,16,16,4], index: 5, kind: output, shape index: {}]
  %s6 = sld [smem:[#allocation0]]
  $region53: #{residual_block.1} parent=0
    _
  %s8 = ssub.s32 1, %s6
  %s9 = scalar_select 0, %s8, %s6
  loop: start=0, step=1, limit=4
  $region2: #{residual_block.1} parent=0 // loop_pre_header
    _
  $region3: #{residual_block.1} parent=0 // loop_header
    %s11 = sphi 0, %s15
    %p12 = scmp.ge.s32.totalorder %s11, 4
    %s21 = sphi 0, %s23
    %s24 = sphi 0, %s21
    %s25 = sphi 0, %s24
    %s41 = sphi 0, %s25
    %s45 = sphi 0, %s45
    %s47 = sphi 0, %s45
    %s48 = sphi 0, %s47
    %s62 = sphi 0, %s48
    %s66 = sphi 0, %s66
    %s68 = sphi 0, %s66
    %s69 = sphi 0, %s68
    %s83 = sphi 0, %s69
    %s87 = sphi 0, %s87
    %s89 = sphi 0, %s87
    %s90 = sphi 0, %s89
    %s104 = sphi 0, %s90
    %s108 = sphi 0, %s108
    %s110 = sphi 0, %s108
    %s111 = sphi 0, %s110
    %s125 = sphi 0, %s111
    %s131 = sphi 0, %s133
    %s134 = sphi 0, %s131
    %s135 = sphi 0, %s134
    %s151 = sphi 0, %s135
  $region4: #{residual_block.1} parent=0 // loop_header_branch
    %14 = sbr.rel (%p12) target = $region8
  $region5: #{residual_block.1} parent=0 // loop_body
    %s16 = ssub.s32 %s11, 1
    %s17 = ssub.s32 %s11, 2
    %s18 = sadd.s32 %s11, 1
    %s19 = ssub.s32 %s11, %s18
    %p20 = scmp.eq.s32.totalorder %s19, 0
    %s22 = sadd.s32 %s21, 1
    %s23 = scalar_select %p20, %s21, %s22
    %p26 = pneg %p20
    %p27 = scmp.eq.s32.totalorder %s11, 1
    %p28 = por %p26, %p27
    %p29 = scmp.ne.s32.totalorder %s21, %s24
    %p30 = scmp.eq.s32.totalorder %s11, 0
    %p31 = por %p29, %p30
    %p32 = scmp.ne.s32.totalorder %s21, %s24
    %p33 = scmp.eq.s32.totalorder %s16, 1
    %p34 = por %p32, %p33
    %p35 = scmp.ne.s32.totalorder %s24, %s25
    %p36 = scmp.eq.s32.totalorder %s16, 0
    %p37 = por %p35, %p36
    %p38 = scmp.ne.s32.totalorder %s24, %s25
    %p39 = scmp.eq.s32.totalorder %s17, 1
    %p40 = por %p38, %p39
    %p42 = scmp.ne.s32.totalorder %s25, %s41
    %p43 = scmp.eq.s32.totalorder %s17, 0
    %p44 = por %p42, %p43
    %s46 = sadd.s32 %s45, 1
    %p49 = scmp.eq.s32.totalorder %s11, 1
    %p50 = scmp.ne.s32.totalorder %s45, %s47
    %p51 = scmp.eq.s32.totalorder %s11, 0
    %p52 = por %p50, %p51
    %p53 = scmp.ne.s32.totalorder %s45, %s47
    %p54 = scmp.eq.s32.totalorder %s16, 1
    %p55 = por %p53, %p54
    %p56 = scmp.ne.s32.totalorder %s47, %s48
    %p57 = scmp.eq.s32.totalorder %s16, 0
    %p58 = por %p56, %p57
    %p59 = scmp.ne.s32.totalorder %s47, %s48
    %p60 = scmp.eq.s32.totalorder %s17, 1
    %p61 = por %p59, %p60
    %p63 = scmp.ne.s32.totalorder %s48, %s62
    %p64 = scmp.eq.s32.totalorder %s17, 0
    %p65 = por %p63, %p64
    %s67 = sadd.s32 %s66, 1
    %p70 = scmp.eq.s32.totalorder %s11, 1
    %p71 = scmp.ne.s32.totalorder %s66, %s68
    %p72 = scmp.eq.s32.totalorder %s11, 0
    %p73 = por %p71, %p72
    %p74 = scmp.ne.s32.totalorder %s66, %s68
    %p75 = scmp.eq.s32.totalorder %s16, 1
    %p76 = por %p74, %p75
    %p77 = scmp.ne.s32.totalorder %s68, %s69
    %p78 = scmp.eq.s32.totalorder %s16, 0
    %p79 = por %p77, %p78
    %p80 = scmp.ne.s32.totalorder %s68, %s69
    %p81 = scmp.eq.s32.totalorder %s17, 1
    %p82 = por %p80, %p81
    %p84 = scmp.ne.s32.totalorder %s69, %s83
    %p85 = scmp.eq.s32.totalorder %s17, 0
    %p86 = por %p84, %p85
    %s88 = sadd.s32 %s87, 1
    %p91 = scmp.eq.s32.totalorder %s11, 1
    %p92 = scmp.ne.s32.totalorder %s87, %s89
    %p93 = scmp.eq.s32.totalorder %s11, 0
    %p94 = por %p92, %p93
    %p95 = scmp.ne.s32.totalorder %s87, %s89
    %p96 = scmp.eq.s32.totalorder %s16, 1
    %p97 = por %p95, %p96
    %p98 = scmp.ne.s32.totalorder %s89, %s90
    %p99 = scmp.eq.s32.totalorder %s16, 0
    %p100 = por %p98, %p99
    %p101 = scmp.ne.s32.totalorder %s89, %s90
    %p102 = scmp.eq.s32.totalorder %s17, 1
    %p103 = por %p101, %p102
    %p105 = scmp.ne.s32.totalorder %s90, %s104
    %p106 = scmp.eq.s32.totalorder %s17, 0
    %p107 = por %p105, %p106
    %s109 = sadd.s32 %s108, 1
    %p112 = scmp.eq.s32.totalorder %s11, 1
    %p113 = scmp.ne.s32.totalorder %s108, %s110
    %p114 = scmp.eq.s32.totalorder %s11, 0
    %p115 = por %p113, %p114
    %p116 = scmp.ne.s32.totalorder %s108, %s110
    %p117 = scmp.eq.s32.totalorder %s16, 1
    %p118 = por %p116, %p117
    %p119 = scmp.ne.s32.totalorder %s110, %s111
    %p120 = scmp.eq.s32.totalorder %s16, 0
    %p121 = por %p119, %p120
    %p122 = scmp.ne.s32.totalorder %s110, %s111
    %p123 = scmp.eq.s32.totalorder %s17, 1
    %p124 = por %p122, %p123
    %p126 = scmp.ne.s32.totalorder %s111, %s125
    %p127 = scmp.eq.s32.totalorder %s17, 0
    %p128 = por %p126, %p127
    %s129 = ssub.s32 %s11, %s18
    %p130 = scmp.eq.s32.totalorder %s129, 0
    %s132 = sadd.s32 %s131, 1
    %s133 = scalar_select %p130, %s131, %s132
    %p136 = pneg %p130
    %p137 = scmp.eq.s32.totalorder %s11, 1
    %p138 = por %p136, %p137
    %p139 = scmp.ne.s32.totalorder %s131, %s134
    %p140 = scmp.eq.s32.totalorder %s11, 0
    %p141 = por %p139, %p140
    %p142 = scmp.ne.s32.totalorder %s131, %s134
    %p143 = scmp.eq.s32.totalorder %s16, 1
    %p144 = por %p142, %p143
    %p145 = scmp.ne.s32.totalorder %s134, %s135
    %p146 = scmp.eq.s32.totalorder %s16, 0
    %p147 = por %p145, %p146
    %p148 = scmp.ne.s32.totalorder %s134, %s135
    %p149 = scmp.eq.s32.totalorder %s17, 1
    %p150 = por %p148, %p149
    %p152 = scmp.ne.s32.totalorder %s135, %s151
    %p153 = scmp.eq.s32.totalorder %s17, 0
    %p154 = por %p152, %p153
    %p155 = scmp.le.s32.totalorder 1, %s11
    %p156 = scmp.lt.s32.totalorder %s11, 3
    %p157 = pnand %p155, %p156
    %p158 = pneg %p157
    // Predicated region
    $region9: #{residual_block.1} parent=5 // pred_check
      _
    $region10: #{residual_block.1} parent=5 // pred_check_branch
      %160 = sbr.rel (%p157) target = $region12
    $region11: #{residual_block.1} parent=5 // pred_region
      %s161 = ssub.s32 %s11, 1
      // Predicated region
      $region13: #{residual_block.1} parent=11 // pred_check
        %p162 = pneg %p58
      $region14: #{residual_block.1} parent=11 // pred_check_branch
        %164 = sbr.rel (%p162) target = $region16
      $region15: #{residual_block.1} parent=11 // pred_region
        _
      $region16: #{residual_block.1} parent=11 // pred_fallthru
        _
      // Predicated region
      $region17: #{residual_block.1} parent=11 // pred_check
        %p165 = pneg %p79
      $region18: #{residual_block.1} parent=11 // pred_check_branch
        %167 = sbr.rel (%p165) target = $region20
      $region19: #{residual_block.1} parent=11 // pred_region
        _
      $region20: #{residual_block.1} parent=11 // pred_fallthru
        _
      // Predicated region
      $region21: #{residual_block.1} parent=11 // pred_check
        %p168 = pneg %p100
      $region22: #{residual_block.1} parent=11 // pred_check_branch
        %170 = sbr.rel (%p168) target = $region24
      $region23: #{residual_block.1} parent=11 // pred_region
        _
      $region24: #{residual_block.1} parent=11 // pred_fallthru
        _
      // Predicated region
      $region25: #{residual_block.1} parent=11 // pred_check
        %p171 = pneg %p121
      $region26: #{residual_block.1} parent=11 // pred_check_branch
        %173 = sbr.rel (%p171) target = $region28
      $region27: #{residual_block.1} parent=11 // pred_region
        _
      $region28: #{residual_block.1} parent=11 // pred_fallthru
        _
    $region12: #{residual_block.1} parent=5 // pred_fallthru
      _
    %p174 = scmp.lt.s32.totalorder %s11, 2
    // Predicated region
    $region29: #{residual_block.1} parent=5 // pred_check
      %p175 = pneg %p174
    $region30: #{residual_block.1} parent=5 // pred_check_branch
      %177 = sbr.rel (%p175) target = $region32
    $region31: #{residual_block.1} parent=5 // pred_region
      // Predicated region
      $region33: #{residual_block.1} parent=31 // pred_check
        %p178 = pneg %p31
      $region34: #{residual_block.1} parent=31 // pred_check_branch
        %180 = sbr.rel (%p178) target = $region36
      $region35: #{residual_block.1} parent=31 // pred_region
        %p181 = scmp.lt.s32.totalorder %s11, 1
        %s182 = scalar_select %p181, %s11, 1
        %s183 = smul.addr %s182, 32
        %s184 = smul.addr %s183, 8
        %s185 = scalar_lea.vmem %s0, %s184
      $region36: #{residual_block.1} parent=31 // pred_fallthru
        _
    $region32: #{residual_block.1} parent=5 // pred_fallthru
      _
    %p186 = scmp.le.s32.totalorder 1, %s11
    %p187 = scmp.lt.s32.totalorder %s11, 3
    %p188 = pnand %p186, %p187
    %p189 = pneg %p188
    // Predicated region
    $region37: #{residual_block.1} parent=5 // pred_check
      _
    $region38: #{residual_block.1} parent=5 // pred_check_branch
      %191 = sbr.rel (%p188) target = $region40
    $region39: #{residual_block.1} parent=5 // pred_region
      %s192 = ssub.s32 %s11, 1
      %p193 = scmp.lt.s32.totalorder %s16, 1
      %s194 = scalar_select %p193, %s16, 1
      %s195 = smul.addr %s194, 32
      %s196 = smul.addr %s195, 8
      %s197 = scalar_lea.vmem %s0, %s196
      %p198 = pneg %p37
      %p199 = pneg %p34
      %p200 = pneg %p58
      %p201 = pneg %p55
      %p202 = pneg %p79
      %p203 = pneg %p76
      %p204 = pneg %p100
      %p205 = pneg %p97
      %p206 = pneg %p121
      %p207 = pneg %p118
      %p208 = pneg %p147
      %p209 = pneg %p144
      %p210 = scmp.lt.s32.totalorder %s16, 1
      %s211 = scalar_select %p210, %s16, 1
      %s212 = smul.addr %s211, 32
      %s213 = smul.addr %s212, 8
      %s214 = scalar_lea.vmem %s5, %s213
      %p215 = scmp.lt.s32.totalorder %s16, 1
      %s216 = scalar_select %p215, %s16, 1
      %s217 = smul.addr %s216, 32
      %s218 = smul.addr %s217, 8
      %s219 = scalar_lea.vmem %s0, %s218
      %p220 = scmp.lt.s32.totalorder %s16, 1
      %s221 = scalar_select %p220, %s16, 1
      %s222 = smul.addr %s221, 32
      %s223 = smul.addr %s222, 8
      %s224 = scalar_lea.vmem %s5, %s223
      %v226 = vld [vmem:[%s219] sm:$0xff]
      %v227 = vld [vmem:[%s219 + $0x8] sm:$0xff]
      %v228 = vld [vmem:[%s219 + $0x10] sm:$0xff]
      %v229 = vld [vmem:[%s219 + $0x18] sm:$0xff]
      %v230 = vld [vmem:[%s219 + $0x20] sm:$0xff]
      %v231 = vld [vmem:[%s219 + $0x28] sm:$0xff]
      %v232 = vld [vmem:[%s219 + $0x30] sm:$0xff]
      %v233 = vld [vmem:[%s219 + $0x38] sm:$0xff]
      %v234 = vld [vmem:[%s219 + $0x40] sm:$0xff]
      %v235 = vld [vmem:[%s219 + $0x48] sm:$0xff]
      %v236 = vld [vmem:[%s219 + $0x50] sm:$0xff]
      %v237 = vld [vmem:[%s219 + $0x58] sm:$0xff]
      %v238 = vld [vmem:[%s219 + $0x60] sm:$0xff]
      %v239 = vld [vmem:[%s219 + $0x68] sm:$0xff]
      %v240 = vld [vmem:[%s219 + $0x70] sm:$0xff]
      %v241 = vld [vmem:[%s219 + $0x78] sm:$0xff]
      %v242 = vld [vmem:[%s219 + $0x80] sm:$0xff]
      %v243 = vld [vmem:[%s219 + $0x88] sm:$0xff]
      %v244 = vld [vmem:[%s219 + $0x90] sm:$0xff]
      %v245 = vld [vmem:[%s219 + $0x98] sm:$0xff]
      %v246 = vld [vmem:[%s219 + $0xa0] sm:$0xff]
      %v247 = vld [vmem:[%s219 + $0xa8] sm:$0xff]
      %v248 = vld [vmem:[%s219 + $0xb0] sm:$0xff]
      %v249 = vld [vmem:[%s219 + $0xb8] sm:$0xff]
      %v250 = vld [vmem:[%s219 + $0xc0] sm:$0xff]
      %v251 = vld [vmem:[%s219 + $0xc8] sm:$0xff]
      %v252 = vld [vmem:[%s219 + $0xd0] sm:$0xff]
      %v253 = vld [vmem:[%s219 + $0xd8] sm:$0xff]
      %v254 = vld [vmem:[%s219 + $0xe0] sm:$0xff]
      %v255 = vld [vmem:[%s219 + $0xe8] sm:$0xff]
      %v256 = vld [vmem:[%s219 + $0xf0] sm:$0xff]
      %v257 = vld [vmem:[%s219 + $0xf8] sm:$0xff]
      %s258 = scalar_lea.vmem [#allocation2], 24
      %vm259 = vcmask 31744
      %260 = vst.msk [vmem:[%s258 + $0x1] sm:$0xff] %vm259, %v226
      %261 = vst.msk [vmem:[%s258 + $0x9] sm:$0xff] %vm259, %v227
      %262 = vst.msk [vmem:[%s258 + $0x19] sm:$0xff] %vm259, %v228
      %263 = vst.msk [vmem:[%s258 + $0x21] sm:$0xff] %vm259, %v229
      %264 = vst.msk [vmem:[%s258 + $0x31] sm:$0xff] %vm259, %v230
      %265 = vst.msk [vmem:[%s258 + $0x39] sm:$0xff] %vm259, %v231
      %266 = vst.msk [vmem:[%s258 + $0x49] sm:$0xff] %vm259, %v232
      %267 = vst.msk [vmem:[%s258 + $0x51] sm:$0xff] %vm259, %v233
      %268 = vst.msk [vmem:[%s258 + $0x61] sm:$0xff] %vm259, %v234
      %269 = vst.msk [vmem:[%s258 + $0x69] sm:$0xff] %vm259, %v235
      %270 = vst.msk [vmem:[%s258 + $0x79] sm:$0xff] %vm259, %v236
      %271 = vst.msk [vmem:[%s258 + $0x81] sm:$0xff] %vm259, %v237
      %272 = vst.msk [vmem:[%s258 + $0x91] sm:$0xff] %vm259, %v238
      %273 = vst.msk [vmem:[%s258 + $0x99] sm:$0xff] %vm259, %v239
      %274 = vst.msk [vmem:[%s258 + $0xa9] sm:$0xff] %vm259, %v240
      %275 = vst.msk [vmem:[%s258 + $0xb1] sm:$0xff] %vm259, %v241
      %276 = vst.msk [vmem:[%s258 + $0xc1] sm:$0xff] %vm259, %v242
      %277 = vst.msk [vmem:[%s258 + $0xc9] sm:$0xff] %vm259, %v243
      %278 = vst.msk [vmem:[%s258 + $0xd9] sm:$0xff] %vm259, %v244
      %279 = vst.msk [vmem:[%s258 + $0xe1] sm:$0xff] %vm259, %v245
      %280 = vst.msk [vmem:[%s258 + $0xf1] sm:$0xff] %vm259, %v246
      %281 = vst.msk [vmem:[%s258 + $0xf9] sm:$0xff] %vm259, %v247
      %282 = vst.msk [vmem:[%s258 + $0x109] sm:$0xff] %vm259, %v248
      %283 = vst.msk [vmem:[%s258 + $0x111] sm:$0xff] %vm259, %v249
      %284 = vst.msk [vmem:[%s258 + $0x121] sm:$0xff] %vm259, %v250
      %285 = vst.msk [vmem:[%s258 + $0x129] sm:$0xff] %vm259, %v251
      %286 = vst.msk [vmem:[%s258 + $0x139] sm:$0xff] %vm259, %v252
      %287 = vst.msk [vmem:[%s258 + $0x141] sm:$0xff] %vm259, %v253
      %288 = vst.msk [vmem:[%s258 + $0x151] sm:$0xff] %vm259, %v254
      %289 = vst.msk [vmem:[%s258 + $0x159] sm:$0xff] %vm259, %v255
      %290 = vst.msk [vmem:[%s258 + $0x169] sm:$0xff] %vm259, %v256
      %291 = vst.msk [vmem:[%s258 + $0x171] sm:$0xff] %vm259, %v257
      %292 = vst.msk [vmem:[#allocation2 + $0x1] sm:$0xff] %vm259, %v228
      %293 = vst.msk [vmem:[#allocation2 + $0x9] sm:$0xff] %vm259, %v229
      %s294 = scalar_lea.vmem [#allocation2], 408
      %295 = vst.msk [vmem:[%s294 + $0x1] sm:$0xff] %vm259, %v254
      %296 = vst.msk [vmem:[%s294 + $0x9] sm:$0xff] %vm259, %v255
      %v297 = vld [vmem:[#allocation2 + $0x2] sm:$0x1]
      %v298 = vld [vmem:[#allocation2 + $0x1a] sm:$0x1]
      %v299 = vld [vmem:[#allocation2 + $0x32] sm:$0x1]
      %v300 = vld [vmem:[#allocation2 + $0x4a] sm:$0x1]
      %v301 = vld [vmem:[#allocation2 + $0x62] sm:$0x1]
      %v302 = vld [vmem:[#allocation2 + $0x7a] sm:$0x1]
      %v303 = vld [vmem:[#allocation2 + $0x92] sm:$0x1]
      %v304 = vld [vmem:[#allocation2 + $0xaa] sm:$0x1]
      %v305 = vld [vmem:[#allocation2 + $0xc2] sm:$0x1]
      %v306 = vld [vmem:[#allocation2 + $0xda] sm:$0x1]
      %v307 = vld [vmem:[#allocation2 + $0xf2] sm:$0x1]
      %v308 = vld [vmem:[#allocation2 + $0x10a] sm:$0x1]
      %v309 = vld [vmem:[#allocation2 + $0x122] sm:$0x1]
      %v310 = vld [vmem:[#allocation2 + $0x13a] sm:$0x1]
      %v311 = vld [vmem:[#allocation2 + $0x152] sm:$0x1]
      %v312 = vld [vmem:[#allocation2 + $0x16a] sm:$0x1]
      %v313 = vld [vmem:[#allocation2 + $0x182] sm:$0x1]
      %v314 = vld [vmem:[#allocation2 + $0x19a] sm:$0x1]
      %vm315 = vcmask 24576
      %316 = vst.msk [vmem:[#allocation2] sm:$0x1] %vm315, %v297
      %317 = vst.msk [vmem:[#allocation2 + $0x18] sm:$0x1] %vm315, %v298
      %318 = vst.msk [vmem:[#allocation2 + $0x30] sm:$0x1] %vm315, %v299
      %319 = vst.msk [vmem:[#allocation2 + $0x48] sm:$0x1] %vm315, %v300
      %320 = vst.msk [vmem:[#allocation2 + $0x60] sm:$0x1] %vm315, %v301
      %321 = vst.msk [vmem:[#allocation2 + $0x78] sm:$0x1] %vm315, %v302
      %322 = vst.msk [vmem:[#allocation2 + $0x90] sm:$0x1] %vm315, %v303
      %323 = vst.msk [vmem:[#allocation2 + $0xa8] sm:$0x1] %vm315, %v304
      %324 = vst.msk [vmem:[#allocation2 + $0xc0] sm:$0x1] %vm315, %v305
      %325 = vst.msk [vmem:[#allocation2 + $0xd8] sm:$0x1] %vm315, %v306
      %326 = vst.msk [vmem:[#allocation2 + $0xf0] sm:$0x1] %vm315, %v307
      %327 = vst.msk [vmem:[#allocation2 + $0x108] sm:$0x1] %vm315, %v308
      %328 = vst.msk [vmem:[#allocation2 + $0x120] sm:$0x1] %vm315, %v309
      %329 = vst.msk [vmem:[#allocation2 + $0x138] sm:$0x1] %vm315, %v310
      %330 = vst.msk [vmem:[#allocation2 + $0x150] sm:$0x1] %vm315, %v311
      %331 = vst.msk [vmem:[#allocation2 + $0x168] sm:$0x1] %vm315, %v312
      %332 = vst.msk [vmem:[#allocation2 + $0x180] sm:$0x1] %vm315, %v313
      %333 = vst.msk [vmem:[#allocation2 + $0x198] sm:$0x1] %vm315, %v314
      %v334 = vld [vmem:[#allocation2 + $0xf] sm:$0x1]
      %v335 = vld [vmem:[#allocation2 + $0x27] sm:$0x1]
      %v336 = vld [vmem:[#allocation2 + $0x3f] sm:$0x1]
      %v337 = vld [vmem:[#allocation2 + $0x57] sm:$0x1]
      %v338 = vld [vmem:[#allocation2 + $0x6f] sm:$0x1]
      %v339 = vld [vmem:[#allocation2 + $0x87] sm:$0x1]
      %v340 = vld [vmem:[#allocation2 + $0x9f] sm:$0x1]
      %v341 = vld [vmem:[#allocation2 + $0xb7] sm:$0x1]
      %v342 = vld [vmem:[#allocation2 + $0xcf] sm:$0x1]
      %v343 = vld [vmem:[#allocation2 + $0xe7] sm:$0x1]
      %v344 = vld [vmem:[#allocation2 + $0xff] sm:$0x1]
      %v345 = vld [vmem:[#allocation2 + $0x117] sm:$0x1]
      %v346 = vld [vmem:[#allocation2 + $0x12f] sm:$0x1]
      %v347 = vld [vmem:[#allocation2 + $0x147] sm:$0x1]
      %v348 = vld [vmem:[#allocation2 + $0x15f] sm:$0x1]
      %v349 = vld [vmem:[#allocation2 + $0x177] sm:$0x1]
      %v350 = vld [vmem:[#allocation2 + $0x18f] sm:$0x1]
      %v351 = vld [vmem:[#allocation2 + $0x1a7] sm:$0x1]
      %352 = vst.msk [vmem:[#allocation2 + $0x11] sm:$0x1] %vm315, %v334
      %353 = vst.msk [vmem:[#allocation2 + $0x29] sm:$0x1] %vm315, %v335
      %354 = vst.msk [vmem:[#allocation2 + $0x41] sm:$0x1] %vm315, %v336
      %355 = vst.msk [vmem:[#allocation2 + $0x59] sm:$0x1] %vm315, %v337
      %356 = vst.msk [vmem:[#allocation2 + $0x71] sm:$0x1] %vm315, %v338
      %357 = vst.msk [vmem:[#allocation2 + $0x89] sm:$0x1] %vm315, %v339
      %358 = vst.msk [vmem:[#allocation2 + $0xa1] sm:$0x1] %vm315, %v340
      %359 = vst.msk [vmem:[#allocation2 + $0xb9] sm:$0x1] %vm315, %v341
      %360 = vst.msk [vmem:[#allocation2 + $0xd1] sm:$0x1] %vm315, %v342
      %361 = vst.msk [vmem:[#allocation2 + $0xe9] sm:$0x1] %vm315, %v343
      %362 = vst.msk [vmem:[#allocation2 + $0x101] sm:$0x1] %vm315, %v344
      %363 = vst.msk [vmem:[#allocation2 + $0x119] sm:$0x1] %vm315, %v345
      %364 = vst.msk [vmem:[#allocation2 + $0x131] sm:$0x1] %vm315, %v346
      %365 = vst.msk [vmem:[#allocation2 + $0x149] sm:$0x1] %vm315, %v347
      %366 = vst.msk [vmem:[#allocation2 + $0x161] sm:$0x1] %vm315, %v348
      %367 = vst.msk [vmem:[#allocation2 + $0x179] sm:$0x1] %vm315, %v349
      %368 = vst.msk [vmem:[#allocation2 + $0x191] sm:$0x1] %vm315, %v350
      %369 = vst.msk [vmem:[#allocation2 + $0x1a9] sm:$0x1] %vm315, %v351
      %v370 = vld [vmem:[#allocation2] sm:$0xff]
      %v371 = vld [vmem:[#allocation2 + $0x8] sm:$0xff]
      %v372 = vld [vmem:[#allocation2 + $0x18] sm:$0xff]
      %v373 = vld [vmem:[#allocation2 + $0x20] sm:$0xff]
      %v374 = vld [vmem:[#allocation2 + $0x30] sm:$0xff]
      %v375 = vld [vmem:[#allocation2 + $0x38] sm:$0xff]
      %v376 = vld [vmem:[#allocation2 + $0x48] sm:$0xff]
      %v377 = vld [vmem:[#allocation2 + $0x50] sm:$0xff]
      %v378 = vld [vmem:[#allocation2 + $0x60] sm:$0xff]
      %v379 = vld [vmem:[#allocation2 + $0x68] sm:$0xff]
      %v380 = vld [vmem:[#allocation2 + $0x78] sm:$0xff]
      %v381 = vld [vmem:[#allocation2 + $0x80] sm:$0xff]
      %v382 = vld [vmem:[#allocation2 + $0x90] sm:$0xff]
      %v383 = vld [vmem:[#allocation2 + $0x98] sm:$0xff]
      %v384 = vld [vmem:[#allocation2 + $0xa8] sm:$0xff]
      %v385 = vld [vmem:[#allocation2 + $0xb0] sm:$0xff]
      %v386 = vld [vmem:[#allocation2 + $0xc0] sm:$0xff]
      %v387 = vld [vmem:[#allocation2 + $0xc8] sm:$0xff]
      %v388 = vld [vmem:[#allocation2 + $0xd8] sm:$0xff]
      %v389 = vld [vmem:[#allocation2 + $0xe0] sm:$0xff]
      %v390 = vld [vmem:[#allocation2 + $0xf0] sm:$0xff]
      %v391 = vld [vmem:[#allocation2 + $0xf8] sm:$0xff]
      %v392 = vld [vmem:[#allocation2 + $0x108] sm:$0xff]
      %v393 = vld [vmem:[#allocation2 + $0x110] sm:$0xff]
      %v394 = vld [vmem:[#allocation2 + $0x120] sm:$0xff]
      %v395 = vld [vmem:[#allocation2 + $0x128] sm:$0xff]
      %v396 = vld [vmem:[#allocation2 + $0x138] sm:$0xff]
      %v397 = vld [vmem:[#allocation2 + $0x140] sm:$0xff]
      %v398 = vld [vmem:[#allocation2 + $0x150] sm:$0xff]
      %v399 = vld [vmem:[#allocation2 + $0x158] sm:$0xff]
      %v400 = vld [vmem:[#allocation2 + $0x168] sm:$0xff]
      %v401 = vld [vmem:[#allocation2 + $0x170] sm:$0xff]
      %402 = vst.msk [vmem:[#allocation3] sm:$0xff] %vm259, %v370
      %403 = vst.msk [vmem:[#allocation3 + $0x8] sm:$0xff] %vm259, %v371
      %404 = vst.msk [vmem:[#allocation3 + $0x10] sm:$0xff] %vm259, %v372
      %405 = vst.msk [vmem:[#allocation3 + $0x18] sm:$0xff] %vm259, %v373
      %406 = vst.msk [vmem:[#allocation3 + $0x20] sm:$0xff] %vm259, %v374
      %407 = vst.msk [vmem:[#allocation3 + $0x28] sm:$0xff] %vm259, %v375
      %408 = vst.msk [vmem:[#allocation3 + $0x30] sm:$0xff] %vm259, %v376
      %409 = vst.msk [vmem:[#allocation3 + $0x38] sm:$0xff] %vm259, %v377
      %410 = vst.msk [vmem:[#allocation3 + $0x40] sm:$0xff] %vm259, %v378
      %411 = vst.msk [vmem:[#allocation3 + $0x48] sm:$0xff] %vm259, %v379
      %412 = vst.msk [vmem:[#allocation3 + $0x50] sm:$0xff] %vm259, %v380
      %413 = vst.msk [vmem:[#allocation3 + $0x58] sm:$0xff] %vm259, %v381
      %414 = vst.msk [vmem:[#allocation3 + $0x60] sm:$0xff] %vm259, %v382
      %415 = vst.msk [vmem:[#allocation3 + $0x68] sm:$0xff] %vm259, %v383
      %416 = vst.msk [vmem:[#allocation3 + $0x70] sm:$0xff] %vm259, %v384
      %417 = vst.msk [vmem:[#allocation3 + $0x78] sm:$0xff] %vm259, %v385
      %418 = vst.msk [vmem:[#allocation3 + $0x80] sm:$0xff] %vm259, %v386
      %419 = vst.msk [vmem:[#allocation3 + $0x88] sm:$0xff] %vm259, %v387
      %420 = vst.msk [vmem:[#allocation3 + $0x90] sm:$0xff] %vm259, %v388
      %421 = vst.msk [vmem:[#allocation3 + $0x98] sm:$0xff] %vm259, %v389
      %422 = vst.msk [vmem:[#allocation3 + $0xa0] sm:$0xff] %vm259, %v390
      %423 = vst.msk [vmem:[#allocation3 + $0xa8] sm:$0xff] %vm259, %v391
      %424 = vst.msk [vmem:[#allocation3 + $0xb0] sm:$0xff] %vm259, %v392
      %425 = vst.msk [vmem:[#allocation3 + $0xb8] sm:$0xff] %vm259, %v393
      %426 = vst.msk [vmem:[#allocation3 + $0xc0] sm:$0xff] %vm259, %v394
      %427 = vst.msk [vmem:[#allocation3 + $0xc8] sm:$0xff] %vm259, %v395
      %428 = vst.msk [vmem:[#allocation3 + $0xd0] sm:$0xff] %vm259, %v396
      %429 = vst.msk [vmem:[#allocation3 + $0xd8] sm:$0xff] %vm259, %v397
      %430 = vst.msk [vmem:[#allocation3 + $0xe0] sm:$0xff] %vm259, %v398
      %431 = vst.msk [vmem:[#allocation3 + $0xe8] sm:$0xff] %vm259, %v399
      %432 = vst.msk [vmem:[#allocation3 + $0xf0] sm:$0xff] %vm259, %v400
      %433 = vst.msk [vmem:[#allocation3 + $0xf8] sm:$0xff] %vm259, %v401
      %v434 = vld [vmem:[#allocation2 + $0x1] sm:$0xff]
      %v435 = vld [vmem:[#allocation2 + $0x9] sm:$0xff]
      %v436 = vld [vmem:[#allocation2 + $0x19] sm:$0xff]
      %v437 = vld [vmem:[#allocation2 + $0x21] sm:$0xff]
      %v438 = vld [vmem:[#allocation2 + $0x31] sm:$0xff]
      %v439 = vld [vmem:[#allocation2 + $0x39] sm:$0xff]
      %v440 = vld [vmem:[#allocation2 + $0x49] sm:$0xff]
      %v441 = vld [vmem:[#allocation2 + $0x51] sm:$0xff]
      %v442 = vld [vmem:[#allocation2 + $0x61] sm:$0xff]
      %v443 = vld [vmem:[#allocation2 + $0x69] sm:$0xff]
      %v444 = vld [vmem:[#allocation2 + $0x79] sm:$0xff]
      %v445 = vld [vmem:[#allocation2 + $0x81] sm:$0xff]
      %v446 = vld [vmem:[#allocation2 + $0x91] sm:$0xff]
      %v447 = vld [vmem:[#allocation2 + $0x99] sm:$0xff]
      %v448 = vld [vmem:[#allocation2 + $0xa9] sm:$0xff]
      %v449 = vld [vmem:[#allocation2 + $0xb1] sm:$0xff]
      %v450 = vld [vmem:[#allocation2 + $0xc1] sm:$0xff]
      %v451 = vld [vmem:[#allocation2 + $0xc9] sm:$0xff]
      %v452 = vld [vmem:[#allocation2 + $0xd9] sm:$0xff]
      %v453 = vld [vmem:[#allocation2 + $0xe1] sm:$0xff]
      %v454 = vld [vmem:[#allocation2 + $0xf1] sm:$0xff]
      %v455 = vld [vmem:[#allocation2 + $0xf9] sm:$0xff]
      %v456 = vld [vmem:[#allocation2 + $0x109] sm:$0xff]
      %v457 = vld [vmem:[#allocation2 + $0x111] sm:$0xff]
      %v458 = vld [vmem:[#allocation2 + $0x121] sm:$0xff]
      %v459 = vld [vmem:[#allocation2 + $0x129] sm:$0xff]
      %v460 = vld [vmem:[#allocation2 + $0x139] sm:$0xff]
      %v461 = vld [vmem:[#allocation2 + $0x141] sm:$0xff]
      %v462 = vld [vmem:[#allocation2 + $0x151] sm:$0xff]
      %v463 = vld [vmem:[#allocation2 + $0x159] sm:$0xff]
      %v464 = vld [vmem:[#allocation2 + $0x169] sm:$0xff]
      %v465 = vld [vmem:[#allocation2 + $0x171] sm:$0xff]
      %498 = vrot.lane.b32.xlu0 %v434, 4
      %v499 = vpop.permute.xlu0 %498
      %500 = vrot.lane.b32.xlu0 %v435, 4
      %v501 = vpop.permute.xlu0 %500
      %502 = vrot.lane.b32.xlu0 %v436, 4
      %v503 = vpop.permute.xlu0 %502
      %504 = vrot.lane.b32.xlu0 %v437, 4
      %v505 = vpop.permute.xlu0 %504
      %506 = vrot.lane.b32.xlu0 %v438, 4
      %v507 = vpop.permute.xlu0 %506
      %508 = vrot.lane.b32.xlu0 %v439, 4
      %v509 = vpop.permute.xlu0 %508
      %510 = vrot.lane.b32.xlu0 %v440, 4
      %v511 = vpop.permute.xlu0 %510
      %512 = vrot.lane.b32.xlu0 %v441, 4
      %v513 = vpop.permute.xlu0 %512
      %514 = vrot.lane.b32.xlu0 %v442, 4
      %v515 = vpop.permute.xlu0 %514
      %516 = vrot.lane.b32.xlu0 %v443, 4
      %v517 = vpop.permute.xlu0 %516
      %518 = vrot.lane.b32.xlu0 %v444, 4
      %v519 = vpop.permute.xlu0 %518
      %520 = vrot.lane.b32.xlu0 %v445, 4
      %v521 = vpop.permute.xlu0 %520
      %522 = vrot.lane.b32.xlu0 %v446, 4
      %v523 = vpop.permute.xlu0 %522
      %524 = vrot.lane.b32.xlu0 %v447, 4
      %v525 = vpop.permute.xlu0 %524
      %526 = vrot.lane.b32.xlu0 %v448, 4
      %v527 = vpop.permute.xlu0 %526
      %528 = vrot.lane.b32.xlu0 %v449, 4
      %v529 = vpop.permute.xlu0 %528
      %530 = vrot.lane.b32.xlu0 %v450, 4
      %v531 = vpop.permute.xlu0 %530
      %532 = vrot.lane.b32.xlu0 %v451, 4
      %v533 = vpop.permute.xlu0 %532
      %534 = vrot.lane.b32.xlu0 %v452, 4
      %v535 = vpop.permute.xlu0 %534
      %536 = vrot.lane.b32.xlu0 %v453, 4
      %v537 = vpop.permute.xlu0 %536
      %538 = vrot.lane.b32.xlu0 %v454, 4
      %v539 = vpop.permute.xlu0 %538
      %540 = vrot.lane.b32.xlu0 %v455, 4
      %v541 = vpop.permute.xlu0 %540
      %542 = vrot.lane.b32.xlu0 %v456, 4
      %v543 = vpop.permute.xlu0 %542
      %544 = vrot.lane.b32.xlu0 %v457, 4
      %v545 = vpop.permute.xlu0 %544
      %546 = vrot.lane.b32.xlu0 %v458, 4
      %v547 = vpop.permute.xlu0 %546
      %548 = vrot.lane.b32.xlu0 %v459, 4
      %v549 = vpop.permute.xlu0 %548
      %550 = vrot.lane.b32.xlu0 %v460, 4
      %v551 = vpop.permute.xlu0 %550
      %552 = vrot.lane.b32.xlu0 %v461, 4
      %v553 = vpop.permute.xlu0 %552
      %554 = vrot.lane.b32.xlu0 %v462, 4
      %v555 = vpop.permute.xlu0 %554
      %556 = vrot.lane.b32.xlu0 %v463, 4
      %v557 = vpop.permute.xlu0 %556
      %558 = vrot.lane.b32.xlu0 %v464, 4
      %v559 = vpop.permute.xlu0 %558
      %560 = vrot.lane.b32.xlu0 %v465, 4
      %v561 = vpop.permute.xlu0 %560
      %vm594 = vcmask 64544
      %595 = vst.msk [vmem:[#allocation3] sm:$0xff] %vm594, %v499
      %596 = vst.msk [vmem:[#allocation3 + $0x8] sm:$0xff] %vm594, %v501
      %597 = vst.msk [vmem:[#allocation3 + $0x10] sm:$0xff] %vm594, %v503
      %598 = vst.msk [vmem:[#allocation3 + $0x18] sm:$0xff] %vm594, %v505
      %599 = vst.msk [vmem:[#allocation3 + $0x20] sm:$0xff] %vm594, %v507
      %600 = vst.msk [vmem:[#allocation3 + $0x28] sm:$0xff] %vm594, %v509
      %601 = vst.msk [vmem:[#allocation3 + $0x30] sm:$0xff] %vm594, %v511
      %602 = vst.msk [vmem:[#allocation3 + $0x38] sm:$0xff] %vm594, %v513
      %603 = vst.msk [vmem:[#allocation3 + $0x40] sm:$0xff] %vm594, %v515
      %604 = vst.msk [vmem:[#allocation3 + $0x48] sm:$0xff] %vm594, %v517
      %605 = vst.msk [vmem:[#allocation3 + $0x50] sm:$0xff] %vm594, %v519
      %606 = vst.msk [vmem:[#allocation3 + $0x58] sm:$0xff] %vm594, %v521
      %607 = vst.msk [vmem:[#allocation3 + $0x60] sm:$0xff] %vm594, %v523
      %608 = vst.msk [vmem:[#allocation3 + $0x68] sm:$0xff] %vm594, %v525
      %609 = vst.msk [vmem:[#allocation3 + $0x70] sm:$0xff] %vm594, %v527
      %610 = vst.msk [vmem:[#allocation3 + $0x78] sm:$0xff] %vm594, %v529
      %611 = vst.msk [vmem:[#allocation3 + $0x80] sm:$0xff] %vm594, %v531
      %612 = vst.msk [vmem:[#allocation3 + $0x88] sm:$0xff] %vm594, %v533
      %613 = vst.msk [vmem:[#allocation3 + $0x90] sm:$0xff] %vm594, %v535
      %614 = vst.msk [vmem:[#allocation3 + $0x98] sm:$0xff] %vm594, %v537
      %615 = vst.msk [vmem:[#allocation3 + $0xa0] sm:$0xff] %vm594, %v539
      %616 = vst.msk [vmem:[#allocation3 + $0xa8] sm:$0xff] %vm594, %v541
      %617 = vst.msk [vmem:[#allocation3 + $0xb0] sm:$0xff] %vm594, %v543
      %618 = vst.msk [vmem:[#allocation3 + $0xb8] sm:$0xff] %vm594, %v545
      %619 = vst.msk [vmem:[#allocation3 + $0xc0] sm:$0xff] %vm594, %v547
      %620 = vst.msk [vmem:[#allocation3 + $0xc8] sm:$0xff] %vm594, %v549
      %621 = vst.msk [vmem:[#allocation3 + $0xd0] sm:$0xff] %vm594, %v551
      %622 = vst.msk [vmem:[#allocation3 + $0xd8] sm:$0xff] %vm594, %v553
      %623 = vst.msk [vmem:[#allocation3 + $0xe0] sm:$0xff] %vm594, %v555
      %624 = vst.msk [vmem:[#allocation3 + $0xe8] sm:$0xff] %vm594, %v557
      %625 = vst.msk [vmem:[#allocation3 + $0xf0] sm:$0xff] %vm594, %v559
      %626 = vst.msk [vmem:[#allocation3 + $0xf8] sm:$0xff] %vm594, %v561
      %v627 = vld [vmem:[#allocation2 + $0x2] sm:$0xff]
      %v628 = vld [vmem:[#allocation2 + $0xa] sm:$0xff]
      %v629 = vld [vmem:[#allocation2 + $0x1a] sm:$0xff]
      %v630 = vld [vmem:[#allocation2 + $0x22] sm:$0xff]
      %v631 = vld [vmem:[#allocation2 + $0x32] sm:$0xff]
      %v632 = vld [vmem:[#allocation2 + $0x3a] sm:$0xff]
      %v633 = vld [vmem:[#allocation2 + $0x4a] sm:$0xff]
      %v634 = vld [vmem:[#allocation2 + $0x52] sm:$0xff]
      %v635 = vld [vmem:[#allocation2 + $0x62] sm:$0xff]
      %v636 = vld [vmem:[#allocation2 + $0x6a] sm:$0xff]
      %v637 = vld [vmem:[#allocation2 + $0x7a] sm:$0xff]
      %v638 = vld [vmem:[#allocation2 + $0x82] sm:$0xff]
      %v639 = vld [vmem:[#allocation2 + $0x92] sm:$0xff]
      %v640 = vld [vmem:[#allocation2 + $0x9a] sm:$0xff]
      %v641 = vld [vmem:[#allocation2 + $0xaa] sm:$0xff]
      %v642 = vld [vmem:[#allocation2 + $0xb2] sm:$0xff]
      %v643 = vld [vmem:[#allocation2 + $0xc2] sm:$0xff]
      %v644 = vld [vmem:[#allocation2 + $0xca] sm:$0xff]
      %v645 = vld [vmem:[#allocation2 + $0xda] sm:$0xff]
      %v646 = vld [vmem:[#allocation2 + $0xe2] sm:$0xff]
      %v647 = vld [vmem:[#allocation2 + $0xf2] sm:$0xff]
      %v648 = vld [vmem:[#allocation2 + $0xfa] sm:$0xff]
      %v649 = vld [vmem:[#allocation2 + $0x10a] sm:$0xff]
      %v650 = vld [vmem:[#allocation2 + $0x112] sm:$0xff]
      %v651 = vld [vmem:[#allocation2 + $0x122] sm:$0xff]
      %v652 = vld [vmem:[#allocation2 + $0x12a] sm:$0xff]
      %v653 = vld [vmem:[#allocation2 + $0x13a] sm:$0xff]
      %v654 = vld [vmem:[#allocation2 + $0x142] sm:$0xff]
      %v655 = vld [vmem:[#allocation2 + $0x152] sm:$0xff]
      %v656 = vld [vmem:[#allocation2 + $0x15a] sm:$0xff]
      %v657 = vld [vmem:[#allocation2 + $0x16a] sm:$0xff]
      %v658 = vld [vmem:[#allocation2 + $0x172] sm:$0xff]
      %691 = vrot.lane.b32.xlu0 %v627, 8
      %v692 = vpop.permute.xlu0 %691
      %693 = vrot.lane.b32.xlu0 %v628, 8
      %v694 = vpop.permute.xlu0 %693
      %695 = vrot.lane.b32.xlu0 %v629, 8
      %v696 = vpop.permute.xlu0 %695
      %697 = vrot.lane.b32.xlu0 %v630, 8
      %v698 = vpop.permute.xlu0 %697
      %699 = vrot.lane.b32.xlu0 %v631, 8
      %v700 = vpop.permute.xlu0 %699
      %701 = vrot.lane.b32.xlu0 %v632, 8
      %v702 = vpop.permute.xlu0 %701
      %703 = vrot.lane.b32.xlu0 %v633, 8
      %v704 = vpop.permute.xlu0 %703
      %705 = vrot.lane.b32.xlu0 %v634, 8
      %v706 = vpop.permute.xlu0 %705
      %707 = vrot.lane.b32.xlu0 %v635, 8
      %v708 = vpop.permute.xlu0 %707
      %709 = vrot.lane.b32.xlu0 %v636, 8
      %v710 = vpop.permute.xlu0 %709
      %711 = vrot.lane.b32.xlu0 %v637, 8
      %v712 = vpop.permute.xlu0 %711
      %713 = vrot.lane.b32.xlu0 %v638, 8
      %v714 = vpop.permute.xlu0 %713
      %715 = vrot.lane.b32.xlu0 %v639, 8
      %v716 = vpop.permute.xlu0 %715
      %717 = vrot.lane.b32.xlu0 %v640, 8
      %v718 = vpop.permute.xlu0 %717
      %719 = vrot.lane.b32.xlu0 %v641, 8
      %v720 = vpop.permute.xlu0 %719
      %721 = vrot.lane.b32.xlu0 %v642, 8
      %v722 = vpop.permute.xlu0 %721
      %723 = vrot.lane.b32.xlu0 %v643, 8
      %v724 = vpop.permute.xlu0 %723
      %725 = vrot.lane.b32.xlu0 %v644, 8
      %v726 = vpop.permute.xlu0 %725
      %727 = vrot.lane.b32.xlu0 %v645, 8
      %v728 = vpop.permute.xlu0 %727
      %729 = vrot.lane.b32.xlu0 %v646, 8
      %v730 = vpop.permute.xlu0 %729
      %731 = vrot.lane.b32.xlu0 %v647, 8
      %v732 = vpop.permute.xlu0 %731
      %733 = vrot.lane.b32.xlu0 %v648, 8
      %v734 = vpop.permute.xlu0 %733
      %735 = vrot.lane.b32.xlu0 %v649, 8
      %v736 = vpop.permute.xlu0 %735
      %737 = vrot.lane.b32.xlu0 %v650, 8
      %v738 = vpop.permute.xlu0 %737
      %739 = vrot.lane.b32.xlu0 %v651, 8
      %v740 = vpop.permute.xlu0 %739
      %741 = vrot.lane.b32.xlu0 %v652, 8
      %v742 = vpop.permute.xlu0 %741
      %743 = vrot.lane.b32.xlu0 %v653, 8
      %v744 = vpop.permute.xlu0 %743
      %745 = vrot.lane.b32.xlu0 %v654, 8
      %v746 = vpop.permute.xlu0 %745
      %747 = vrot.lane.b32.xlu0 %v655, 8
      %v748 = vpop.permute.xlu0 %747
      %749 = vrot.lane.b32.xlu0 %v656, 8
      %v750 = vpop.permute.xlu0 %749
      %751 = vrot.lane.b32.xlu0 %v657, 8
      %v752 = vpop.permute.xlu0 %751
      %753 = vrot.lane.b32.xlu0 %v658, 8
      %v754 = vpop.permute.xlu0 %753
      %vm787 = vcmask 97344
      %788 = vst.msk [vmem:[#allocation3] sm:$0xff] %vm787, %v692
      %789 = vst.msk [vmem:[#allocation3 + $0x8] sm:$0xff] %vm787, %v694
      %790 = vst.msk [vmem:[#allocation3 + $0x10] sm:$0xff] %vm787, %v696
      %791 = vst.msk [vmem:[#allocation3 + $0x18] sm:$0xff] %vm787, %v698
      %792 = vst.msk [vmem:[#allocation3 + $0x20] sm:$0xff] %vm787, %v700
      %793 = vst.msk [vmem:[#allocation3 + $0x28] sm:$0xff] %vm787, %v702
      %794 = vst.msk [vmem:[#allocation3 + $0x30] sm:$0xff] %vm787, %v704
      %795 = vst.msk [vmem:[#allocation3 + $0x38] sm:$0xff] %vm787, %v706
      %796 = vst.msk [vmem:[#allocation3 + $0x40] sm:$0xff] %vm787, %v708
      %797 = vst.msk [vmem:[#allocation3 + $0x48] sm:$0xff] %vm787, %v710
      %798 = vst.msk [vmem:[#allocation3 + $0x50] sm:$0xff] %vm787, %v712
      %799 = vst.msk [vmem:[#allocation3 + $0x58] sm:$0xff] %vm787, %v714
      %800 = vst.msk [vmem:[#allocation3 + $0x60] sm:$0xff] %vm787, %v716
      %801 = vst.msk [vmem:[#allocation3 + $0x68] sm:$0xff] %vm787, %v718
      %802 = vst.msk [vmem:[#allocation3 + $0x70] sm:$0xff] %vm787, %v720
      %803 = vst.msk [vmem:[#allocation3 + $0x78] sm:$0xff] %vm787, %v722
      %804 = vst.msk [vmem:[#allocation3 + $0x80] sm:$0xff] %vm787, %v724
      %805 = vst.msk [vmem:[#allocation3 + $0x88] sm:$0xff] %vm787, %v726
      %806 = vst.msk [vmem:[#allocation3 + $0x90] sm:$0xff] %vm787, %v728
      %807 = vst.msk [vmem:[#allocation3 + $0x98] sm:$0xff] %vm787, %v730
      %808 = vst.msk [vmem:[#allocation3 + $0xa0] sm:$0xff] %vm787, %v732
      %809 = vst.msk [vmem:[#allocation3 + $0xa8] sm:$0xff] %vm787, %v734
      %810 = vst.msk [vmem:[#allocation3 + $0xb0] sm:$0xff] %vm787, %v736
      %811 = vst.msk [vmem:[#allocation3 + $0xb8] sm:$0xff] %vm787, %v738
      %812 = vst.msk [vmem:[#allocation3 + $0xc0] sm:$0xff] %vm787, %v740
      %813 = vst.msk [vmem:[#allocation3 + $0xc8] sm:$0xff] %vm787, %v742
      %814 = vst.msk [vmem:[#allocation3 + $0xd0] sm:$0xff] %vm787, %v744
      %815 = vst.msk [vmem:[#allocation3 + $0xd8] sm:$0xff] %vm787, %v746
      %816 = vst.msk [vmem:[#allocation3 + $0xe0] sm:$0xff] %vm787, %v748
      %817 = vst.msk [vmem:[#allocation3 + $0xe8] sm:$0xff] %vm787, %v750
      %818 = vst.msk [vmem:[#allocation3 + $0xf0] sm:$0xff] %vm787, %v752
      %819 = vst.msk [vmem:[#allocation3 + $0xf8] sm:$0xff] %vm787, %v754
      %v820 = vld [vmem:[%s258] sm:$0xff]
      %v821 = vld [vmem:[%s258 + $0x8] sm:$0xff]
      %v822 = vld [vmem:[%s258 + $0x18] sm:$0xff]
      %v823 = vld [vmem:[%s258 + $0x20] sm:$0xff]
      %v824 = vld [vmem:[%s258 + $0x30] sm:$0xff]
      %v825 = vld [vmem:[%s258 + $0x38] sm:$0xff]
      %v826 = vld [vmem:[%s258 + $0x48] sm:$0xff]
      %v827 = vld [vmem:[%s258 + $0x50] sm:$0xff]
      %v828 = vld [vmem:[%s258 + $0x60] sm:$0xff]
      %v829 = vld [vmem:[%s258 + $0x68] sm:$0xff]
      %v830 = vld [vmem:[%s258 + $0x78] sm:$0xff]
      %v831 = vld [vmem:[%s258 + $0x80] sm:$0xff]
      %v832 = vld [vmem:[%s258 + $0x90] sm:$0xff]
      %v833 = vld [vmem:[%s258 + $0x98] sm:$0xff]
      %v834 = vld [vmem:[%s258 + $0xa8] sm:$0xff]
      %v835 = vld [vmem:[%s258 + $0xb0] sm:$0xff]
      %v836 = vld [vmem:[%s258 + $0xc0] sm:$0xff]
      %v837 = vld [vmem:[%s258 + $0xc8] sm:$0xff]
      %v838 = vld [vmem:[%s258 + $0xd8] sm:$0xff]
      %v839 = vld [vmem:[%s258 + $0xe0] sm:$0xff]
      %v840 = vld [vmem:[%s258 + $0xf0] sm:$0xff]
      %v841 = vld [vmem:[%s258 + $0xf8] sm:$0xff]
      %v842 = vld [vmem:[%s258 + $0x108] sm:$0xff]
      %v843 = vld [vmem:[%s258 + $0x110] sm:$0xff]
      %v844 = vld [vmem:[%s258 + $0x120] sm:$0xff]
      %v845 = vld [vmem:[%s258 + $0x128] sm:$0xff]
      %v846 = vld [vmem:[%s258 + $0x138] sm:$0xff]
      %v847 = vld [vmem:[%s258 + $0x140] sm:$0xff]
      %v848 = vld [vmem:[%s258 + $0x150] sm:$0xff]
      %v849 = vld [vmem:[%s258 + $0x158] sm:$0xff]
      %v850 = vld [vmem:[%s258 + $0x168] sm:$0xff]
      %v851 = vld [vmem:[%s258 + $0x170] sm:$0xff]
      %884 = vrot.lane.b32.xlu0 %v820, 12
      %v885 = vpop.permute.xlu0 %884
      %886 = vrot.lane.b32.xlu0 %v821, 12
      %v887 = vpop.permute.xlu0 %886
      %888 = vrot.lane.b32.xlu0 %v822, 12
      %v889 = vpop.permute.xlu0 %888
      %890 = vrot.lane.b32.xlu0 %v823, 12
      %v891 = vpop.permute.xlu0 %890
      %892 = vrot.lane.b32.xlu0 %v824, 12
      %v893 = vpop.permute.xlu0 %892
      %894 = vrot.lane.b32.xlu0 %v825, 12
      %v895 = vpop.permute.xlu0 %894
      %896 = vrot.lane.b32.xlu0 %v826, 12
      %v897 = vpop.permute.xlu0 %896
      %898 = vrot.lane.b32.xlu0 %v827, 12
      %v899 = vpop.permute.xlu0 %898
      %900 = vrot.lane.b32.xlu0 %v828, 12
      %v901 = vpop.permute.xlu0 %900
      %902 = vrot.lane.b32.xlu0 %v829, 12
      %v903 = vpop.permute.xlu0 %902
      %904 = vrot.lane.b32.xlu0 %v830, 12
      %v905 = vpop.permute.xlu0 %904
      %906 = vrot.lane.b32.xlu0 %v831, 12
      %v907 = vpop.permute.xlu0 %906
      %908 = vrot.lane.b32.xlu0 %v832, 12
      %v909 = vpop.permute.xlu0 %908
      %910 = vrot.lane.b32.xlu0 %v833, 12
      %v911 = vpop.permute.xlu0 %910
      %912 = vrot.lane.b32.xlu0 %v834, 12
      %v913 = vpop.permute.xlu0 %912
      %914 = vrot.lane.b32.xlu0 %v835, 12
      %v915 = vpop.permute.xlu0 %914
      %916 = vrot.lane.b32.xlu0 %v836, 12
      %v917 = vpop.permute.xlu0 %916
      %918 = vrot.lane.b32.xlu0 %v837, 12
      %v919 = vpop.permute.xlu0 %918
      %920 = vrot.lane.b32.xlu0 %v838, 12
      %v921 = vpop.permute.xlu0 %920
      %922 = vrot.lane.b32.xlu0 %v839, 12
      %v923 = vpop.permute.xlu0 %922
      %924 = vrot.lane.b32.xlu0 %v840, 12
      %v925 = vpop.permute.xlu0 %924
      %926 = vrot.lane.b32.xlu0 %v841, 12
      %v927 = vpop.permute.xlu0 %926
      %928 = vrot.lane.b32.xlu0 %v842, 12
      %v929 = vpop.permute.xlu0 %928
      %930 = vrot.lane.b32.xlu0 %v843, 12
      %v931 = vpop.permute.xlu0 %930
      %932 = vrot.lane.b32.xlu0 %v844, 12
      %v933 = vpop.permute.xlu0 %932
      %934 = vrot.lane.b32.xlu0 %v845, 12
      %v935 = vpop.permute.xlu0 %934
      %936 = vrot.lane.b32.xlu0 %v846, 12
      %v937 = vpop.permute.xlu0 %936
      %938 = vrot.lane.b32.xlu0 %v847, 12
      %v939 = vpop.permute.xlu0 %938
      %940 = vrot.lane.b32.xlu0 %v848, 12
      %v941 = vpop.permute.xlu0 %940
      %942 = vrot.lane.b32.xlu0 %v849, 12
      %v943 = vpop.permute.xlu0 %942
      %944 = vrot.lane.b32.xlu0 %v850, 12
      %v945 = vpop.permute.xlu0 %944
      %946 = vrot.lane.b32.xlu0 %v851, 12
      %v947 = vpop.permute.xlu0 %946
      %vm980 = vcmask 130144
      %981 = vst.msk [vmem:[#allocation3] sm:$0xff] %vm980, %v885
      %982 = vst.msk [vmem:[#allocation3 + $0x8] sm:$0xff] %vm980, %v887
      %983 = vst.msk [vmem:[#allocation3 + $0x10] sm:$0xff] %vm980, %v889
      %984 = vst.msk [vmem:[#allocation3 + $0x18] sm:$0xff] %vm980, %v891
      %985 = vst.msk [vmem:[#allocation3 + $0x20] sm:$0xff] %vm980, %v893
      %986 = vst.msk [vmem:[#allocation3 + $0x28] sm:$0xff] %vm980, %v895
      %987 = vst.msk [vmem:[#allocation3 + $0x30] sm:$0xff] %vm980, %v897
      %988 = vst.msk [vmem:[#allocation3 + $0x38] sm:$0xff] %vm980, %v899
      %989 = vst.msk [vmem:[#allocation3 + $0x40] sm:$0xff] %vm980, %v901
      %990 = vst.msk [vmem:[#allocation3 + $0x48] sm:$0xff] %vm980, %v903
      %991 = vst.msk [vmem:[#allocation3 + $0x50] sm:$0xff] %vm980, %v905
      %992 = vst.msk [vmem:[#allocation3 + $0x58] sm:$0xff] %vm980, %v907
      %993 = vst.msk [vmem:[#allocation3 + $0x60] sm:$0xff] %vm980, %v909
      %994 = vst.msk [vmem:[#allocation3 + $0x68] sm:$0xff] %vm980, %v911
      %995 = vst.msk [vmem:[#allocation3 + $0x70] sm:$0xff] %vm980, %v913
      %996 = vst.msk [vmem:[#allocation3 + $0x78] sm:$0xff] %vm980, %v915
      %997 = vst.msk [vmem:[#allocation3 + $0x80] sm:$0xff] %vm980, %v917
      %998 = vst.msk [vmem:[#allocation3 + $0x88] sm:$0xff] %vm980, %v919
      %999 = vst.msk [vmem:[#allocation3 + $0x90] sm:$0xff] %vm980, %v921
      %1000 = vst.msk [vmem:[#allocation3 + $0x98] sm:$0xff] %vm980, %v923
      %1001 = vst.msk [vmem:[#allocation3 + $0xa0] sm:$0xff] %vm980, %v925
      %1002 = vst.msk [vmem:[#allocation3 + $0xa8] sm:$0xff] %vm980, %v927
      %1003 = vst.msk [vmem:[#allocation3 + $0xb0] sm:$0xff] %vm980, %v929
      %1004 = vst.msk [vmem:[#allocation3 + $0xb8] sm:$0xff] %vm980, %v931
      %1005 = vst.msk [vmem:[#allocation3 + $0xc0] sm:$0xff] %vm980, %v933
      %1006 = vst.msk [vmem:[#allocation3 + $0xc8] sm:$0xff] %vm980, %v935
      %1007 = vst.msk [vmem:[#allocation3 + $0xd0] sm:$0xff] %vm980, %v937
      %1008 = vst.msk [vmem:[#allocation3 + $0xd8] sm:$0xff] %vm980, %v939
      %1009 = vst.msk [vmem:[#allocation3 + $0xe0] sm:$0xff] %vm980, %v941
      %1010 = vst.msk [vmem:[#allocation3 + $0xe8] sm:$0xff] %vm980, %v943
      %1011 = vst.msk [vmem:[#allocation3 + $0xf0] sm:$0xff] %vm980, %v945
      %1012 = vst.msk [vmem:[#allocation3 + $0xf8] sm:$0xff] %vm980, %v947
      %v1013 = vld [vmem:[%s258 + $0x1] sm:$0xff]
      %v1014 = vld [vmem:[%s258 + $0x9] sm:$0xff]
      %v1015 = vld [vmem:[%s258 + $0x19] sm:$0xff]
      %v1016 = vld [vmem:[%s258 + $0x21] sm:$0xff]
      %v1017 = vld [vmem:[%s258 + $0x31] sm:$0xff]
      %v1018 = vld [vmem:[%s258 + $0x39] sm:$0xff]
      %v1019 = vld [vmem:[%s258 + $0x49] sm:$0xff]
      %v1020 = vld [vmem:[%s258 + $0x51] sm:$0xff]
      %v1021 = vld [vmem:[%s258 + $0x61] sm:$0xff]
      %v1022 = vld [vmem:[%s258 + $0x69] sm:$0xff]
      %v1023 = vld [vmem:[%s258 + $0x79] sm:$0xff]
      %v1024 = vld [vmem:[%s258 + $0x81] sm:$0xff]
      %v1025 = vld [vmem:[%s258 + $0x91] sm:$0xff]
      %v1026 = vld [vmem:[%s258 + $0x99] sm:$0xff]
      %v1027 = vld [vmem:[%s258 + $0xa9] sm:$0xff]
      %v1028 = vld [vmem:[%s258 + $0xb1] sm:$0xff]
      %v1029 = vld [vmem:[%s258 + $0xc1] sm:$0xff]
      %v1030 = vld [vmem:[%s258 + $0xc9] sm:$0xff]
      %v1031 = vld [vmem:[%s258 + $0xd9] sm:$0xff]
      %v1032 = vld [vmem:[%s258 + $0xe1] sm:$0xff]
      %v1033 = vld [vmem:[%s258 + $0xf1] sm:$0xff]
      %v1034 = vld [vmem:[%s258 + $0xf9] sm:$0xff]
      %v1035 = vld [vmem:[%s258 + $0x109] sm:$0xff]
      %v1036 = vld [vmem:[%s258 + $0x111] sm:$0xff]
      %v1037 = vld [vmem:[%s258 + $0x121] sm:$0xff]
      %v1038 = vld [vmem:[%s258 + $0x129] sm:$0xff]
      %v1039 = vld [vmem:[%s258 + $0x139] sm:$0xff]
      %v1040 = vld [vmem:[%s258 + $0x141] sm:$0xff]
      %v1041 = vld [vmem:[%s258 + $0x151] sm:$0xff]
      %v1042 = vld [vmem:[%s258 + $0x159] sm:$0xff]
      %v1043 = vld [vmem:[%s258 + $0x169] sm:$0xff]
      %v1044 = vld [vmem:[%s258 + $0x171] sm:$0xff]
      %1077 = vrot.lane.b32.xlu0 %v1013, 16
      %v1078 = vpop.permute.xlu0 %1077
      %1079 = vrot.lane.b32.xlu0 %v1014, 16
      %v1080 = vpop.permute.xlu0 %1079
      %1081 = vrot.lane.b32.xlu0 %v1015, 16
      %v1082 = vpop.permute.xlu0 %1081
      %1083 = vrot.lane.b32.xlu0 %v1016, 16
      %v1084 = vpop.permute.xlu0 %1083
      %1085 = vrot.lane.b32.xlu0 %v1017, 16
      %v1086 = vpop.permute.xlu0 %1085
      %1087 = vrot.lane.b32.xlu0 %v1018, 16
      %v1088 = vpop.permute.xlu0 %1087
      %1089 = vrot.lane.b32.xlu0 %v1019, 16
      %v1090 = vpop.permute.xlu0 %1089
      %1091 = vrot.lane.b32.xlu0 %v1020, 16
      %v1092 = vpop.permute.xlu0 %1091
      %1093 = vrot.lane.b32.xlu0 %v1021, 16
      %v1094 = vpop.permute.xlu0 %1093
      %1095 = vrot.lane.b32.xlu0 %v1022, 16
      %v1096 = vpop.permute.xlu0 %1095
      %1097 = vrot.lane.b32.xlu0 %v1023, 16
      %v1098 = vpop.permute.xlu0 %1097
      %1099 = vrot.lane.b32.xlu0 %v1024, 16
      %v1100 = vpop.permute.xlu0 %1099
      %1101 = vrot.lane.b32.xlu0 %v1025, 16
      %v1102 = vpop.permute.xlu0 %1101
      %1103 = vrot.lane.b32.xlu0 %v1026, 16
      %v1104 = vpop.permute.xlu0 %1103
      %1105 = vrot.lane.b32.xlu0 %v1027, 16
      %v1106 = vpop.permute.xlu0 %1105
      %1107 = vrot.lane.b32.xlu0 %v1028, 16
      %v1108 = vpop.permute.xlu0 %1107
      %1109 = vrot.lane.b32.xlu0 %v1029, 16
      %v1110 = vpop.permute.xlu0 %1109
      %1111 = vrot.lane.b32.xlu0 %v1030, 16
      %v1112 = vpop.permute.xlu0 %1111
      %1113 = vrot.lane.b32.xlu0 %v1031, 16
      %v1114 = vpop.permute.xlu0 %1113
      %1115 = vrot.lane.b32.xlu0 %v1032, 16
      %v1116 = vpop.permute.xlu0 %1115
      %1117 = vrot.lane.b32.xlu0 %v1033, 16
      %v1118 = vpop.permute.xlu0 %1117
      %1119 = vrot.lane.b32.xlu0 %v1034, 16
      %v1120 = vpop.permute.xlu0 %1119
      %1121 = vrot.lane.b32.xlu0 %v1035, 16
      %v1122 = vpop.permute.xlu0 %1121
      %1123 = vrot.lane.b32.xlu0 %v1036, 16
      %v1124 = vpop.permute.xlu0 %1123
      %1125 = vrot.lane.b32.xlu0 %v1037, 16
      %v1126 = vpop.permute.xlu0 %1125
      %1127 = vrot.lane.b32.xlu0 %v1038, 16
      %v1128 = vpop.permute.xlu0 %1127
      %1129 = vrot.lane.b32.xlu0 %v1039, 16
      %v1130 = vpop.permute.xlu0 %1129
      %1131 = vrot.lane.b32.xlu0 %v1040, 16
      %v1132 = vpop.permute.xlu0 %1131
      %1133 = vrot.lane.b32.xlu0 %v1041, 16
      %v1134 = vpop.permute.xlu0 %1133
      %1135 = vrot.lane.b32.xlu0 %v1042, 16
      %v1136 = vpop.permute.xlu0 %1135
      %1137 = vrot.lane.b32.xlu0 %v1043, 16
      %v1138 = vpop.permute.xlu0 %1137
      %1139 = vrot.lane.b32.xlu0 %v1044, 16
      %v1140 = vpop.permute.xlu0 %1139
      %vm1173 = vcmask 162944
      %1174 = vst.msk [vmem:[#allocation3] sm:$0xff] %vm1173, %v1078
      %1175 = vst.msk [vmem:[#allocation3 + $0x8] sm:$0xff] %vm1173, %v1080
      %1176 = vst.msk [vmem:[#allocation3 + $0x10] sm:$0xff] %vm1173, %v1082
      %1177 = vst.msk [vmem:[#allocation3 + $0x18] sm:$0xff] %vm1173, %v1084
      %1178 = vst.msk [vmem:[#allocation3 + $0x20] sm:$0xff] %vm1173, %v1086
      %1179 = vst.msk [vmem:[#allocation3 + $0x28] sm:$0xff] %vm1173, %v1088
      %1180 = vst.msk [vmem:[#allocation3 + $0x30] sm:$0xff] %vm1173, %v1090
      %1181 = vst.msk [vmem:[#allocation3 + $0x38] sm:$0xff] %vm1173, %v1092
      %1182 = vst.msk [vmem:[#allocation3 + $0x40] sm:$0xff] %vm1173, %v1094
      %1183 = vst.msk [vmem:[#allocation3 + $0x48] sm:$0xff] %vm1173, %v1096
      %1184 = vst.msk [vmem:[#allocation3 + $0x50] sm:$0xff] %vm1173, %v1098
      %1185 = vst.msk [vmem:[#allocation3 + $0x58] sm:$0xff] %vm1173, %v1100
      %1186 = vst.msk [vmem:[#allocation3 + $0x60] sm:$0xff] %vm1173, %v1102
      %1187 = vst.msk [vmem:[#allocation3 + $0x68] sm:$0xff] %vm1173, %v1104
      %1188 = vst.msk [vmem:[#allocation3 + $0x70] sm:$0xff] %vm1173, %v1106
      %1189 = vst.msk [vmem:[#allocation3 + $0x78] sm:$0xff] %vm1173, %v1108
      %1190 = vst.msk [vmem:[#allocation3 + $0x80] sm:$0xff] %vm1173, %v1110
      %1191 = vst.msk [vmem:[#allocation3 + $0x88] sm:$0xff] %vm1173, %v1112
      %1192 = vst.msk [vmem:[#allocation3 + $0x90] sm:$0xff] %vm1173, %v1114
      %1193 = vst.msk [vmem:[#allocation3 + $0x98] sm:$0xff] %vm1173, %v1116
      %1194 = vst.msk [vmem:[#allocation3 + $0xa0] sm:$0xff] %vm1173, %v1118
      %1195 = vst.msk [vmem:[#allocation3 + $0xa8] sm:$0xff] %vm1173, %v1120
      %1196 = vst.msk [vmem:[#allocation3 + $0xb0] sm:$0xff] %vm1173, %v1122
      %1197 = vst.msk [vmem:[#allocation3 + $0xb8] sm:$0xff] %vm1173, %v1124
      %1198 = vst.msk [vmem:[#allocation3 + $0xc0] sm:$0xff] %vm1173, %v1126
      %1199 = vst.msk [vmem:[#allocation3 + $0xc8] sm:$0xff] %vm1173, %v1128
      %1200 = vst.msk [vmem:[#allocation3 + $0xd0] sm:$0xff] %vm1173, %v1130
      %1201 = vst.msk [vmem:[#allocation3 + $0xd8] sm:$0xff] %vm1173, %v1132
      %1202 = vst.msk [vmem:[#allocation3 + $0xe0] sm:$0xff] %vm1173, %v1134
      %1203 = vst.msk [vmem:[#allocation3 + $0xe8] sm:$0xff] %vm1173, %v1136
      %1204 = vst.msk [vmem:[#allocation3 + $0xf0] sm:$0xff] %vm1173, %v1138
      %1205 = vst.msk [vmem:[#allocation3 + $0xf8] sm:$0xff] %vm1173, %v1140
      %v1206 = vld [vmem:[%s258 + $0x2] sm:$0xff]
      %v1207 = vld [vmem:[%s258 + $0xa] sm:$0xff]
      %v1208 = vld [vmem:[%s258 + $0x1a] sm:$0xff]
      %v1209 = vld [vmem:[%s258 + $0x22] sm:$0xff]
      %v1210 = vld [vmem:[%s258 + $0x32] sm:$0xff]
      %v1211 = vld [vmem:[%s258 + $0x3a] sm:$0xff]
      %v1212 = vld [vmem:[%s258 + $0x4a] sm:$0xff]
      %v1213 = vld [vmem:[%s258 + $0x52] sm:$0xff]
      %v1214 = vld [vmem:[%s258 + $0x62] sm:$0xff]
      %v1215 = vld [vmem:[%s258 + $0x6a] sm:$0xff]
      %v1216 = vld [vmem:[%s258 + $0x7a] sm:$0xff]
      %v1217 = vld [vmem:[%s258 + $0x82] sm:$0xff]
      %v1218 = vld [vmem:[%s258 + $0x92] sm:$0xff]
      %v1219 = vld [vmem:[%s258 + $0x9a] sm:$0xff]
      %v1220 = vld [vmem:[%s258 + $0xaa] sm:$0xff]
      %v1221 = vld [vmem:[%s258 + $0xb2] sm:$0xff]
      %v1222 = vld [vmem:[%s258 + $0xc2] sm:$0xff]
      %v1223 = vld [vmem:[%s258 + $0xca] sm:$0xff]
      %v1224 = vld [vmem:[%s258 + $0xda] sm:$0xff]
      %v1225 = vld [vmem:[%s258 + $0xe2] sm:$0xff]
      %v1226 = vld [vmem:[%s258 + $0xf2] sm:$0xff]
      %v1227 = vld [vmem:[%s258 + $0xfa] sm:$0xff]
      %v1228 = vld [vmem:[%s258 + $0x10a] sm:$0xff]
      %v1229 = vld [vmem:[%s258 + $0x112] sm:$0xff]
      %v1230 = vld [vmem:[%s258 + $0x122] sm:$0xff]
      %v1231 = vld [vmem:[%s258 + $0x12a] sm:$0xff]
      %v1232 = vld [vmem:[%s258 + $0x13a] sm:$0xff]
      %v1233 = vld [vmem:[%s258 + $0x142] sm:$0xff]
      %v1234 = vld [vmem:[%s258 + $0x152] sm:$0xff]
      %v1235 = vld [vmem:[%s258 + $0x15a] sm:$0xff]
      %v1236 = vld [vmem:[%s258 + $0x16a] sm:$0xff]
      %v1237 = vld [vmem:[%s258 + $0x172] sm:$0xff]
      %1270 = vrot.lane.b32.xlu0 %v1206, 20
      %v1271 = vpop.permute.xlu0 %1270
      %1272 = vrot.lane.b32.xlu0 %v1207, 20
      %v1273 = vpop.permute.xlu0 %1272
      %1274 = vrot.lane.b32.xlu0 %v1208, 20
      %v1275 = vpop.permute.xlu0 %1274
      %1276 = vrot.lane.b32.xlu0 %v1209, 20
      %v1277 = vpop.permute.xlu0 %1276
      %1278 = vrot.lane.b32.xlu0 %v1210, 20
      %v1279 = vpop.permute.xlu0 %1278
      %1280 = vrot.lane.b32.xlu0 %v1211, 20
      %v1281 = vpop.permute.xlu0 %1280
      %1282 = vrot.lane.b32.xlu0 %v1212, 20
      %v1283 = vpop.permute.xlu0 %1282
      %1284 = vrot.lane.b32.xlu0 %v1213, 20
      %v1285 = vpop.permute.xlu0 %1284
      %1286 = vrot.lane.b32.xlu0 %v1214, 20
      %v1287 = vpop.permute.xlu0 %1286
      %1288 = vrot.lane.b32.xlu0 %v1215, 20
      %v1289 = vpop.permute.xlu0 %1288
      %1290 = vrot.lane.b32.xlu0 %v1216, 20
      %v1291 = vpop.permute.xlu0 %1290
      %1292 = vrot.lane.b32.xlu0 %v1217, 20
      %v1293 = vpop.permute.xlu0 %1292
      %1294 = vrot.lane.b32.xlu0 %v1218, 20
      %v1295 = vpop.permute.xlu0 %1294
      %1296 = vrot.lane.b32.xlu0 %v1219, 20
      %v1297 = vpop.permute.xlu0 %1296
      %1298 = vrot.lane.b32.xlu0 %v1220, 20
      %v1299 = vpop.permute.xlu0 %1298
      %1300 = vrot.lane.b32.xlu0 %v1221, 20
      %v1301 = vpop.permute.xlu0 %1300
      %1302 = vrot.lane.b32.xlu0 %v1222, 20
      %v1303 = vpop.permute.xlu0 %1302
      %1304 = vrot.lane.b32.xlu0 %v1223, 20
      %v1305 = vpop.permute.xlu0 %1304
      %1306 = vrot.lane.b32.xlu0 %v1224, 20
      %v1307 = vpop.permute.xlu0 %1306
      %1308 = vrot.lane.b32.xlu0 %v1225, 20
      %v1309 = vpop.permute.xlu0 %1308
      %1310 = vrot.lane.b32.xlu0 %v1226, 20
      %v1311 = vpop.permute.xlu0 %1310
      %1312 = vrot.lane.b32.xlu0 %v1227, 20
      %v1313 = vpop.permute.xlu0 %1312
      %1314 = vrot.lane.b32.xlu0 %v1228, 20
      %v1315 = vpop.permute.xlu0 %1314
      %1316 = vrot.lane.b32.xlu0 %v1229, 20
      %v1317 = vpop.permute.xlu0 %1316
      %1318 = vrot.lane.b32.xlu0 %v1230, 20
      %v1319 = vpop.permute.xlu0 %1318
      %1320 = vrot.lane.b32.xlu0 %v1231, 20
      %v1321 = vpop.permute.xlu0 %1320
      %1322 = vrot.lane.b32.xlu0 %v1232, 20
      %v1323 = vpop.permute.xlu0 %1322
      %1324 = vrot.lane.b32.xlu0 %v1233, 20
      %v1325 = vpop.permute.xlu0 %1324
      %1326 = vrot.lane.b32.xlu0 %v1234, 20
      %v1327 = vpop.permute.xlu0 %1326
      %1328 = vrot.lane.b32.xlu0 %v1235, 20
      %v1329 = vpop.permute.xlu0 %1328
      %1330 = vrot.lane.b32.xlu0 %v1236, 20
      %v1331 = vpop.permute.xlu0 %1330
      %1332 = vrot.lane.b32.xlu0 %v1237, 20
      %v1333 = vpop.permute.xlu0 %1332
      %vm1366 = vcmask 195744
      %1367 = vst.msk [vmem:[#allocation3] sm:$0xff] %vm1366, %v1271
      %1368 = vst.msk [vmem:[#allocation3 + $0x8] sm:$0xff] %vm1366, %v1273
      %1369 = vst.msk [vmem:[#allocation3 + $0x10] sm:$0xff] %vm1366, %v1275
      %1370 = vst.msk [vmem:[#allocation3 + $0x18] sm:$0xff] %vm1366, %v1277
      %1371 = vst.msk [vmem:[#allocation3 + $0x20] sm:$0xff] %vm1366, %v1279
      %1372 = vst.msk [vmem:[#allocation3 + $0x28] sm:$0xff] %vm1366, %v1281
      %1373 = vst.msk [vmem:[#allocation3 + $0x30] sm:$0xff] %vm1366, %v1283
      %1374 = vst.msk [vmem:[#allocation3 + $0x38] sm:$0xff] %vm1366, %v1285
      %1375 = vst.msk [vmem:[#allocation3 + $0x40] sm:$0xff] %vm1366, %v1287
      %1376 = vst.msk [vmem:[#allocation3 + $0x48] sm:$0xff] %vm1366, %v1289
      %1377 = vst.msk [vmem:[#allocation3 + $0x50] sm:$0xff] %vm1366, %v1291
      %1378 = vst.msk [vmem:[#allocation3 + $0x58] sm:$0xff] %vm1366, %v1293
      %1379 = vst.msk [vmem:[#allocation3 + $0x60] sm:$0xff] %vm1366, %v1295
      %1380 = vst.msk [vmem:[#allocation3 + $0x68] sm:$0xff] %vm1366, %v1297
      %1381 = vst.msk [vmem:[#allocation3 + $0x70] sm:$0xff] %vm1366, %v1299
      %1382 = vst.msk [vmem:[#allocation3 + $0x78] sm:$0xff] %vm1366, %v1301
      %1383 = vst.msk [vmem:[#allocation3 + $0x80] sm:$0xff] %vm1366, %v1303
      %1384 = vst.msk [vmem:[#allocation3 + $0x88] sm:$0xff] %vm1366, %v1305
      %1385 = vst.msk [vmem:[#allocation3 + $0x90] sm:$0xff] %vm1366, %v1307
      %1386 = vst.msk [vmem:[#allocation3 + $0x98] sm:$0xff] %vm1366, %v1309
      %1387 = vst.msk [vmem:[#allocation3 + $0xa0] sm:$0xff] %vm1366, %v1311
      %1388 = vst.msk [vmem:[#allocation3 + $0xa8] sm:$0xff] %vm1366, %v1313
      %1389 = vst.msk [vmem:[#allocation3 + $0xb0] sm:$0xff] %vm1366, %v1315
      %1390 = vst.msk [vmem:[#allocation3 + $0xb8] sm:$0xff] %vm1366, %v1317
      %1391 = vst.msk [vmem:[#allocation3 + $0xc0] sm:$0xff] %vm1366, %v1319
      %1392 = vst.msk [vmem:[#allocation3 + $0xc8] sm:$0xff] %vm1366, %v1321
      %1393 = vst.msk [vmem:[#allocation3 + $0xd0] sm:$0xff] %vm1366, %v1323
      %1394 = vst.msk [vmem:[#allocation3 + $0xd8] sm:$0xff] %vm1366, %v1325
      %1395 = vst.msk [vmem:[#allocation3 + $0xe0] sm:$0xff] %vm1366, %v1327
      %1396 = vst.msk [vmem:[#allocation3 + $0xe8] sm:$0xff] %vm1366, %v1329
      %1397 = vst.msk [vmem:[#allocation3 + $0xf0] sm:$0xff] %vm1366, %v1331
      %1398 = vst.msk [vmem:[#allocation3 + $0xf8] sm:$0xff] %vm1366, %v1333
      %s1399 = scalar_lea.vmem [#allocation2], 48
      %v1400 = vld [vmem:[%s1399] sm:$0xff]
      %v1401 = vld [vmem:[%s1399 + $0x8] sm:$0xff]
      %v1402 = vld [vmem:[%s1399 + $0x18] sm:$0xff]
      %v1403 = vld [vmem:[%s1399 + $0x20] sm:$0xff]
      %v1404 = vld [vmem:[%s1399 + $0x30] sm:$0xff]
      %v1405 = vld [vmem:[%s1399 + $0x38] sm:$0xff]
      %v1406 = vld [vmem:[%s1399 + $0x48] sm:$0xff]
      %v1407 = vld [vmem:[%s1399 + $0x50] sm:$0xff]
      %v1408 = vld [vmem:[%s1399 + $0x60] sm:$0xff]
      %v1409 = vld [vmem:[%s1399 + $0x68] sm:$0xff]
      %v1410 = vld [vmem:[%s1399 + $0x78] sm:$0xff]
      %v1411 = vld [vmem:[%s1399 + $0x80] sm:$0xff]
      %v1412 = vld [vmem:[%s1399 + $0x90] sm:$0xff]
      %v1413 = vld [vmem:[%s1399 + $0x98] sm:$0xff]
      %v1414 = vld [vmem:[%s1399 + $0xa8] sm:$0xff]
      %v1415 = vld [vmem:[%s1399 + $0xb0] sm:$0xff]
      %v1416 = vld [vmem:[%s1399 + $0xc0] sm:$0xff]
      %v1417 = vld [vmem:[%s1399 + $0xc8] sm:$0xff]
      %v1418 = vld [vmem:[%s1399 + $0xd8] sm:$0xff]
      %v1419 = vld [vmem:[%s1399 + $0xe0] sm:$0xff]
      %v1420 = vld [vmem:[%s1399 + $0xf0] sm:$0xff]
      %v1421 = vld [vmem:[%s1399 + $0xf8] sm:$0xff]
      %v1422 = vld [vmem:[%s1399 + $0x108] sm:$0xff]
      %v1423 = vld [vmem:[%s1399 + $0x110] sm:$0xff]
      %v1424 = vld [vmem:[%s1399 + $0x120] sm:$0xff]
      %v1425 = vld [vmem:[%s1399 + $0x128] sm:$0xff]
      %v1426 = vld [vmem:[%s1399 + $0x138] sm:$0xff]
      %v1427 = vld [vmem:[%s1399 + $0x140] sm:$0xff]
      %v1428 = vld [vmem:[%s1399 + $0x150] sm:$0xff]
      %v1429 = vld [vmem:[%s1399 + $0x158] sm:$0xff]
      %v1430 = vld [vmem:[%s1399 + $0x168] sm:$0xff]
      %v1431 = vld [vmem:[%s1399 + $0x170] sm:$0xff]
      %1464 = vrot.lane.b32.xlu0 %v1400, 24
      %v1465 = vpop.permute.xlu0 %1464
      %1466 = vrot.lane.b32.xlu0 %v1401, 24
      %v1467 = vpop.permute.xlu0 %1466
      %1468 = vrot.lane.b32.xlu0 %v1402, 24
      %v1469 = vpop.permute.xlu0 %1468
      %1470 = vrot.lane.b32.xlu0 %v1403, 24
      %v1471 = vpop.permute.xlu0 %1470
      %1472 = vrot.lane.b32.xlu0 %v1404, 24
      %v1473 = vpop.permute.xlu0 %1472
      %1474 = vrot.lane.b32.xlu0 %v1405, 24
      %v1475 = vpop.permute.xlu0 %1474
      %1476 = vrot.lane.b32.xlu0 %v1406, 24
      %v1477 = vpop.permute.xlu0 %1476
      %1478 = vrot.lane.b32.xlu0 %v1407, 24
      %v1479 = vpop.permute.xlu0 %1478
      %1480 = vrot.lane.b32.xlu0 %v1408, 24
      %v1481 = vpop.permute.xlu0 %1480
      %1482 = vrot.lane.b32.xlu0 %v1409, 24
      %v1483 = vpop.permute.xlu0 %1482
      %1484 = vrot.lane.b32.xlu0 %v1410, 24
      %v1485 = vpop.permute.xlu0 %1484
      %1486 = vrot.lane.b32.xlu0 %v1411, 24
      %v1487 = vpop.permute.xlu0 %1486
      %1488 = vrot.lane.b32.xlu0 %v1412, 24
      %v1489 = vpop.permute.xlu0 %1488
      %1490 = vrot.lane.b32.xlu0 %v1413, 24
      %v1491 = vpop.permute.xlu0 %1490
      %1492 = vrot.lane.b32.xlu0 %v1414, 24
      %v1493 = vpop.permute.xlu0 %1492
      %1494 = vrot.lane.b32.xlu0 %v1415, 24
      %v1495 = vpop.permute.xlu0 %1494
      %1496 = vrot.lane.b32.xlu0 %v1416, 24
      %v1497 = vpop.permute.xlu0 %1496
      %1498 = vrot.lane.b32.xlu0 %v1417, 24
      %v1499 = vpop.permute.xlu0 %1498
      %1500 = vrot.lane.b32.xlu0 %v1418, 24
      %v1501 = vpop.permute.xlu0 %1500
      %1502 = vrot.lane.b32.xlu0 %v1419, 24
      %v1503 = vpop.permute.xlu0 %1502
      %1504 = vrot.lane.b32.xlu0 %v1420, 24
      %v1505 = vpop.permute.xlu0 %1504
      %1506 = vrot.lane.b32.xlu0 %v1421, 24
      %v1507 = vpop.permute.xlu0 %1506
      %1508 = vrot.lane.b32.xlu0 %v1422, 24
      %v1509 = vpop.permute.xlu0 %1508
      %1510 = vrot.lane.b32.xlu0 %v1423, 24
      %v1511 = vpop.permute.xlu0 %1510
      %1512 = vrot.lane.b32.xlu0 %v1424, 24
      %v1513 = vpop.permute.xlu0 %1512
      %1514 = vrot.lane.b32.xlu0 %v1425, 24
      %v1515 = vpop.permute.xlu0 %1514
      %1516 = vrot.lane.b32.xlu0 %v1426, 24
      %v1517 = vpop.permute.xlu0 %1516
      %1518 = vrot.lane.b32.xlu0 %v1427, 24
      %v1519 = vpop.permute.xlu0 %1518
      %1520 = vrot.lane.b32.xlu0 %v1428, 24
      %v1521 = vpop.permute.xlu0 %1520
      %1522 = vrot.lane.b32.xlu0 %v1429, 24
      %v1523 = vpop.permute.xlu0 %1522
      %1524 = vrot.lane.b32.xlu0 %v1430, 24
      %v1525 = vpop.permute.xlu0 %1524
      %1526 = vrot.lane.b32.xlu0 %v1431, 24
      %v1527 = vpop.permute.xlu0 %1526
      %vm1560 = vcmask 228544
      %1561 = vst.msk [vmem:[#allocation3] sm:$0xff] %vm1560, %v1465
      %1562 = vst.msk [vmem:[#allocation3 + $0x8] sm:$0xff] %vm1560, %v1467
      %1563 = vst.msk [vmem:[#allocation3 + $0x10] sm:$0xff] %vm1560, %v1469
      %1564 = vst.msk [vmem:[#allocation3 + $0x18] sm:$0xff] %vm1560, %v1471
      %1565 = vst.msk [vmem:[#allocation3 + $0x20] sm:$0xff] %vm1560, %v1473
      %1566 = vst.msk [vmem:[#allocation3 + $0x28] sm:$0xff] %vm1560, %v1475
      %1567 = vst.msk [vmem:[#allocation3 + $0x30] sm:$0xff] %vm1560, %v1477
      %1568 = vst.msk [vmem:[#allocation3 + $0x38] sm:$0xff] %vm1560, %v1479
      %1569 = vst.msk [vmem:[#allocation3 + $0x40] sm:$0xff] %vm1560, %v1481
      %1570 = vst.msk [vmem:[#allocation3 + $0x48] sm:$0xff] %vm1560, %v1483
      %1571 = vst.msk [vmem:[#allocation3 + $0x50] sm:$0xff] %vm1560, %v1485
      %1572 = vst.msk [vmem:[#allocation3 + $0x58] sm:$0xff] %vm1560, %v1487
      %1573 = vst.msk [vmem:[#allocation3 + $0x60] sm:$0xff] %vm1560, %v1489
      %1574 = vst.msk [vmem:[#allocation3 + $0x68] sm:$0xff] %vm1560, %v1491
      %1575 = vst.msk [vmem:[#allocation3 + $0x70] sm:$0xff] %vm1560, %v1493
      %1576 = vst.msk [vmem:[#allocation3 + $0x78] sm:$0xff] %vm1560, %v1495
      %1577 = vst.msk [vmem:[#allocation3 + $0x80] sm:$0xff] %vm1560, %v1497
      %1578 = vst.msk [vmem:[#allocation3 + $0x88] sm:$0xff] %vm1560, %v1499
      %1579 = vst.msk [vmem:[#allocation3 + $0x90] sm:$0xff] %vm1560, %v1501
      %1580 = vst.msk [vmem:[#allocation3 + $0x98] sm:$0xff] %vm1560, %v1503
      %1581 = vst.msk [vmem:[#allocation3 + $0xa0] sm:$0xff] %vm1560, %v1505
      %1582 = vst.msk [vmem:[#allocation3 + $0xa8] sm:$0xff] %vm1560, %v1507
      %1583 = vst.msk [vmem:[#allocation3 + $0xb0] sm:$0xff] %vm1560, %v1509
      %1584 = vst.msk [vmem:[#allocation3 + $0xb8] sm:$0xff] %vm1560, %v1511
      %1585 = vst.msk [vmem:[#allocation3 + $0xc0] sm:$0xff] %vm1560, %v1513
      %1586 = vst.msk [vmem:[#allocation3 + $0xc8] sm:$0xff] %vm1560, %v1515
      %1587 = vst.msk [vmem:[#allocation3 + $0xd0] sm:$0xff] %vm1560, %v1517
      %1588 = vst.msk [vmem:[#allocation3 + $0xd8] sm:$0xff] %vm1560, %v1519
      %1589 = vst.msk [vmem:[#allocation3 + $0xe0] sm:$0xff] %vm1560, %v1521
      %1590 = vst.msk [vmem:[#allocation3 + $0xe8] sm:$0xff] %vm1560, %v1523
      %1591 = vst.msk [vmem:[#allocation3 + $0xf0] sm:$0xff] %vm1560, %v1525
      %1592 = vst.msk [vmem:[#allocation3 + $0xf8] sm:$0xff] %vm1560, %v1527
      %v1593 = vld [vmem:[%s1399 + $0x1] sm:$0xff]
      %v1594 = vld [vmem:[%s1399 + $0x9] sm:$0xff]
      %v1595 = vld [vmem:[%s1399 + $0x19] sm:$0xff]
      %v1596 = vld [vmem:[%s1399 + $0x21] sm:$0xff]
      %v1597 = vld [vmem:[%s1399 + $0x31] sm:$0xff]
      %v1598 = vld [vmem:[%s1399 + $0x39] sm:$0xff]
      %v1599 = vld [vmem:[%s1399 + $0x49] sm:$0xff]
      %v1600 = vld [vmem:[%s1399 + $0x51] sm:$0xff]
      %v1601 = vld [vmem:[%s1399 + $0x61] sm:$0xff]
      %v1602 = vld [vmem:[%s1399 + $0x69] sm:$0xff]
      %v1603 = vld [vmem:[%s1399 + $0x79] sm:$0xff]
      %v1604 = vld [vmem:[%s1399 + $0x81] sm:$0xff]
      %v1605 = vld [vmem:[%s1399 + $0x91] sm:$0xff]
      %v1606 = vld [vmem:[%s1399 + $0x99] sm:$0xff]
      %v1607 = vld [vmem:[%s1399 + $0xa9] sm:$0xff]
      %v1608 = vld [vmem:[%s1399 + $0xb1] sm:$0xff]
      %v1609 = vld [vmem:[%s1399 + $0xc1] sm:$0xff]
      %v1610 = vld [vmem:[%s1399 + $0xc9] sm:$0xff]
      %v1611 = vld [vmem:[%s1399 + $0xd9] sm:$0xff]
      %v1612 = vld [vmem:[%s1399 + $0xe1] sm:$0xff]
      %v1613 = vld [vmem:[%s1399 + $0xf1] sm:$0xff]
      %v1614 = vld [vmem:[%s1399 + $0xf9] sm:$0xff]
      %v1615 = vld [vmem:[%s1399 + $0x109] sm:$0xff]
      %v1616 = vld [vmem:[%s1399 + $0x111] sm:$0xff]
      %v1617 = vld [vmem:[%s1399 + $0x121] sm:$0xff]
      %v1618 = vld [vmem:[%s1399 + $0x129] sm:$0xff]
      %v1619 = vld [vmem:[%s1399 + $0x139] sm:$0xff]
      %v1620 = vld [vmem:[%s1399 + $0x141] sm:$0xff]
      %v1621 = vld [vmem:[%s1399 + $0x151] sm:$0xff]
      %v1622 = vld [vmem:[%s1399 + $0x159] sm:$0xff]
      %v1623 = vld [vmem:[%s1399 + $0x169] sm:$0xff]
      %v1624 = vld [vmem:[%s1399 + $0x171] sm:$0xff]
      %1657 = vrot.lane.b32.xlu0 %v1593, 28
      %v1658 = vpop.permute.xlu0 %1657
      %1659 = vrot.lane.b32.xlu0 %v1594, 28
      %v1660 = vpop.permute.xlu0 %1659
      %1661 = vrot.lane.b32.xlu0 %v1595, 28
      %v1662 = vpop.permute.xlu0 %1661
      %1663 = vrot.lane.b32.xlu0 %v1596, 28
      %v1664 = vpop.permute.xlu0 %1663
      %1665 = vrot.lane.b32.xlu0 %v1597, 28
      %v1666 = vpop.permute.xlu0 %1665
      %1667 = vrot.lane.b32.xlu0 %v1598, 28
      %v1668 = vpop.permute.xlu0 %1667
      %1669 = vrot.lane.b32.xlu0 %v1599, 28
      %v1670 = vpop.permute.xlu0 %1669
      %1671 = vrot.lane.b32.xlu0 %v1600, 28
      %v1672 = vpop.permute.xlu0 %1671
      %1673 = vrot.lane.b32.xlu0 %v1601, 28
      %v1674 = vpop.permute.xlu0 %1673
      %1675 = vrot.lane.b32.xlu0 %v1602, 28
      %v1676 = vpop.permute.xlu0 %1675
      %1677 = vrot.lane.b32.xlu0 %v1603, 28
      %v1678 = vpop.permute.xlu0 %1677
      %1679 = vrot.lane.b32.xlu0 %v1604, 28
      %v1680 = vpop.permute.xlu0 %1679
      %1681 = vrot.lane.b32.xlu0 %v1605, 28
      %v1682 = vpop.permute.xlu0 %1681
      %1683 = vrot.lane.b32.xlu0 %v1606, 28
      %v1684 = vpop.permute.xlu0 %1683
      %1685 = vrot.lane.b32.xlu0 %v1607, 28
      %v1686 = vpop.permute.xlu0 %1685
      %1687 = vrot.lane.b32.xlu0 %v1608, 28
      %v1688 = vpop.permute.xlu0 %1687
      %1689 = vrot.lane.b32.xlu0 %v1609, 28
      %v1690 = vpop.permute.xlu0 %1689
      %1691 = vrot.lane.b32.xlu0 %v1610, 28
      %v1692 = vpop.permute.xlu0 %1691
      %1693 = vrot.lane.b32.xlu0 %v1611, 28
      %v1694 = vpop.permute.xlu0 %1693
      %1695 = vrot.lane.b32.xlu0 %v1612, 28
      %v1696 = vpop.permute.xlu0 %1695
      %1697 = vrot.lane.b32.xlu0 %v1613, 28
      %v1698 = vpop.permute.xlu0 %1697
      %1699 = vrot.lane.b32.xlu0 %v1614, 28
      %v1700 = vpop.permute.xlu0 %1699
      %1701 = vrot.lane.b32.xlu0 %v1615, 28
      %v1702 = vpop.permute.xlu0 %1701
      %1703 = vrot.lane.b32.xlu0 %v1616, 28
      %v1704 = vpop.permute.xlu0 %1703
      %1705 = vrot.lane.b32.xlu0 %v1617, 28
      %v1706 = vpop.permute.xlu0 %1705
      %1707 = vrot.lane.b32.xlu0 %v1618, 28
      %v1708 = vpop.permute.xlu0 %1707
      %1709 = vrot.lane.b32.xlu0 %v1619, 28
      %v1710 = vpop.permute.xlu0 %1709
      %1711 = vrot.lane.b32.xlu0 %v1620, 28
      %v1712 = vpop.permute.xlu0 %1711
      %1713 = vrot.lane.b32.xlu0 %v1621, 28
      %v1714 = vpop.permute.xlu0 %1713
      %1715 = vrot.lane.b32.xlu0 %v1622, 28
      %v1716 = vpop.permute.xlu0 %1715
      %1717 = vrot.lane.b32.xlu0 %v1623, 28
      %v1718 = vpop.permute.xlu0 %1717
      %1719 = vrot.lane.b32.xlu0 %v1624, 28
      %v1720 = vpop.permute.xlu0 %1719
      %vm1753 = vcmask 261344
      %1754 = vst.msk [vmem:[#allocation3] sm:$0xff] %vm1753, %v1658
      %1755 = vst.msk [vmem:[#allocation3 + $0x8] sm:$0xff] %vm1753, %v1660
      %1756 = vst.msk [vmem:[#allocation3 + $0x10] sm:$0xff] %vm1753, %v1662
      %1757 = vst.msk [vmem:[#allocation3 + $0x18] sm:$0xff] %vm1753, %v1664
      %1758 = vst.msk [vmem:[#allocation3 + $0x20] sm:$0xff] %vm1753, %v1666
      %1759 = vst.msk [vmem:[#allocation3 + $0x28] sm:$0xff] %vm1753, %v1668
      %1760 = vst.msk [vmem:[#allocation3 + $0x30] sm:$0xff] %vm1753, %v1670
      %1761 = vst.msk [vmem:[#allocation3 + $0x38] sm:$0xff] %vm1753, %v1672
      %1762 = vst.msk [vmem:[#allocation3 + $0x40] sm:$0xff] %vm1753, %v1674
      %1763 = vst.msk [vmem:[#allocation3 + $0x48] sm:$0xff] %vm1753, %v1676
      %1764 = vst.msk [vmem:[#allocation3 + $0x50] sm:$0xff] %vm1753, %v1678
      %1765 = vst.msk [vmem:[#allocation3 + $0x58] sm:$0xff] %vm1753, %v1680
      %1766 = vst.msk [vmem:[#allocation3 + $0x60] sm:$0xff] %vm1753, %v1682
      %1767 = vst.msk [vmem:[#allocation3 + $0x68] sm:$0xff] %vm1753, %v1684
      %1768 = vst.msk [vmem:[#allocation3 + $0x70] sm:$0xff] %vm1753, %v1686
      %1769 = vst.msk [vmem:[#allocation3 + $0x78] sm:$0xff] %vm1753, %v1688
      %1770 = vst.msk [vmem:[#allocation3 + $0x80] sm:$0xff] %vm1753, %v1690
      %1771 = vst.msk [vmem:[#allocation3 + $0x88] sm:$0xff] %vm1753, %v1692
      %1772 = vst.msk [vmem:[#allocation3 + $0x90] sm:$0xff] %vm1753, %v1694
      %1773 = vst.msk [vmem:[#allocation3 + $0x98] sm:$0xff] %vm1753, %v1696
      %1774 = vst.msk [vmem:[#allocation3 + $0xa0] sm:$0xff] %vm1753, %v1698
      %1775 = vst.msk [vmem:[#allocation3 + $0xa8] sm:$0xff] %vm1753, %v1700
      %1776 = vst.msk [vmem:[#allocation3 + $0xb0] sm:$0xff] %vm1753, %v1702
      %1777 = vst.msk [vmem:[#allocation3 + $0xb8] sm:$0xff] %vm1753, %v1704
      %1778 = vst.msk [vmem:[#allocation3 + $0xc0] sm:$0xff] %vm1753, %v1706
      %1779 = vst.msk [vmem:[#allocation3 + $0xc8] sm:$0xff] %vm1753, %v1708
      %1780 = vst.msk [vmem:[#allocation3 + $0xd0] sm:$0xff] %vm1753, %v1710
      %1781 = vst.msk [vmem:[#allocation3 + $0xd8] sm:$0xff] %vm1753, %v1712
      %1782 = vst.msk [vmem:[#allocation3 + $0xe0] sm:$0xff] %vm1753, %v1714
      %1783 = vst.msk [vmem:[#allocation3 + $0xe8] sm:$0xff] %vm1753, %v1716
      %1784 = vst.msk [vmem:[#allocation3 + $0xf0] sm:$0xff] %vm1753, %v1718
      %1785 = vst.msk [vmem:[#allocation3 + $0xf8] sm:$0xff] %vm1753, %v1720
      %v1786 = vld [vmem:[%s1399 + $0x2] sm:$0xff]
      %v1787 = vld [vmem:[%s1399 + $0xa] sm:$0xff]
      %v1788 = vld [vmem:[%s1399 + $0x1a] sm:$0xff]
      %v1789 = vld [vmem:[%s1399 + $0x22] sm:$0xff]
      %v1790 = vld [vmem:[%s1399 + $0x32] sm:$0xff]
      %v1791 = vld [vmem:[%s1399 + $0x3a] sm:$0xff]
      %v1792 = vld [vmem:[%s1399 + $0x4a] sm:$0xff]
      %v1793 = vld [vmem:[%s1399 + $0x52] sm:$0xff]
      %v1794 = vld [vmem:[%s1399 + $0x62] sm:$0xff]
      %v1795 = vld [vmem:[%s1399 + $0x6a] sm:$0xff]
      %v1796 = vld [vmem:[%s1399 + $0x7a] sm:$0xff]
      %v1797 = vld [vmem:[%s1399 + $0x82] sm:$0xff]
      %v1798 = vld [vmem:[%s1399 + $0x92] sm:$0xff]
      %v1799 = vld [vmem:[%s1399 + $0x9a] sm:$0xff]
      %v1800 = vld [vmem:[%s1399 + $0xaa] sm:$0xff]
      %v1801 = vld [vmem:[%s1399 + $0xb2] sm:$0xff]
      %v1802 = vld [vmem:[%s1399 + $0xc2] sm:$0xff]
      %v1803 = vld [vmem:[%s1399 + $0xca] sm:$0xff]
      %v1804 = vld [vmem:[%s1399 + $0xda] sm:$0xff]
      %v1805 = vld [vmem:[%s1399 + $0xe2] sm:$0xff]
      %v1806 = vld [vmem:[%s1399 + $0xf2] sm:$0xff]
      %v1807 = vld [vmem:[%s1399 + $0xfa] sm:$0xff]
      %v1808 = vld [vmem:[%s1399 + $0x10a] sm:$0xff]
      %v1809 = vld [vmem:[%s1399 + $0x112] sm:$0xff]
      %v1810 = vld [vmem:[%s1399 + $0x122] sm:$0xff]
      %v1811 = vld [vmem:[%s1399 + $0x12a] sm:$0xff]
      %v1812 = vld [vmem:[%s1399 + $0x13a] sm:$0xff]
      %v1813 = vld [vmem:[%s1399 + $0x142] sm:$0xff]
      %v1814 = vld [vmem:[%s1399 + $0x152] sm:$0xff]
      %v1815 = vld [vmem:[%s1399 + $0x15a] sm:$0xff]
      %v1816 = vld [vmem:[%s1399 + $0x16a] sm:$0xff]
      %v1817 = vld [vmem:[%s1399 + $0x172] sm:$0xff]
      %1850 = vrot.lane.b32.xlu0 %v1786, 32
      %v1851 = vpop.permute.xlu0 %1850
      %1852 = vrot.lane.b32.xlu0 %v1787, 32
      %v1853 = vpop.permute.xlu0 %1852
      %1854 = vrot.lane.b32.xlu0 %v1788, 32
      %v1855 = vpop.permute.xlu0 %1854
      %1856 = vrot.lane.b32.xlu0 %v1789, 32
      %v1857 = vpop.permute.xlu0 %1856
      %1858 = vrot.lane.b32.xlu0 %v1790, 32
      %v1859 = vpop.permute.xlu0 %1858
      %1860 = vrot.lane.b32.xlu0 %v1791, 32
      %v1861 = vpop.permute.xlu0 %1860
      %1862 = vrot.lane.b32.xlu0 %v1792, 32
      %v1863 = vpop.permute.xlu0 %1862
      %1864 = vrot.lane.b32.xlu0 %v1793, 32
      %v1865 = vpop.permute.xlu0 %1864
      %1866 = vrot.lane.b32.xlu0 %v1794, 32
      %v1867 = vpop.permute.xlu0 %1866
      %1868 = vrot.lane.b32.xlu0 %v1795, 32
      %v1869 = vpop.permute.xlu0 %1868
      %1870 = vrot.lane.b32.xlu0 %v1796, 32
      %v1871 = vpop.permute.xlu0 %1870
      %1872 = vrot.lane.b32.xlu0 %v1797, 32
      %v1873 = vpop.permute.xlu0 %1872
      %1874 = vrot.lane.b32.xlu0 %v1798, 32
      %v1875 = vpop.permute.xlu0 %1874
      %1876 = vrot.lane.b32.xlu0 %v1799, 32
      %v1877 = vpop.permute.xlu0 %1876
      %1878 = vrot.lane.b32.xlu0 %v1800, 32
      %v1879 = vpop.permute.xlu0 %1878
      %1880 = vrot.lane.b32.xlu0 %v1801, 32
      %v1881 = vpop.permute.xlu0 %1880
      %1882 = vrot.lane.b32.xlu0 %v1802, 32
      %v1883 = vpop.permute.xlu0 %1882
      %1884 = vrot.lane.b32.xlu0 %v1803, 32
      %v1885 = vpop.permute.xlu0 %1884
      %1886 = vrot.lane.b32.xlu0 %v1804, 32
      %v1887 = vpop.permute.xlu0 %1886
      %1888 = vrot.lane.b32.xlu0 %v1805, 32
      %v1889 = vpop.permute.xlu0 %1888
      %1890 = vrot.lane.b32.xlu0 %v1806, 32
      %v1891 = vpop.permute.xlu0 %1890
      %1892 = vrot.lane.b32.xlu0 %v1807, 32
      %v1893 = vpop.permute.xlu0 %1892
      %1894 = vrot.lane.b32.xlu0 %v1808, 32
      %v1895 = vpop.permute.xlu0 %1894
      %1896 = vrot.lane.b32.xlu0 %v1809, 32
      %v1897 = vpop.permute.xlu0 %1896
      %1898 = vrot.lane.b32.xlu0 %v1810, 32
      %v1899 = vpop.permute.xlu0 %1898
      %1900 = vrot.lane.b32.xlu0 %v1811, 32
      %v1901 = vpop.permute.xlu0 %1900
      %1902 = vrot.lane.b32.xlu0 %v1812, 32
      %v1903 = vpop.permute.xlu0 %1902
      %1904 = vrot.lane.b32.xlu0 %v1813, 32
      %v1905 = vpop.permute.xlu0 %1904
      %1906 = vrot.lane.b32.xlu0 %v1814, 32
      %v1907 = vpop.permute.xlu0 %1906
      %1908 = vrot.lane.b32.xlu0 %v1815, 32
      %v1909 = vpop.permute.xlu0 %1908
      %1910 = vrot.lane.b32.xlu0 %v1816, 32
      %v1911 = vpop.permute.xlu0 %1910
      %1912 = vrot.lane.b32.xlu0 %v1817, 32
      %v1913 = vpop.permute.xlu0 %1912
      %vm1946 = vcmask 294144
      %1947 = vst.msk [vmem:[#allocation3] sm:$0xff] %vm1946, %v1851
      %1948 = vst.msk [vmem:[#allocation3 + $0x8] sm:$0xff] %vm1946, %v1853
      %1949 = vst.msk [vmem:[#allocation3 + $0x10] sm:$0xff] %vm1946, %v1855
      %1950 = vst.msk [vmem:[#allocation3 + $0x18] sm:$0xff] %vm1946, %v1857
      %1951 = vst.msk [vmem:[#allocation3 + $0x20] sm:$0xff] %vm1946, %v1859
      %1952 = vst.msk [vmem:[#allocation3 + $0x28] sm:$0xff] %vm1946, %v1861
      %1953 = vst.msk [vmem:[#allocation3 + $0x30] sm:$0xff] %vm1946, %v1863
      %1954 = vst.msk [vmem:[#allocation3 + $0x38] sm:$0xff] %vm1946, %v1865
      %1955 = vst.msk [vmem:[#allocation3 + $0x40] sm:$0xff] %vm1946, %v1867
      %1956 = vst.msk [vmem:[#allocation3 + $0x48] sm:$0xff] %vm1946, %v1869
      %1957 = vst.msk [vmem:[#allocation3 + $0x50] sm:$0xff] %vm1946, %v1871
      %1958 = vst.msk [vmem:[#allocation3 + $0x58] sm:$0xff] %vm1946, %v1873
      %1959 = vst.msk [vmem:[#allocation3 + $0x60] sm:$0xff] %vm1946, %v1875
      %1960 = vst.msk [vmem:[#allocation3 + $0x68] sm:$0xff] %vm1946, %v1877
      %1961 = vst.msk [vmem:[#allocation3 + $0x70] sm:$0xff] %vm1946, %v1879
      %1962 = vst.msk [vmem:[#allocation3 + $0x78] sm:$0xff] %vm1946, %v1881
      %1963 = vst.msk [vmem:[#allocation3 + $0x80] sm:$0xff] %vm1946, %v1883
      %1964 = vst.msk [vmem:[#allocation3 + $0x88] sm:$0xff] %vm1946, %v1885
      %1965 = vst.msk [vmem:[#allocation3 + $0x90] sm:$0xff] %vm1946, %v1887
      %1966 = vst.msk [vmem:[#allocation3 + $0x98] sm:$0xff] %vm1946, %v1889
      %1967 = vst.msk [vmem:[#allocation3 + $0xa0] sm:$0xff] %vm1946, %v1891
      %1968 = vst.msk [vmem:[#allocation3 + $0xa8] sm:$0xff] %vm1946, %v1893
      %1969 = vst.msk [vmem:[#allocation3 + $0xb0] sm:$0xff] %vm1946, %v1895
      %1970 = vst.msk [vmem:[#allocation3 + $0xb8] sm:$0xff] %vm1946, %v1897
      %1971 = vst.msk [vmem:[#allocation3 + $0xc0] sm:$0xff] %vm1946, %v1899
      %1972 = vst.msk [vmem:[#allocation3 + $0xc8] sm:$0xff] %vm1946, %v1901
      %1973 = vst.msk [vmem:[#allocation3 + $0xd0] sm:$0xff] %vm1946, %v1903
      %1974 = vst.msk [vmem:[#allocation3 + $0xd8] sm:$0xff] %vm1946, %v1905
      %1975 = vst.msk [vmem:[#allocation3 + $0xe0] sm:$0xff] %vm1946, %v1907
      %1976 = vst.msk [vmem:[#allocation3 + $0xe8] sm:$0xff] %vm1946, %v1909
      %1977 = vst.msk [vmem:[#allocation3 + $0xf0] sm:$0xff] %vm1946, %v1911
      %1978 = vst.msk [vmem:[#allocation3 + $0xf8] sm:$0xff] %vm1946, %v1913
      %v1979 = vld [vmem:[#allocation3] sm:$0xff]
      %v1980 = vld [vmem:[#allocation3 + $0x8] sm:$0xff]
      %v1981 = vld [vmem:[#allocation3 + $0x10] sm:$0xff]
      %v1982 = vld [vmem:[#allocation3 + $0x18] sm:$0xff]
      %v1983 = vld [vmem:[#allocation3 + $0x20] sm:$0xff]
      %v1984 = vld [vmem:[#allocation3 + $0x28] sm:$0xff]
      %v1985 = vld [vmem:[#allocation3 + $0x30] sm:$0xff]
      %v1986 = vld [vmem:[#allocation3 + $0x38] sm:$0xff]
      %v1987 = vld [vmem:[#allocation3 + $0x40] sm:$0xff]
      %v1988 = vld [vmem:[#allocation3 + $0x48] sm:$0xff]
      %v1989 = vld [vmem:[#allocation3 + $0x50] sm:$0xff]
      %v1990 = vld [vmem:[#allocation3 + $0x58] sm:$0xff]
      %v1991 = vld [vmem:[#allocation3 + $0x60] sm:$0xff]
      %v1992 = vld [vmem:[#allocation3 + $0x68] sm:$0xff]
      %v1993 = vld [vmem:[#allocation3 + $0x70] sm:$0xff]
      %v1994 = vld [vmem:[#allocation3 + $0x78] sm:$0xff]
      %v1995 = vld [vmem:[#allocation3 + $0x80] sm:$0xff]
      %v1996 = vld [vmem:[#allocation3 + $0x88] sm:$0xff]
      %v1997 = vld [vmem:[#allocation3 + $0x90] sm:$0xff]
      %v1998 = vld [vmem:[#allocation3 + $0x98] sm:$0xff]
      %v1999 = vld [vmem:[#allocation3 + $0xa0] sm:$0xff]
      %v2000 = vld [vmem:[#allocation3 + $0xa8] sm:$0xff]
      %v2001 = vld [vmem:[#allocation3 + $0xb0] sm:$0xff]
      %v2002 = vld [vmem:[#allocation3 + $0xb8] sm:$0xff]
      %v2003 = vld [vmem:[#allocation3 + $0xc0] sm:$0xff]
      %v2004 = vld [vmem:[#allocation3 + $0xc8] sm:$0xff]
      %v2005 = vld [vmem:[#allocation3 + $0xd0] sm:$0xff]
      %v2006 = vld [vmem:[#allocation3 + $0xd8] sm:$0xff]
      %v2007 = vld [vmem:[#allocation3 + $0xe0] sm:$0xff]
      %v2008 = vld [vmem:[#allocation3 + $0xe8] sm:$0xff]
      %v2009 = vld [vmem:[#allocation3 + $0xf0] sm:$0xff]
      %v2010 = vld [vmem:[#allocation3 + $0xf8] sm:$0xff]
      %v2011 = vpack.c.bf16 %v1980, %v1979
      %v2012 = vpack.c.bf16 %v1982, %v1981
      %v2013 = vpack.c.bf16 %v1984, %v1983
      %v2014 = vpack.c.bf16 %v1986, %v1985
      %v2015 = vpack.c.bf16 %v1988, %v1987
      %v2016 = vpack.c.bf16 %v1990, %v1989
      %v2017 = vpack.c.bf16 %v1992, %v1991
      %v2018 = vpack.c.bf16 %v1994, %v1993
      %v2019 = vpack.c.bf16 %v1996, %v1995
      %v2020 = vpack.c.bf16 %v1998, %v1997
      %v2021 = vpack.c.bf16 %v2000, %v1999
      %v2022 = vpack.c.bf16 %v2002, %v2001
      %v2023 = vpack.c.bf16 %v2004, %v2003
      %v2024 = vpack.c.bf16 %v2006, %v2005
      %v2025 = vpack.c.bf16 %v2008, %v2007
      %v2026 = vpack.c.bf16 %v2010, %v2009
      %v2027 = vld [vmem:[%s1] sm:$0xf]
      %v2028 = vld [vmem:[%s1 + $0x4] sm:$0xf]
      %v2029 = vld [vmem:[%s1 + $0x8] sm:$0xf]
      %v2030 = vld [vmem:[%s1 + $0xc] sm:$0xf]
      %v2031 = vld [vmem:[%s1 + $0x10] sm:$0x3]
      %v2032 = vld [vmem:[%s2] sm:$0x1]
      %v2034 = vlaneseq
      %v2035 = vshrl.u32 %v2034, 7
      %v2036 = vsub.s32 0, %v2035
      %v2037 = vrot.slane %v2032, %v2036
      %v2044 = vunpack.c.l.b16 %v2027
      %v2045 = vunpack.c.l.b16 %v2028
      %v2046 = vunpack.c.l.b16 %v2029
      %v2047 = vunpack.c.l.b16 %v2030
      %v2048 = vunpack.c.l.b16 %v2031
      %v2049 = vpack.c.b16 %v2045, %v2044
      %v2050 = vpack.c.b16 %v2047, %v2046
      %v2051 = vpack.c.b16 %v2048, %v2048
      %vm2054 = vcmask 293888
      %v2056 = vsel %vm2054, %v2011, 0
      %v2059 = vsel %vm2054, %v2012, 0
      %v2062 = vsel %vm2054, %v2013, 0
      %v2065 = vsel %vm2054, %v2014, 0
      %v2068 = vsel %vm2054, %v2015, 0
      %v2071 = vsel %vm2054, %v2016, 0
      %v2074 = vsel %vm2054, %v2017, 0
      %v2077 = vsel %vm2054, %v2018, 0
      %v2080 = vsel %vm2054, %v2019, 0
      %v2083 = vsel %vm2054, %v2020, 0
      %v2086 = vsel %vm2054, %v2021, 0
      %v2089 = vsel %vm2054, %v2022, 0
      %v2092 = vsel %vm2054, %v2023, 0
      %v2095 = vsel %vm2054, %v2024, 0
      %v2098 = vsel %vm2054, %v2025, 0
      %v2101 = vsel %vm2054, %v2026, 0
      %vm2103 = vcmask 1041408
      %v2105 = vsel %vm2103, %v2051, 0
      %2107 = vmatprep.subr.bf16.mxu0 0
      %2108 = vmatpush1.bf16.msra.mxu0 0
      %2109 = vmatprep.subr.bf16.mxu0 0
      %2110 = vmatpush1.bf16.msra.mxu0 0
      %2111 = vmatprep.subr.bf16.mxu0 0
      %2112 = vmatpush1.bf16.msra.mxu0 0
      %2113 = vmatprep.subr.bf16.mxu0 0
      %2114 = vmatpush1.bf16.msra.mxu0 0
      %2115 = vmatprep.subr.bf16.mxu0 0
      %2116 = vmatpush1.bf16.msra.mxu0 0
      %2117 = vmatprep.subr.bf16.mxu0 0
      %2118 = vmatpush1.bf16.msra.mxu0 %v2105
      %2119 = vmatprep.subr.bf16.mxu0 0
      %2120 = vmatpush1.bf16.msra.mxu0 %v2050
      %2121 = vmatprep.subr.bf16.mxu0 0
      %2122 = vmatpush1.bf16.msra.mxu0 %v2049
      %2123 = vmatprep.subr.bf16.mxu0 0
      %2124 = vmatpush2.bf16.msra.mxu0 0
      %2125 = vmatprep.subr.bf16.mxu0 0
      %2126 = vmatpush2.bf16.msra.mxu0 0
      %2127 = vmatprep.subr.bf16.mxu0 0
      %2128 = vmatpush2.bf16.msra.mxu0 0
      %2129 = vmatprep.subr.bf16.mxu0 0
      %2130 = vmatpush2.bf16.msra.mxu0 0
      %2131 = vmatprep.subr.bf16.mxu0 0
      %2132 = vmatpush2.bf16.msra.mxu0 0
      %2133 = vmatprep.subr.bf16.mxu0 0
      %2134 = vmatpush2.bf16.msra.mxu0 0
      %2135 = vmatprep.subr.bf16.mxu0 0
      %2136 = vmatpush2.bf16.msra.mxu0 0
      %2137 = vmatprep.subr.bf16.mxu0 0
      %2138 = vmatpush2.bf16.msra.mxu0 0
      %2139 = vmatprep.mubr.bf16.mxu0 0
      %2140 = vmatmul.mubr.bf16.gmra.mxu0 %v2056
      %v2141 = vpop.f32.mrf.mxu0
      %v2142 = vadd.f32 %v2037, %v2141
      %v2143 = vpop.f32.mrf.mxu0
      %v2144 = vpop.f32.mrf.mxu0
      %v2145 = vadd.f32 %v2037, %v2144
      %v2146 = vpop.f32.mrf.mxu0
      %2147 = vmatprep.mubr.bf16.mxu0 0
      %2148 = vmatmul.mubr.bf16.gmra.mxu0 %v2059
      %v2149 = vpop.f32.mrf.mxu0
      %v2150 = vadd.f32 %v2037, %v2149
      %v2151 = vpop.f32.mrf.mxu0
      %v2152 = vpop.f32.mrf.mxu0
      %v2153 = vadd.f32 %v2037, %v2152
      %v2154 = vpop.f32.mrf.mxu0
      %2155 = vmatprep.mubr.bf16.mxu0 0
      %2156 = vmatmul.mubr.bf16.gmra.mxu0 %v2062
      %v2157 = vpop.f32.mrf.mxu0
      %v2158 = vadd.f32 %v2037, %v2157
      %v2159 = vpop.f32.mrf.mxu0
      %v2160 = vpop.f32.mrf.mxu0
      %v2161 = vadd.f32 %v2037, %v2160
      %v2162 = vpop.f32.mrf.mxu0
      %2163 = vmatprep.mubr.bf16.mxu0 0
      %2164 = vmatmul.mubr.bf16.gmra.mxu0 %v2065
      %v2165 = vpop.f32.mrf.mxu0
      %v2166 = vadd.f32 %v2037, %v2165
      %v2167 = vpop.f32.mrf.mxu0
      %v2168 = vpop.f32.mrf.mxu0
      %v2169 = vadd.f32 %v2037, %v2168
      %v2170 = vpop.f32.mrf.mxu0
      %2171 = vmatprep.mubr.bf16.mxu0 0
      %2172 = vmatmul.mubr.bf16.gmra.mxu0 %v2068
      %v2173 = vpop.f32.mrf.mxu0
      %v2174 = vadd.f32 %v2037, %v2173
      %v2175 = vpop.f32.mrf.mxu0
      %v2176 = vpop.f32.mrf.mxu0
      %v2177 = vadd.f32 %v2037, %v2176
      %v2178 = vpop.f32.mrf.mxu0
      %2179 = vmatprep.mubr.bf16.mxu0 0
      %2180 = vmatmul.mubr.bf16.gmra.mxu0 %v2071
      %v2181 = vpop.f32.mrf.mxu0
      %v2182 = vadd.f32 %v2037, %v2181
      %v2183 = vpop.f32.mrf.mxu0
      %v2184 = vpop.f32.mrf.mxu0
      %v2185 = vadd.f32 %v2037, %v2184
      %v2186 = vpop.f32.mrf.mxu0
      %2187 = vmatprep.mubr.bf16.mxu0 0
      %2188 = vmatmul.mubr.bf16.gmra.mxu0 %v2074
      %v2189 = vpop.f32.mrf.mxu0
      %v2190 = vadd.f32 %v2037, %v2189
      %v2191 = vpop.f32.mrf.mxu0
      %v2192 = vpop.f32.mrf.mxu0
      %v2193 = vadd.f32 %v2037, %v2192
      %v2194 = vpop.f32.mrf.mxu0
      %2195 = vmatprep.mubr.bf16.mxu0 0
      %2196 = vmatmul.mubr.bf16.gmra.mxu0 %v2077
      %v2197 = vpop.f32.mrf.mxu0
      %v2198 = vadd.f32 %v2037, %v2197
      %v2199 = vpop.f32.mrf.mxu0
      %v2200 = vpop.f32.mrf.mxu0
      %v2201 = vadd.f32 %v2037, %v2200
      %v2202 = vpop.f32.mrf.mxu0
      %2203 = vmatprep.mubr.bf16.mxu0 0
      %2204 = vmatmul.mubr.bf16.gmra.mxu0 %v2080
      %v2205 = vpop.f32.mrf.mxu0
      %v2206 = vadd.f32 %v2037, %v2205
      %v2207 = vpop.f32.mrf.mxu0
      %v2208 = vpop.f32.mrf.mxu0
      %v2209 = vadd.f32 %v2037, %v2208
      %v2210 = vpop.f32.mrf.mxu0
      %2211 = vmatprep.mubr.bf16.mxu0 0
      %2212 = vmatmul.mubr.bf16.gmra.mxu0 %v2083
      %v2213 = vpop.f32.mrf.mxu0
      %v2214 = vadd.f32 %v2037, %v2213
      %v2215 = vpop.f32.mrf.mxu0
      %v2216 = vpop.f32.mrf.mxu0
      %v2217 = vadd.f32 %v2037, %v2216
      %v2218 = vpop.f32.mrf.mxu0
      %2219 = vmatprep.mubr.bf16.mxu0 0
      %2220 = vmatmul.mubr.bf16.gmra.mxu0 %v2086
      %v2221 = vpop.f32.mrf.mxu0
      %v2222 = vadd.f32 %v2037, %v2221
      %v2223 = vpop.f32.mrf.mxu0
      %v2224 = vpop.f32.mrf.mxu0
      %v2225 = vadd.f32 %v2037, %v2224
      %v2226 = vpop.f32.mrf.mxu0
      %2227 = vmatprep.mubr.bf16.mxu0 0
      %2228 = vmatmul.mubr.bf16.gmra.mxu0 %v2089
      %v2229 = vpop.f32.mrf.mxu0
      %v2230 = vadd.f32 %v2037, %v2229
      %v2231 = vpop.f32.mrf.mxu0
      %v2232 = vpop.f32.mrf.mxu0
      %v2233 = vadd.f32 %v2037, %v2232
      %v2234 = vpop.f32.mrf.mxu0
      %2235 = vmatprep.mubr.bf16.mxu0 0
      %2236 = vmatmul.mubr.bf16.gmra.mxu0 %v2092
      %v2237 = vpop.f32.mrf.mxu0
      %v2238 = vadd.f32 %v2037, %v2237
      %v2239 = vpop.f32.mrf.mxu0
      %v2240 = vpop.f32.mrf.mxu0
      %v2241 = vadd.f32 %v2037, %v2240
      %v2242 = vpop.f32.mrf.mxu0
      %2243 = vmatprep.mubr.bf16.mxu0 0
      %2244 = vmatmul.mubr.bf16.gmra.mxu0 %v2095
      %v2245 = vpop.f32.mrf.mxu0
      %v2246 = vadd.f32 %v2037, %v2245
      %v2247 = vpop.f32.mrf.mxu0
      %v2248 = vpop.f32.mrf.mxu0
      %v2249 = vadd.f32 %v2037, %v2248
      %v2250 = vpop.f32.mrf.mxu0
      %2251 = vmatprep.mubr.bf16.mxu0 0
      %2252 = vmatmul.mubr.bf16.gmra.mxu0 %v2098
      %v2253 = vpop.f32.mrf.mxu0
      %v2254 = vadd.f32 %v2037, %v2253
      %v2255 = vpop.f32.mrf.mxu0
      %v2256 = vpop.f32.mrf.mxu0
      %v2257 = vadd.f32 %v2037, %v2256
      %v2258 = vpop.f32.mrf.mxu0
      %2259 = vmatprep.mubr.bf16.mxu0 0
      %2260 = vmatmul.mubr.bf16.gmra.mxu0 %v2101
      %v2261 = vpop.f32.mrf.mxu0
      %v2262 = vadd.f32 %v2037, %v2261
      %v2263 = vpop.f32.mrf.mxu0
      %v2264 = vpop.f32.mrf.mxu0
      %v2265 = vadd.f32 %v2037, %v2264
      %v2266 = vpop.f32.mrf.mxu0
      %2267 = vdwg.mxu0
      %v2268 = vsel %vm259, %v2142, 0.0
      %v2269 = vsel %vm259, %v2145, 0.0
      %v2270 = vadd.f32 %v2268, %v2269
      %v2271 = vsel %vm259, %v2150, 0.0
      %v2272 = vadd.f32 %v2270, %v2271
      %v2273 = vsel %vm259, %v2153, 0.0
      %v2274 = vadd.f32 %v2272, %v2273
      %v2275 = vsel %vm259, %v2158, 0.0
      %v2276 = vadd.f32 %v2274, %v2275
      %v2277 = vsel %vm259, %v2161, 0.0
      %v2278 = vadd.f32 %v2276, %v2277
      %v2279 = vsel %vm259, %v2166, 0.0
      %v2280 = vadd.f32 %v2278, %v2279
      %v2281 = vsel %vm259, %v2169, 0.0
      %v2282 = vadd.f32 %v2280, %v2281
      %v2283 = vsel %vm259, %v2174, 0.0
      %v2284 = vadd.f32 %v2282, %v2283
      %v2285 = vsel %vm259, %v2177, 0.0
      %v2286 = vadd.f32 %v2284, %v2285
      %v2287 = vsel %vm259, %v2182, 0.0
      %v2288 = vadd.f32 %v2286, %v2287
      %v2289 = vsel %vm259, %v2185, 0.0
      %v2290 = vadd.f32 %v2288, %v2289
      %v2291 = vsel %vm259, %v2190, 0.0
      %v2292 = vadd.f32 %v2290, %v2291
      %v2293 = vsel %vm259, %v2193, 0.0
      %v2294 = vadd.f32 %v2292, %v2293
      %v2295 = vsel %vm259, %v2198, 0.0
      %v2296 = vadd.f32 %v2294, %v2295
      %v2297 = vsel %vm259, %v2201, 0.0
      %v2298 = vadd.f32 %v2296, %v2297
      %v2299 = vsel %vm259, %v2206, 0.0
      %v2300 = vadd.f32 %v2298, %v2299
      %v2301 = vsel %vm259, %v2209, 0.0
      %v2302 = vadd.f32 %v2300, %v2301
      %v2303 = vsel %vm259, %v2214, 0.0
      %v2304 = vadd.f32 %v2302, %v2303
      %v2305 = vsel %vm259, %v2217, 0.0
      %v2306 = vadd.f32 %v2304, %v2305
      %v2307 = vsel %vm259, %v2222, 0.0
      %v2308 = vadd.f32 %v2306, %v2307
      %v2309 = vsel %vm259, %v2225, 0.0
      %v2310 = vadd.f32 %v2308, %v2309
      %v2311 = vsel %vm259, %v2230, 0.0
      %v2312 = vadd.f32 %v2310, %v2311
      %v2313 = vsel %vm259, %v2233, 0.0
      %v2314 = vadd.f32 %v2312, %v2313
      %v2315 = vsel %vm259, %v2238, 0.0
      %v2316 = vadd.f32 %v2314, %v2315
      %v2317 = vsel %vm259, %v2241, 0.0
      %v2318 = vadd.f32 %v2316, %v2317
      %v2319 = vsel %vm259, %v2246, 0.0
      %v2320 = vadd.f32 %v2318, %v2319
      %v2321 = vsel %vm259, %v2249, 0.0
      %v2322 = vadd.f32 %v2320, %v2321
      %v2323 = vsel %vm259, %v2254, 0.0
      %v2324 = vadd.f32 %v2322, %v2323
      %v2325 = vsel %vm259, %v2257, 0.0
      %v2326 = vadd.f32 %v2324, %v2325
      %v2327 = vsel %vm259, %v2262, 0.0
      %v2328 = vadd.f32 %v2326, %v2327
      %v2329 = vsel %vm259, %v2265, 0.0
      %v2330 = vadd.f32 %v2328, %v2329
      %v2331 = vrot.slane %v2330, 4
      %v2332 = vadd.f32 %v2330, %v2331
      %v2333 = vrot.slane %v2332, 2
      %v2334 = vadd.f32 %v2332, %v2333
      %v2335 = vrot.slane %v2334, 1
      %v2336 = vadd.f32 %v2334, %v2335
      %v2337 = vmul.f32 %v2336, 0.00390625
      %v2338 = vsub.f32 %v2142, %v2337
      %v2339 = vsub.f32 %v2145, %v2337
      %v2340 = vsub.f32 %v2150, %v2337
      %v2341 = vsub.f32 %v2153, %v2337
      %v2342 = vsub.f32 %v2158, %v2337
      %v2343 = vsub.f32 %v2161, %v2337
      %v2344 = vsub.f32 %v2166, %v2337
      %v2345 = vsub.f32 %v2169, %v2337
      %v2346 = vsub.f32 %v2174, %v2337
      %v2347 = vsub.f32 %v2177, %v2337
      %v2348 = vsub.f32 %v2182, %v2337
      %v2349 = vsub.f32 %v2185, %v2337
      %v2350 = vsub.f32 %v2190, %v2337
      %v2351 = vsub.f32 %v2193, %v2337
      %v2352 = vsub.f32 %v2198, %v2337
      %v2353 = vsub.f32 %v2201, %v2337
      %v2354 = vsub.f32 %v2206, %v2337
      %v2355 = vsub.f32 %v2209, %v2337
      %v2356 = vsub.f32 %v2214, %v2337
      %v2357 = vsub.f32 %v2217, %v2337
      %v2358 = vsub.f32 %v2222, %v2337
      %v2359 = vsub.f32 %v2225, %v2337
      %v2360 = vsub.f32 %v2230, %v2337
      %v2361 = vsub.f32 %v2233, %v2337
      %v2362 = vsub.f32 %v2238, %v2337
      %v2363 = vsub.f32 %v2241, %v2337
      %v2364 = vsub.f32 %v2246, %v2337
      %v2365 = vsub.f32 %v2249, %v2337
      %v2366 = vsub.f32 %v2254, %v2337
      %v2367 = vsub.f32 %v2257, %v2337
      %v2368 = vsub.f32 %v2262, %v2337
      %v2369 = vsub.f32 %v2265, %v2337
      %v2370 = vmul.f32 %v2338, %v2338
      %v2371 = vmul.f32 %v2339, %v2339
      %v2372 = vmul.f32 %v2340, %v2340
      %v2373 = vmul.f32 %v2341, %v2341
      %v2374 = vmul.f32 %v2342, %v2342
      %v2375 = vmul.f32 %v2343, %v2343
      %v2376 = vmul.f32 %v2344, %v2344
      %v2377 = vmul.f32 %v2345, %v2345
      %v2378 = vmul.f32 %v2346, %v2346
      %v2379 = vmul.f32 %v2347, %v2347
      %v2380 = vmul.f32 %v2348, %v2348
      %v2381 = vmul.f32 %v2349, %v2349
      %v2382 = vmul.f32 %v2350, %v2350
      %v2383 = vmul.f32 %v2351, %v2351
      %v2384 = vmul.f32 %v2352, %v2352
      %v2385 = vmul.f32 %v2353, %v2353
      %v2386 = vmul.f32 %v2354, %v2354
      %v2387 = vmul.f32 %v2355, %v2355
      %v2388 = vmul.f32 %v2356, %v2356
      %v2389 = vmul.f32 %v2357, %v2357
      %v2390 = vmul.f32 %v2358, %v2358
      %v2391 = vmul.f32 %v2359, %v2359
      %v2392 = vmul.f32 %v2360, %v2360
      %v2393 = vmul.f32 %v2361, %v2361
      %v2394 = vmul.f32 %v2362, %v2362
      %v2395 = vmul.f32 %v2363, %v2363
      %v2396 = vmul.f32 %v2364, %v2364
      %v2397 = vmul.f32 %v2365, %v2365
      %v2398 = vmul.f32 %v2366, %v2366
      %v2399 = vmul.f32 %v2367, %v2367
      %v2400 = vmul.f32 %v2368, %v2368
      %v2401 = vmul.f32 %v2369, %v2369
      %v2402 = vsel %vm259, %v2370, 0.0
      %v2403 = vsel %vm259, %v2371, 0.0
      %v2404 = vadd.f32 %v2402, %v2403
      %v2405 = vsel %vm259, %v2372, 0.0
      %v2406 = vadd.f32 %v2404, %v2405
      %v2407 = vsel %vm259, %v2373, 0.0
      %v2408 = vadd.f32 %v2406, %v2407
      %v2409 = vsel %vm259, %v2374, 0.0
      %v2410 = vadd.f32 %v2408, %v2409
      %v2411 = vsel %vm259, %v2375, 0.0
      %v2412 = vadd.f32 %v2410, %v2411
      %v2413 = vsel %vm259, %v2376, 0.0
      %v2414 = vadd.f32 %v2412, %v2413
      %v2415 = vsel %vm259, %v2377, 0.0
      %v2416 = vadd.f32 %v2414, %v2415
      %v2417 = vsel %vm259, %v2378, 0.0
      %v2418 = vadd.f32 %v2416, %v2417
      %v2419 = vsel %vm259, %v2379, 0.0
      %v2420 = vadd.f32 %v2418, %v2419
      %v2421 = vsel %vm259, %v2380, 0.0
      %v2422 = vadd.f32 %v2420, %v2421
      %v2423 = vsel %vm259, %v2381, 0.0
      %v2424 = vadd.f32 %v2422, %v2423
      %v2425 = vsel %vm259, %v2382, 0.0
      %v2426 = vadd.f32 %v2424, %v2425
      %v2427 = vsel %vm259, %v2383, 0.0
      %v2428 = vadd.f32 %v2426, %v2427
      %v2429 = vsel %vm259, %v2384, 0.0
      %v2430 = vadd.f32 %v2428, %v2429
      %v2431 = vsel %vm259, %v2385, 0.0
      %v2432 = vadd.f32 %v2430, %v2431
      %v2433 = vsel %vm259, %v2386, 0.0
      %v2434 = vadd.f32 %v2432, %v2433
      %v2435 = vsel %vm259, %v2387, 0.0
      %v2436 = vadd.f32 %v2434, %v2435
      %v2437 = vsel %vm259, %v2388, 0.0
      %v2438 = vadd.f32 %v2436, %v2437
      %v2439 = vsel %vm259, %v2389, 0.0
      %v2440 = vadd.f32 %v2438, %v2439
      %v2441 = vsel %vm259, %v2390, 0.0
      %v2442 = vadd.f32 %v2440, %v2441
      %v2443 = vsel %vm259, %v2391, 0.0
      %v2444 = vadd.f32 %v2442, %v2443
      %v2445 = vsel %vm259, %v2392, 0.0
      %v2446 = vadd.f32 %v2444, %v2445
      %v2447 = vsel %vm259, %v2393, 0.0
      %v2448 = vadd.f32 %v2446, %v2447
      %v2449 = vsel %vm259, %v2394, 0.0
      %v2450 = vadd.f32 %v2448, %v2449
      %v2451 = vsel %vm259, %v2395, 0.0
      %v2452 = vadd.f32 %v2450, %v2451
      %v2453 = vsel %vm259, %v2396, 0.0
      %v2454 = vadd.f32 %v2452, %v2453
      %v2455 = vsel %vm259, %v2397, 0.0
      %v2456 = vadd.f32 %v2454, %v2455
      %v2457 = vsel %vm259, %v2398, 0.0
      %v2458 = vadd.f32 %v2456, %v2457
      %v2459 = vsel %vm259, %v2399, 0.0
      %v2460 = vadd.f32 %v2458, %v2459
      %v2461 = vsel %vm259, %v2400, 0.0
      %v2462 = vadd.f32 %v2460, %v2461
      %v2463 = vsel %vm259, %v2401, 0.0
      %v2464 = vadd.f32 %v2462, %v2463
      %v2465 = vrot.slane %v2464, 4
      %v2466 = vadd.f32 %v2464, %v2465
      %v2467 = vrot.slane %v2466, 2
      %v2468 = vadd.f32 %v2466, %v2467
      %v2469 = vrot.slane %v2468, 1
      %v2470 = vadd.f32 %v2468, %v2469
      %v2471 = vmul.f32 %v2470, 0.00390625
      %v2472 = vadd.f32 %v2471, 1e-05
      %v2473 = vrsqrt.pop %v2472
      %v2474 = vmul.f32 %v2338, %v2473
      %v2475 = vmul.f32 %v2339, %v2473
      %v2476 = vmul.f32 %v2340, %v2473
      %v2477 = vmul.f32 %v2341, %v2473
      %v2478 = vmul.f32 %v2342, %v2473
      %v2479 = vmul.f32 %v2343, %v2473
      %v2480 = vmul.f32 %v2344, %v2473
      %v2481 = vmul.f32 %v2345, %v2473
      %v2482 = vmul.f32 %v2346, %v2473
      %v2483 = vmul.f32 %v2347, %v2473
      %v2484 = vmul.f32 %v2348, %v2473
      %v2485 = vmul.f32 %v2349, %v2473
      %v2486 = vmul.f32 %v2350, %v2473
      %v2487 = vmul.f32 %v2351, %v2473
      %v2488 = vmul.f32 %v2352, %v2473
      %v2489 = vmul.f32 %v2353, %v2473
      %v2490 = vmul.f32 %v2354, %v2473
      %v2491 = vmul.f32 %v2355, %v2473
      %v2492 = vmul.f32 %v2356, %v2473
      %v2493 = vmul.f32 %v2357, %v2473
      %v2494 = vmul.f32 %v2358, %v2473
      %v2495 = vmul.f32 %v2359, %v2473
      %v2496 = vmul.f32 %v2360, %v2473
      %v2497 = vmul.f32 %v2361, %v2473
      %v2498 = vmul.f32 %v2362, %v2473
      %v2499 = vmul.f32 %v2363, %v2473
      %v2500 = vmul.f32 %v2364, %v2473
      %v2501 = vmul.f32 %v2365, %v2473
      %v2502 = vmul.f32 %v2366, %v2473
      %v2503 = vmul.f32 %v2367, %v2473
      %v2504 = vmul.f32 %v2368, %v2473
      %v2505 = vmul.f32 %v2369, %v2473
      %v2506 = vmax.f32 %v2474, 0.0
      %v2507 = vmax.f32 %v2475, 0.0
      %v2508 = vmax.f32 %v2476, 0.0
      %v2509 = vmax.f32 %v2477, 0.0
      %v2510 = vmax.f32 %v2478, 0.0
      %v2511 = vmax.f32 %v2479, 0.0
      %v2512 = vmax.f32 %v2480, 0.0
      %v2513 = vmax.f32 %v2481, 0.0
      %v2514 = vmax.f32 %v2482, 0.0
      %v2515 = vmax.f32 %v2483, 0.0
      %v2516 = vmax.f32 %v2484, 0.0
      %v2517 = vmax.f32 %v2485, 0.0
      %v2518 = vmax.f32 %v2486, 0.0
      %v2519 = vmax.f32 %v2487, 0.0
      %v2520 = vmax.f32 %v2488, 0.0
      %v2521 = vmax.f32 %v2489, 0.0
      %v2522 = vmax.f32 %v2490, 0.0
      %v2523 = vmax.f32 %v2491, 0.0
      %v2524 = vmax.f32 %v2492, 0.0
      %v2525 = vmax.f32 %v2493, 0.0
      %v2526 = vmax.f32 %v2494, 0.0
      %v2527 = vmax.f32 %v2495, 0.0
      %v2528 = vmax.f32 %v2496, 0.0
      %v2529 = vmax.f32 %v2497, 0.0
      %v2530 = vmax.f32 %v2498, 0.0
      %v2531 = vmax.f32 %v2499, 0.0
      %v2532 = vmax.f32 %v2500, 0.0
      %v2533 = vmax.f32 %v2501, 0.0
      %v2534 = vmax.f32 %v2502, 0.0
      %v2535 = vmax.f32 %v2503, 0.0
      %v2536 = vmax.f32 %v2504, 0.0
      %v2537 = vmax.f32 %v2505, 0.0
      %2538 = vst.msk [vmem:[%s258 + $0x1] sm:$0xff] %vm259, %v2506
      %2539 = vst.msk [vmem:[%s258 + $0x9] sm:$0xff] %vm259, %v2507
      %2540 = vst.msk [vmem:[%s258 + $0x19] sm:$0xff] %vm259, %v2508
      %2541 = vst.msk [vmem:[%s258 + $0x21] sm:$0xff] %vm259, %v2509
      %2542 = vst.msk [vmem:[%s258 + $0x31] sm:$0xff] %vm259, %v2510
      %2543 = vst.msk [vmem:[%s258 + $0x39] sm:$0xff] %vm259, %v2511
      %2544 = vst.msk [vmem:[%s258 + $0x49] sm:$0xff] %vm259, %v2512
      %2545 = vst.msk [vmem:[%s258 + $0x51] sm:$0xff] %vm259, %v2513
      %2546 = vst.msk [vmem:[%s258 + $0x61] sm:$0xff] %vm259, %v2514
      %2547 = vst.msk [vmem:[%s258 + $0x69] sm:$0xff] %vm259, %v2515
      %2548 = vst.msk [vmem:[%s258 + $0x79] sm:$0xff] %vm259, %v2516
      %2549 = vst.msk [vmem:[%s258 + $0x81] sm:$0xff] %vm259, %v2517
      %2550 = vst.msk [vmem:[%s258 + $0x91] sm:$0xff] %vm259, %v2518
      %2551 = vst.msk [vmem:[%s258 + $0x99] sm:$0xff] %vm259, %v2519
      %2552 = vst.msk [vmem:[%s258 + $0xa9] sm:$0xff] %vm259, %v2520
      %2553 = vst.msk [vmem:[%s258 + $0xb1] sm:$0xff] %vm259, %v2521
      %2554 = vst.msk [vmem:[%s258 + $0xc1] sm:$0xff] %vm259, %v2522
      %2555 = vst.msk [vmem:[%s258 + $0xc9] sm:$0xff] %vm259, %v2523
      %2556 = vst.msk [vmem:[%s258 + $0xd9] sm:$0xff] %vm259, %v2524
      %2557 = vst.msk [vmem:[%s258 + $0xe1] sm:$0xff] %vm259, %v2525
      %2558 = vst.msk [vmem:[%s258 + $0xf1] sm:$0xff] %vm259, %v2526
      %2559 = vst.msk [vmem:[%s258 + $0xf9] sm:$0xff] %vm259, %v2527
      %2560 = vst.msk [vmem:[%s258 + $0x109] sm:$0xff] %vm259, %v2528
      %2561 = vst.msk [vmem:[%s258 + $0x111] sm:$0xff] %vm259, %v2529
      %2562 = vst.msk [vmem:[%s258 + $0x121] sm:$0xff] %vm259, %v2530
      %2563 = vst.msk [vmem:[%s258 + $0x129] sm:$0xff] %vm259, %v2531
      %2564 = vst.msk [vmem:[%s258 + $0x139] sm:$0xff] %vm259, %v2532
      %2565 = vst.msk [vmem:[%s258 + $0x141] sm:$0xff] %vm259, %v2533
      %2566 = vst.msk [vmem:[%s258 + $0x151] sm:$0xff] %vm259, %v2534
      %2567 = vst.msk [vmem:[%s258 + $0x159] sm:$0xff] %vm259, %v2535
      %2568 = vst.msk [vmem:[%s258 + $0x169] sm:$0xff] %vm259, %v2536
      %2569 = vst.msk [vmem:[%s258 + $0x171] sm:$0xff] %vm259, %v2537
      %2570 = vst.msk [vmem:[#allocation2 + $0x1] sm:$0xff] %vm259, %v2508
      %2571 = vst.msk [vmem:[#allocation2 + $0x9] sm:$0xff] %vm259, %v2509
      %2572 = vst.msk [vmem:[%s294 + $0x1] sm:$0xff] %vm259, %v2534
      %2573 = vst.msk [vmem:[%s294 + $0x9] sm:$0xff] %vm259, %v2535
      %v2574 = vld [vmem:[#allocation2 + $0x2] sm:$0x1]
      %v2575 = vld [vmem:[#allocation2 + $0x1a] sm:$0x1]
      %v2576 = vld [vmem:[#allocation2 + $0x32] sm:$0x1]
      %v2577 = vld [vmem:[#allocation2 + $0x4a] sm:$0x1]
      %v2578 = vld [vmem:[#allocation2 + $0x62] sm:$0x1]
      %v2579 = vld [vmem:[#allocation2 + $0x7a] sm:$0x1]
      %v2580 = vld [vmem:[#allocation2 + $0x92] sm:$0x1]
      %v2581 = vld [vmem:[#allocation2 + $0xaa] sm:$0x1]
      %v2582 = vld [vmem:[#allocation2 + $0xc2] sm:$0x1]
      %v2583 = vld [vmem:[#allocation2 + $0xda] sm:$0x1]
      %v2584 = vld [vmem:[#allocation2 + $0xf2] sm:$0x1]
      %v2585 = vld [vmem:[#allocation2 + $0x10a] sm:$0x1]
      %v2586 = vld [vmem:[#allocation2 + $0x122] sm:$0x1]
      %v2587 = vld [vmem:[#allocation2 + $0x13a] sm:$0x1]
      %v2588 = vld [vmem:[#allocation2 + $0x152] sm:$0x1]
      %v2589 = vld [vmem:[#allocation2 + $0x16a] sm:$0x1]
      %v2590 = vld [vmem:[#allocation2 + $0x182] sm:$0x1]
      %v2591 = vld [vmem:[#allocation2 + $0x19a] sm:$0x1]
      %2592 = vst.msk [vmem:[#allocation2] sm:$0x1] %vm315, %v2574
      %2593 = vst.msk [vmem:[#allocation2 + $0x18] sm:$0x1] %vm315, %v2575
      %2594 = vst.msk [vmem:[#allocation2 + $0x30] sm:$0x1] %vm315, %v2576
      %2595 = vst.msk [vmem:[#allocation2 + $0x48] sm:$0x1] %vm315, %v2577
      %2596 = vst.msk [vmem:[#allocation2 + $0x60] sm:$0x1] %vm315, %v2578
      %2597 = vst.msk [vmem:[#allocation2 + $0x78] sm:$0x1] %vm315, %v2579
      %2598 = vst.msk [vmem:[#allocation2 + $0x90] sm:$0x1] %vm315, %v2580
      %2599 = vst.msk [vmem:[#allocation2 + $0xa8] sm:$0x1] %vm315, %v2581
      %2600 = vst.msk [vmem:[#allocation2 + $0xc0] sm:$0x1] %vm315, %v2582
      %2601 = vst.msk [vmem:[#allocation2 + $0xd8] sm:$0x1] %vm315, %v2583
      %2602 = vst.msk [vmem:[#allocation2 + $0xf0] sm:$0x1] %vm315, %v2584
      %2603 = vst.msk [vmem:[#allocation2 + $0x108] sm:$0x1] %vm315, %v2585
      %2604 = vst.msk [vmem:[#allocation2 + $0x120] sm:$0x1] %vm315, %v2586
      %2605 = vst.msk [vmem:[#allocation2 + $0x138] sm:$0x1] %vm315, %v2587
      %2606 = vst.msk [vmem:[#allocation2 + $0x150] sm:$0x1] %vm315, %v2588
      %2607 = vst.msk [vmem:[#allocation2 + $0x168] sm:$0x1] %vm315, %v2589
      %2608 = vst.msk [vmem:[#allocation2 + $0x180] sm:$0x1] %vm315, %v2590
      %2609 = vst.msk [vmem:[#allocation2 + $0x198] sm:$0x1] %vm315, %v2591
      %v2610 = vld [vmem:[#allocation2 + $0xf] sm:$0x1]
      %v2611 = vld [vmem:[#allocation2 + $0x27] sm:$0x1]
      %v2612 = vld [vmem:[#allocation2 + $0x3f] sm:$0x1]
      %v2613 = vld [vmem:[#allocation2 + $0x57] sm:$0x1]
      %v2614 = vld [vmem:[#allocation2 + $0x6f] sm:$0x1]
      %v2615 = vld [vmem:[#allocation2 + $0x87] sm:$0x1]
      %v2616 = vld [vmem:[#allocation2 + $0x9f] sm:$0x1]
      %v2617 = vld [vmem:[#allocation2 + $0xb7] sm:$0x1]
      %v2618 = vld [vmem:[#allocation2 + $0xcf] sm:$0x1]
      %v2619 = vld [vmem:[#allocation2 + $0xe7] sm:$0x1]
      %v2620 = vld [vmem:[#allocation2 + $0xff] sm:$0x1]
      %v2621 = vld [vmem:[#allocation2 + $0x117] sm:$0x1]
      %v2622 = vld [vmem:[#allocation2 + $0x12f] sm:$0x1]
      %v2623 = vld [vmem:[#allocation2 + $0x147] sm:$0x1]
      %v2624 = vld [vmem:[#allocation2 + $0x15f] sm:$0x1]
      %v2625 = vld [vmem:[#allocation2 + $0x177] sm:$0x1]
      %v2626 = vld [vmem:[#allocation2 + $0x18f] sm:$0x1]
      %v2627 = vld [vmem:[#allocation2 + $0x1a7] sm:$0x1]
      %2628 = vst.msk [vmem:[#allocation2 + $0x11] sm:$0x1] %vm315, %v2610
      %2629 = vst.msk [vmem:[#allocation2 + $0x29] sm:$0x1] %vm315, %v2611
      %2630 = vst.msk [vmem:[#allocation2 + $0x41] sm:$0x1] %vm315, %v2612
      %2631 = vst.msk [vmem:[#allocation2 + $0x59] sm:$0x1] %vm315, %v2613
      %2632 = vst.msk [vmem:[#allocation2 + $0x71] sm:$0x1] %vm315, %v2614
      %2633 = vst.msk [vmem:[#allocation2 + $0x89] sm:$0x1] %vm315, %v2615
      %2634 = vst.msk [vmem:[#allocation2 + $0xa1] sm:$0x1] %vm315, %v2616
      %2635 = vst.msk [vmem:[#allocation2 + $0xb9] sm:$0x1] %vm315, %v2617
      %2636 = vst.msk [vmem:[#allocation2 + $0xd1] sm:$0x1] %vm315, %v2618
      %2637 = vst.msk [vmem:[#allocation2 + $0xe9] sm:$0x1] %vm315, %v2619
      %2638 = vst.msk [vmem:[#allocation2 + $0x101] sm:$0x1] %vm315, %v2620
      %2639 = vst.msk [vmem:[#allocation2 + $0x119] sm:$0x1] %vm315, %v2621
      %2640 = vst.msk [vmem:[#allocation2 + $0x131] sm:$0x1] %vm315, %v2622
      %2641 = vst.msk [vmem:[#allocation2 + $0x149] sm:$0x1] %vm315, %v2623
      %2642 = vst.msk [vmem:[#allocation2 + $0x161] sm:$0x1] %vm315, %v2624
      %2643 = vst.msk [vmem:[#allocation2 + $0x179] sm:$0x1] %vm315, %v2625
      %2644 = vst.msk [vmem:[#allocation2 + $0x191] sm:$0x1] %vm315, %v2626
      %2645 = vst.msk [vmem:[#allocation2 + $0x1a9] sm:$0x1] %vm315, %v2627
      %v2646 = vld [vmem:[#allocation2] sm:$0xff]
      %v2647 = vld [vmem:[#allocation2 + $0x8] sm:$0xff]
      %v2648 = vld [vmem:[#allocation2 + $0x18] sm:$0xff]
      %v2649 = vld [vmem:[#allocation2 + $0x20] sm:$0xff]
      %v2650 = vld [vmem:[#allocation2 + $0x30] sm:$0xff]
      %v2651 = vld [vmem:[#allocation2 + $0x38] sm:$0xff]
      %v2652 = vld [vmem:[#allocation2 + $0x48] sm:$0xff]
      %v2653 = vld [vmem:[#allocation2 + $0x50] sm:$0xff]
      %v2654 = vld [vmem:[#allocation2 + $0x60] sm:$0xff]
      %v2655 = vld [vmem:[#allocation2 + $0x68] sm:$0xff]
      %v2656 = vld [vmem:[#allocation2 + $0x78] sm:$0xff]
      %v2657 = vld [vmem:[#allocation2 + $0x80] sm:$0xff]
      %v2658 = vld [vmem:[#allocation2 + $0x90] sm:$0xff]
      %v2659 = vld [vmem:[#allocation2 + $0x98] sm:$0xff]
      %v2660 = vld [vmem:[#allocation2 + $0xa8] sm:$0xff]
      %v2661 = vld [vmem:[#allocation2 + $0xb0] sm:$0xff]
      %v2662 = vld [vmem:[#allocation2 + $0xc0] sm:$0xff]
      %v2663 = vld [vmem:[#allocation2 + $0xc8] sm:$0xff]
      %v2664 = vld [vmem:[#allocation2 + $0xd8] sm:$0xff]
      %v2665 = vld [vmem:[#allocation2 + $0xe0] sm:$0xff]
      %v2666 = vld [vmem:[#allocation2 + $0xf0] sm:$0xff]
      %v2667 = vld [vmem:[#allocation2 + $0xf8] sm:$0xff]
      %v2668 = vld [vmem:[#allocation2 + $0x108] sm:$0xff]
      %v2669 = vld [vmem:[#allocation2 + $0x110] sm:$0xff]
      %v2670 = vld [vmem:[#allocation2 + $0x120] sm:$0xff]
      %v2671 = vld [vmem:[#allocation2 + $0x128] sm:$0xff]
      %v2672 = vld [vmem:[#allocation2 + $0x138] sm:$0xff]
      %v2673 = vld [vmem:[#allocation2 + $0x140] sm:$0xff]
      %v2674 = vld [vmem:[#allocation2 + $0x150] sm:$0xff]
      %v2675 = vld [vmem:[#allocation2 + $0x158] sm:$0xff]
      %v2676 = vld [vmem:[#allocation2 + $0x168] sm:$0xff]
      %v2677 = vld [vmem:[#allocation2 + $0x170] sm:$0xff]
      %2678 = vst.msk [vmem:[#allocation3] sm:$0xff] %vm259, %v2646
      %2679 = vst.msk [vmem:[#allocation3 + $0x8] sm:$0xff] %vm259, %v2647
      %2680 = vst.msk [vmem:[#allocation3 + $0x10] sm:$0xff] %vm259, %v2648
      %2681 = vst.msk [vmem:[#allocation3 + $0x18] sm:$0xff] %vm259, %v2649
      %2682 = vst.msk [vmem:[#allocation3 + $0x20] sm:$0xff] %vm259, %v2650
      %2683 = vst.msk [vmem:[#allocation3 + $0x28] sm:$0xff] %vm259, %v2651
      %2684 = vst.msk [vmem:[#allocation3 + $0x30] sm:$0xff] %vm259, %v2652
      %2685 = vst.msk [vmem:[#allocation3 + $0x38] sm:$0xff] %vm259, %v2653
      %2686 = vst.msk [vmem:[#allocation3 + $0x40] sm:$0xff] %vm259, %v2654
      %2687 = vst.msk [vmem:[#allocation3 + $0x48] sm:$0xff] %vm259, %v2655
      %2688 = vst.msk [vmem:[#allocation3 + $0x50] sm:$0xff] %vm259, %v2656
      %2689 = vst.msk [vmem:[#allocation3 + $0x58] sm:$0xff] %vm259, %v2657
      %2690 = vst.msk [vmem:[#allocation3 + $0x60] sm:$0xff] %vm259, %v2658
      %2691 = vst.msk [vmem:[#allocation3 + $0x68] sm:$0xff] %vm259, %v2659
      %2692 = vst.msk [vmem:[#allocation3 + $0x70] sm:$0xff] %vm259, %v2660
      %2693 = vst.msk [vmem:[#allocation3 + $0x78] sm:$0xff] %vm259, %v2661
      %2694 = vst.msk [vmem:[#allocation3 + $0x80] sm:$0xff] %vm259, %v2662
      %2695 = vst.msk [vmem:[#allocation3 + $0x88] sm:$0xff] %vm259, %v2663
      %2696 = vst.msk [vmem:[#allocation3 + $0x90] sm:$0xff] %vm259, %v2664
      %2697 = vst.msk [vmem:[#allocation3 + $0x98] sm:$0xff] %vm259, %v2665
      %2698 = vst.msk [vmem:[#allocation3 + $0xa0] sm:$0xff] %vm259, %v2666
      %2699 = vst.msk [vmem:[#allocation3 + $0xa8] sm:$0xff] %vm259, %v2667
      %2700 = vst.msk [vmem:[#allocation3 + $0xb0] sm:$0xff] %vm259, %v2668
      %2701 = vst.msk [vmem:[#allocation3 + $0xb8] sm:$0xff] %vm259, %v2669
      %2702 = vst.msk [vmem:[#allocation3 + $0xc0] sm:$0xff] %vm259, %v2670
      %2703 = vst.msk [vmem:[#allocation3 + $0xc8] sm:$0xff] %vm259, %v2671
      %2704 = vst.msk [vmem:[#allocation3 + $0xd0] sm:$0xff] %vm259, %v2672
      %2705 = vst.msk [vmem:[#allocation3 + $0xd8] sm:$0xff] %vm259, %v2673
      %2706 = vst.msk [vmem:[#allocation3 + $0xe0] sm:$0xff] %vm259, %v2674
      %2707 = vst.msk [vmem:[#allocation3 + $0xe8] sm:$0xff] %vm259, %v2675
      %2708 = vst.msk [vmem:[#allocation3 + $0xf0] sm:$0xff] %vm259, %v2676
      %2709 = vst.msk [vmem:[#allocation3 + $0xf8] sm:$0xff] %vm259, %v2677
      %v2710 = vld [vmem:[#allocation2 + $0x1] sm:$0xff]
      %v2711 = vld [vmem:[#allocation2 + $0x9] sm:$0xff]
      %v2712 = vld [vmem:[#allocation2 + $0x19] sm:$0xff]
      %v2713 = vld [vmem:[#allocation2 + $0x21] sm:$0xff]
      %v2714 = vld [vmem:[#allocation2 + $0x31] sm:$0xff]
      %v2715 = vld [vmem:[#allocation2 + $0x39] sm:$0xff]
      %v2716 = vld [vmem:[#allocation2 + $0x49] sm:$0xff]
      %v2717 = vld [vmem:[#allocation2 + $0x51] sm:$0xff]
      %v2718 = vld [vmem:[#allocation2 + $0x61] sm:$0xff]
      %v2719 = vld [vmem:[#allocation2 + $0x69] sm:$0xff]
      %v2720 = vld [vmem:[#allocation2 + $0x79] sm:$0xff]
      %v2721 = vld [vmem:[#allocation2 + $0x81] sm:$0xff]
      %v2722 = vld [vmem:[#allocation2 + $0x91] sm:$0xff]
      %v2723 = vld [vmem:[#allocation2 + $0x99] sm:$0xff]
      %v2724 = vld [vmem:[#allocation2 + $0xa9] sm:$0xff]
      %v2725 = vld [vmem:[#allocation2 + $0xb1] sm:$0xff]
      %v2726 = vld [vmem:[#allocation2 + $0xc1] sm:$0xff]
      %v2727 = vld [vmem:[#allocation2 + $0xc9] sm:$0xff]
      %v2728 = vld [vmem:[#allocation2 + $0xd9] sm:$0xff]
      %v2729 = vld [vmem:[#allocation2 + $0xe1] sm:$0xff]
      %v2730 = vld [vmem:[#allocation2 + $0xf1] sm:$0xff]
      %v2731 = vld [vmem:[#allocation2 + $0xf9] sm:$0xff]
      %v2732 = vld [vmem:[#allocation2 + $0x109] sm:$0xff]
      %v2733 = vld [vmem:[#allocation2 + $0x111] sm:$0xff]
      %v2734 = vld [vmem:[#allocation2 + $0x121] sm:$0xff]
      %v2735 = vld [vmem:[#allocation2 + $0x129] sm:$0xff]
      %v2736 = vld [vmem:[#allocation2 + $0x139] sm:$0xff]
      %v2737 = vld [vmem:[#allocation2 + $0x141] sm:$0xff]
      %v2738 = vld [vmem:[#allocation2 + $0x151] sm:$0xff]
      %v2739 = vld [vmem:[#allocation2 + $0x159] sm:$0xff]
      %v2740 = vld [vmem:[#allocation2 + $0x169] sm:$0xff]
      %v2741 = vld [vmem:[#allocation2 + $0x171] sm:$0xff]
      %2774 = vrot.lane.b32.xlu0 %v2710, 4
      %v2775 = vpop.permute.xlu0 %2774
      %2776 = vrot.lane.b32.xlu0 %v2711, 4
      %v2777 = vpop.permute.xlu0 %2776
      %2778 = vrot.lane.b32.xlu0 %v2712, 4
      %v2779 = vpop.permute.xlu0 %2778
      %2780 = vrot.lane.b32.xlu0 %v2713, 4
      %v2781 = vpop.permute.xlu0 %2780
      %2782 = vrot.lane.b32.xlu0 %v2714, 4
      %v2783 = vpop.permute.xlu0 %2782
      %2784 = vrot.lane.b32.xlu0 %v2715, 4
      %v2785 = vpop.permute.xlu0 %2784
      %2786 = vrot.lane.b32.xlu0 %v2716, 4
      %v2787 = vpop.permute.xlu0 %2786
      %2788 = vrot.lane.b32.xlu0 %v2717, 4
      %v2789 = vpop.permute.xlu0 %2788
      %2790 = vrot.lane.b32.xlu0 %v2718, 4
      %v2791 = vpop.permute.xlu0 %2790
      %2792 = vrot.lane.b32.xlu0 %v2719, 4
      %v2793 = vpop.permute.xlu0 %2792
      %2794 = vrot.lane.b32.xlu0 %v2720, 4
      %v2795 = vpop.permute.xlu0 %2794
      %2796 = vrot.lane.b32.xlu0 %v2721, 4
      %v2797 = vpop.permute.xlu0 %2796
      %2798 = vrot.lane.b32.xlu0 %v2722, 4
      %v2799 = vpop.permute.xlu0 %2798
      %2800 = vrot.lane.b32.xlu0 %v2723, 4
      %v2801 = vpop.permute.xlu0 %2800
      %2802 = vrot.lane.b32.xlu0 %v2724, 4
      %v2803 = vpop.permute.xlu0 %2802
      %2804 = vrot.lane.b32.xlu0 %v2725, 4
      %v2805 = vpop.permute.xlu0 %2804
      %2806 = vrot.lane.b32.xlu0 %v2726, 4
      %v2807 = vpop.permute.xlu0 %2806
      %2808 = vrot.lane.b32.xlu0 %v2727, 4
      %v2809 = vpop.permute.xlu0 %2808
      %2810 = vrot.lane.b32.xlu0 %v2728, 4
      %v2811 = vpop.permute.xlu0 %2810
      %2812 = vrot.lane.b32.xlu0 %v2729, 4
      %v2813 = vpop.permute.xlu0 %2812
      %2814 = vrot.lane.b32.xlu0 %v2730, 4
      %v2815 = vpop.permute.xlu0 %2814
      %2816 = vrot.lane.b32.xlu0 %v2731, 4
      %v2817 = vpop.permute.xlu0 %2816
      %2818 = vrot.lane.b32.xlu0 %v2732, 4
      %v2819 = vpop.permute.xlu0 %2818
      %2820 = vrot.lane.b32.xlu0 %v2733, 4
      %v2821 = vpop.permute.xlu0 %2820
      %2822 = vrot.lane.b32.xlu0 %v2734, 4
      %v2823 = vpop.permute.xlu0 %2822
      %2824 = vrot.lane.b32.xlu0 %v2735, 4
      %v2825 = vpop.permute.xlu0 %2824
      %2826 = vrot.lane.b32.xlu0 %v2736, 4
      %v2827 = vpop.permute.xlu0 %2826
      %2828 = vrot.lane.b32.xlu0 %v2737, 4
      %v2829 = vpop.permute.xlu0 %2828
      %2830 = vrot.lane.b32.xlu0 %v2738, 4
      %v2831 = vpop.permute.xlu0 %2830
      %2832 = vrot.lane.b32.xlu0 %v2739, 4
      %v2833 = vpop.permute.xlu0 %2832
      %2834 = vrot.lane.b32.xlu0 %v2740, 4
      %v2835 = vpop.permute.xlu0 %2834
      %2836 = vrot.lane.b32.xlu0 %v2741, 4
      %v2837 = vpop.permute.xlu0 %2836
      %2870 = vst.msk [vmem:[#allocation3] sm:$0xff] %vm594, %v2775
      %2871 = vst.msk [vmem:[#allocation3 + $0x8] sm:$0xff] %vm594, %v2777
      %2872 = vst.msk [vmem:[#allocation3 + $0x10] sm:$0xff] %vm594, %v2779
      %2873 = vst.msk [vmem:[#allocation3 + $0x18] sm:$0xff] %vm594, %v2781
      %2874 = vst.msk [vmem:[#allocation3 + $0x20] sm:$0xff] %vm594, %v2783
      %2875 = vst.msk [vmem:[#allocation3 + $0x28] sm:$0xff] %vm594, %v2785
      %2876 = vst.msk [vmem:[#allocation3 + $0x30] sm:$0xff] %vm594, %v2787
      %2877 = vst.msk [vmem:[#allocation3 + $0x38] sm:$0xff] %vm594, %v2789
      %2878 = vst.msk [vmem:[#allocation3 + $0x40] sm:$0xff] %vm594, %v2791
      %2879 = vst.msk [vmem:[#allocation3 + $0x48] sm:$0xff] %vm594, %v2793
      %2880 = vst.msk [vmem:[#allocation3 + $0x50] sm:$0xff] %vm594, %v2795
      %2881 = vst.msk [vmem:[#allocation3 + $0x58] sm:$0xff] %vm594, %v2797
      %2882 = vst.msk [vmem:[#allocation3 + $0x60] sm:$0xff] %vm594, %v2799
      %2883 = vst.msk [vmem:[#allocation3 + $0x68] sm:$0xff] %vm594, %v2801
      %2884 = vst.msk [vmem:[#allocation3 + $0x70] sm:$0xff] %vm594, %v2803
      %2885 = vst.msk [vmem:[#allocation3 + $0x78] sm:$0xff] %vm594, %v2805
      %2886 = vst.msk [vmem:[#allocation3 + $0x80] sm:$0xff] %vm594, %v2807
      %2887 = vst.msk [vmem:[#allocation3 + $0x88] sm:$0xff] %vm594, %v2809
      %2888 = vst.msk [vmem:[#allocation3 + $0x90] sm:$0xff] %vm594, %v2811
      %2889 = vst.msk [vmem:[#allocation3 + $0x98] sm:$0xff] %vm594, %v2813
      %2890 = vst.msk [vmem:[#allocation3 + $0xa0] sm:$0xff] %vm594, %v2815
      %2891 = vst.msk [vmem:[#allocation3 + $0xa8] sm:$0xff] %vm594, %v2817
      %2892 = vst.msk [vmem:[#allocation3 + $0xb0] sm:$0xff] %vm594, %v2819
      %2893 = vst.msk [vmem:[#allocation3 + $0xb8] sm:$0xff] %vm594, %v2821
      %2894 = vst.msk [vmem:[#allocation3 + $0xc0] sm:$0xff] %vm594, %v2823
      %2895 = vst.msk [vmem:[#allocation3 + $0xc8] sm:$0xff] %vm594, %v2825
      %2896 = vst.msk [vmem:[#allocation3 + $0xd0] sm:$0xff] %vm594, %v2827
      %2897 = vst.msk [vmem:[#allocation3 + $0xd8] sm:$0xff] %vm594, %v2829
      %2898 = vst.msk [vmem:[#allocation3 + $0xe0] sm:$0xff] %vm594, %v2831
      %2899 = vst.msk [vmem:[#allocation3 + $0xe8] sm:$0xff] %vm594, %v2833
      %2900 = vst.msk [vmem:[#allocation3 + $0xf0] sm:$0xff] %vm594, %v2835
      %2901 = vst.msk [vmem:[#allocation3 + $0xf8] sm:$0xff] %vm594, %v2837
      %v2902 = vld [vmem:[#allocation2 + $0x2] sm:$0xff]
      %v2903 = vld [vmem:[#allocation2 + $0xa] sm:$0xff]
      %v2904 = vld [vmem:[#allocation2 + $0x1a] sm:$0xff]
      %v2905 = vld [vmem:[#allocation2 + $0x22] sm:$0xff]
      %v2906 = vld [vmem:[#allocation2 + $0x32] sm:$0xff]
      %v2907 = vld [vmem:[#allocation2 + $0x3a] sm:$0xff]
      %v2908 = vld [vmem:[#allocation2 + $0x4a] sm:$0xff]
      %v2909 = vld [vmem:[#allocation2 + $0x52] sm:$0xff]
      %v2910 = vld [vmem:[#allocation2 + $0x62] sm:$0xff]
      %v2911 = vld [vmem:[#allocation2 + $0x6a] sm:$0xff]
      %v2912 = vld [vmem:[#allocation2 + $0x7a] sm:$0xff]
      %v2913 = vld [vmem:[#allocation2 + $0x82] sm:$0xff]
      %v2914 = vld [vmem:[#allocation2 + $0x92] sm:$0xff]
      %v2915 = vld [vmem:[#allocation2 + $0x9a] sm:$0xff]
      %v2916 = vld [vmem:[#allocation2 + $0xaa] sm:$0xff]
      %v2917 = vld [vmem:[#allocation2 + $0xb2] sm:$0xff]
      %v2918 = vld [vmem:[#allocation2 + $0xc2] sm:$0xff]
      %v2919 = vld [vmem:[#allocation2 + $0xca] sm:$0xff]
      %v2920 = vld [vmem:[#allocation2 + $0xda] sm:$0xff]
      %v2921 = vld [vmem:[#allocation2 + $0xe2] sm:$0xff]
      %v2922 = vld [vmem:[#allocation2 + $0xf2] sm:$0xff]
      %v2923 = vld [vmem:[#allocation2 + $0xfa] sm:$0xff]
      %v2924 = vld [vmem:[#allocation2 + $0x10a] sm:$0xff]
      %v2925 = vld [vmem:[#allocation2 + $0x112] sm:$0xff]
      %v2926 = vld [vmem:[#allocation2 + $0x122] sm:$0xff]
      %v2927 = vld [vmem:[#allocation2 + $0x12a] sm:$0xff]
      %v2928 = vld [vmem:[#allocation2 + $0x13a] sm:$0xff]
      %v2929 = vld [vmem:[#allocation2 + $0x142] sm:$0xff]
      %v2930 = vld [vmem:[#allocation2 + $0x152] sm:$0xff]
      %v2931 = vld [vmem:[#allocation2 + $0x15a] sm:$0xff]
      %v2932 = vld [vmem:[#allocation2 + $0x16a] sm:$0xff]
      %v2933 = vld [vmem:[#allocation2 + $0x172] sm:$0xff]
      %2966 = vrot.lane.b32.xlu0 %v2902, 8
      %v2967 = vpop.permute.xlu0 %2966
      %2968 = vrot.lane.b32.xlu0 %v2903, 8
      %v2969 = vpop.permute.xlu0 %2968
      %2970 = vrot.lane.b32.xlu0 %v2904, 8
      %v2971 = vpop.permute.xlu0 %2970
      %2972 = vrot.lane.b32.xlu0 %v2905, 8
      %v2973 = vpop.permute.xlu0 %2972
      %2974 = vrot.lane.b32.xlu0 %v2906, 8
      %v2975 = vpop.permute.xlu0 %2974
      %2976 = vrot.lane.b32.xlu0 %v2907, 8
      %v2977 = vpop.permute.xlu0 %2976
      %2978 = vrot.lane.b32.xlu0 %v2908, 8
      %v2979 = vpop.permute.xlu0 %2978
      %2980 = vrot.lane.b32.xlu0 %v2909, 8
      %v2981 = vpop.permute.xlu0 %2980
      %2982 = vrot.lane.b32.xlu0 %v2910, 8
      %v2983 = vpop.permute.xlu0 %2982
      %2984 = vrot.lane.b32.xlu0 %v2911, 8
      %v2985 = vpop.permute.xlu0 %2984
      %2986 = vrot.lane.b32.xlu0 %v2912, 8
      %v2987 = vpop.permute.xlu0 %2986
      %2988 = vrot.lane.b32.xlu0 %v2913, 8
      %v2989 = vpop.permute.xlu0 %2988
      %2990 = vrot.lane.b32.xlu0 %v2914, 8
      %v2991 = vpop.permute.xlu0 %2990
      %2992 = vrot.lane.b32.xlu0 %v2915, 8
      %v2993 = vpop.permute.xlu0 %2992
      %2994 = vrot.lane.b32.xlu0 %v2916, 8
      %v2995 = vpop.permute.xlu0 %2994
      %2996 = vrot.lane.b32.xlu0 %v2917, 8
      %v2997 = vpop.permute.xlu0 %2996
      %2998 = vrot.lane.b32.xlu0 %v2918, 8
      %v2999 = vpop.permute.xlu0 %2998
      %3000 = vrot.lane.b32.xlu0 %v2919, 8
      %v3001 = vpop.permute.xlu0 %3000
      %3002 = vrot.lane.b32.xlu0 %v2920, 8
      %v3003 = vpop.permute.xlu0 %3002
      %3004 = vrot.lane.b32.xlu0 %v2921, 8
      %v3005 = vpop.permute.xlu0 %3004
      %3006 = vrot.lane.b32.xlu0 %v2922, 8
      %v3007 = vpop.permute.xlu0 %3006
      %3008 = vrot.lane.b32.xlu0 %v2923, 8
      %v3009 = vpop.permute.xlu0 %3008
      %3010 = vrot.lane.b32.xlu0 %v2924, 8
      %v3011 = vpop.permute.xlu0 %3010
      %3012 = vrot.lane.b32.xlu0 %v2925, 8
      %v3013 = vpop.permute.xlu0 %3012
      %3014 = vrot.lane.b32.xlu0 %v2926, 8
      %v3015 = vpop.permute.xlu0 %3014
      %3016 = vrot.lane.b32.xlu0 %v2927, 8
      %v3017 = vpop.permute.xlu0 %3016
      %3018 = vrot.lane.b32.xlu0 %v2928, 8
      %v3019 = vpop.permute.xlu0 %3018
      %3020 = vrot.lane.b32.xlu0 %v2929, 8
      %v3021 = vpop.permute.xlu0 %3020
      %3022 = vrot.lane.b32.xlu0 %v2930, 8
      %v3023 = vpop.permute.xlu0 %3022
      %3024 = vrot.lane.b32.xlu0 %v2931, 8
      %v3025 = vpop.permute.xlu0 %3024
      %3026 = vrot.lane.b32.xlu0 %v2932, 8
      %v3027 = vpop.permute.xlu0 %3026
      %3028 = vrot.lane.b32.xlu0 %v2933, 8
      %v3029 = vpop.permute.xlu0 %3028
      %3062 = vst.msk [vmem:[#allocation3] sm:$0xff] %vm787, %v2967
      %3063 = vst.msk [vmem:[#allocation3 + $0x8] sm:$0xff] %vm787, %v2969
      %3064 = vst.msk [vmem:[#allocation3 + $0x10] sm:$0xff] %vm787, %v2971
      %3065 = vst.msk [vmem:[#allocation3 + $0x18] sm:$0xff] %vm787, %v2973
      %3066 = vst.msk [vmem:[#allocation3 + $0x20] sm:$0xff] %vm787, %v2975
      %3067 = vst.msk [vmem:[#allocation3 + $0x28] sm:$0xff] %vm787, %v2977
      %3068 = vst.msk [vmem:[#allocation3 + $0x30] sm:$0xff] %vm787, %v2979
      %3069 = vst.msk [vmem:[#allocation3 + $0x38] sm:$0xff] %vm787, %v2981
      %3070 = vst.msk [vmem:[#allocation3 + $0x40] sm:$0xff] %vm787, %v2983
      %3071 = vst.msk [vmem:[#allocation3 + $0x48] sm:$0xff] %vm787, %v2985
      %3072 = vst.msk [vmem:[#allocation3 + $0x50] sm:$0xff] %vm787, %v2987
      %3073 = vst.msk [vmem:[#allocation3 + $0x58] sm:$0xff] %vm787, %v2989
      %3074 = vst.msk [vmem:[#allocation3 + $0x60] sm:$0xff] %vm787, %v2991
      %3075 = vst.msk [vmem:[#allocation3 + $0x68] sm:$0xff] %vm787, %v2993
      %3076 = vst.msk [vmem:[#allocation3 + $0x70] sm:$0xff] %vm787, %v2995
      %3077 = vst.msk [vmem:[#allocation3 + $0x78] sm:$0xff] %vm787, %v2997
      %3078 = vst.msk [vmem:[#allocation3 + $0x80] sm:$0xff] %vm787, %v2999
      %3079 = vst.msk [vmem:[#allocation3 + $0x88] sm:$0xff] %vm787, %v3001
      %3080 = vst.msk [vmem:[#allocation3 + $0x90] sm:$0xff] %vm787, %v3003
      %3081 = vst.msk [vmem:[#allocation3 + $0x98] sm:$0xff] %vm787, %v3005
      %3082 = vst.msk [vmem:[#allocation3 + $0xa0] sm:$0xff] %vm787, %v3007
      %3083 = vst.msk [vmem:[#allocation3 + $0xa8] sm:$0xff] %vm787, %v3009
      %3084 = vst.msk [vmem:[#allocation3 + $0xb0] sm:$0xff] %vm787, %v3011
      %3085 = vst.msk [vmem:[#allocation3 + $0xb8] sm:$0xff] %vm787, %v3013
      %3086 = vst.msk [vmem:[#allocation3 + $0xc0] sm:$0xff] %vm787, %v3015
      %3087 = vst.msk [vmem:[#allocation3 + $0xc8] sm:$0xff] %vm787, %v3017
      %3088 = vst.msk [vmem:[#allocation3 + $0xd0] sm:$0xff] %vm787, %v3019
      %3089 = vst.msk [vmem:[#allocation3 + $0xd8] sm:$0xff] %vm787, %v3021
      %3090 = vst.msk [vmem:[#allocation3 + $0xe0] sm:$0xff] %vm787, %v3023
      %3091 = vst.msk [vmem:[#allocation3 + $0xe8] sm:$0xff] %vm787, %v3025
      %3092 = vst.msk [vmem:[#allocation3 + $0xf0] sm:$0xff] %vm787, %v3027
      %3093 = vst.msk [vmem:[#allocation3 + $0xf8] sm:$0xff] %vm787, %v3029
      %v3094 = vld [vmem:[%s258] sm:$0xff]
      %v3095 = vld [vmem:[%s258 + $0x8] sm:$0xff]
      %v3096 = vld [vmem:[%s258 + $0x18] sm:$0xff]
      %v3097 = vld [vmem:[%s258 + $0x20] sm:$0xff]
      %v3098 = vld [vmem:[%s258 + $0x30] sm:$0xff]
      %v3099 = vld [vmem:[%s258 + $0x38] sm:$0xff]
      %v3100 = vld [vmem:[%s258 + $0x48] sm:$0xff]
      %v3101 = vld [vmem:[%s258 + $0x50] sm:$0xff]
      %v3102 = vld [vmem:[%s258 + $0x60] sm:$0xff]
      %v3103 = vld [vmem:[%s258 + $0x68] sm:$0xff]
      %v3104 = vld [vmem:[%s258 + $0x78] sm:$0xff]
      %v3105 = vld [vmem:[%s258 + $0x80] sm:$0xff]
      %v3106 = vld [vmem:[%s258 + $0x90] sm:$0xff]
      %v3107 = vld [vmem:[%s258 + $0x98] sm:$0xff]
      %v3108 = vld [vmem:[%s258 + $0xa8] sm:$0xff]
      %v3109 = vld [vmem:[%s258 + $0xb0] sm:$0xff]
      %v3110 = vld [vmem:[%s258 + $0xc0] sm:$0xff]
      %v3111 = vld [vmem:[%s258 + $0xc8] sm:$0xff]
      %v3112 = vld [vmem:[%s258 + $0xd8] sm:$0xff]
      %v3113 = vld [vmem:[%s258 + $0xe0] sm:$0xff]
      %v3114 = vld [vmem:[%s258 + $0xf0] sm:$0xff]
      %v3115 = vld [vmem:[%s258 + $0xf8] sm:$0xff]
      %v3116 = vld [vmem:[%s258 + $0x108] sm:$0xff]
      %v3117 = vld [vmem:[%s258 + $0x110] sm:$0xff]
      %v3118 = vld [vmem:[%s258 + $0x120] sm:$0xff]
      %v3119 = vld [vmem:[%s258 + $0x128] sm:$0xff]
      %v3120 = vld [vmem:[%s258 + $0x138] sm:$0xff]
      %v3121 = vld [vmem:[%s258 + $0x140] sm:$0xff]
      %v3122 = vld [vmem:[%s258 + $0x150] sm:$0xff]
      %v3123 = vld [vmem:[%s258 + $0x158] sm:$0xff]
      %v3124 = vld [vmem:[%s258 + $0x168] sm:$0xff]
      %v3125 = vld [vmem:[%s258 + $0x170] sm:$0xff]
      %3158 = vrot.lane.b32.xlu0 %v3094, 12
      %v3159 = vpop.permute.xlu0 %3158
      %3160 = vrot.lane.b32.xlu0 %v3095, 12
      %v3161 = vpop.permute.xlu0 %3160
      %3162 = vrot.lane.b32.xlu0 %v3096, 12
      %v3163 = vpop.permute.xlu0 %3162
      %3164 = vrot.lane.b32.xlu0 %v3097, 12
      %v3165 = vpop.permute.xlu0 %3164
      %3166 = vrot.lane.b32.xlu0 %v3098, 12
      %v3167 = vpop.permute.xlu0 %3166
      %3168 = vrot.lane.b32.xlu0 %v3099, 12
      %v3169 = vpop.permute.xlu0 %3168
      %3170 = vrot.lane.b32.xlu0 %v3100, 12
      %v3171 = vpop.permute.xlu0 %3170
      %3172 = vrot.lane.b32.xlu0 %v3101, 12
      %v3173 = vpop.permute.xlu0 %3172
      %3174 = vrot.lane.b32.xlu0 %v3102, 12
      %v3175 = vpop.permute.xlu0 %3174
      %3176 = vrot.lane.b32.xlu0 %v3103, 12
      %v3177 = vpop.permute.xlu0 %3176
      %3178 = vrot.lane.b32.xlu0 %v3104, 12
      %v3179 = vpop.permute.xlu0 %3178
      %3180 = vrot.lane.b32.xlu0 %v3105, 12
      %v3181 = vpop.permute.xlu0 %3180
      %3182 = vrot.lane.b32.xlu0 %v3106, 12
      %v3183 = vpop.permute.xlu0 %3182
      %3184 = vrot.lane.b32.xlu0 %v3107, 12
      %v3185 = vpop.permute.xlu0 %3184
      %3186 = vrot.lane.b32.xlu0 %v3108, 12
      %v3187 = vpop.permute.xlu0 %3186
      %3188 = vrot.lane.b32.xlu0 %v3109, 12
      %v3189 = vpop.permute.xlu0 %3188
      %3190 = vrot.lane.b32.xlu0 %v3110, 12
      %v3191 = vpop.permute.xlu0 %3190
      %3192 = vrot.lane.b32.xlu0 %v3111, 12
      %v3193 = vpop.permute.xlu0 %3192
      %3194 = vrot.lane.b32.xlu0 %v3112, 12
      %v3195 = vpop.permute.xlu0 %3194
      %3196 = vrot.lane.b32.xlu0 %v3113, 12
      %v3197 = vpop.permute.xlu0 %3196
      %3198 = vrot.lane.b32.xlu0 %v3114, 12
      %v3199 = vpop.permute.xlu0 %3198
      %3200 = vrot.lane.b32.xlu0 %v3115, 12
      %v3201 = vpop.permute.xlu0 %3200
      %3202 = vrot.lane.b32.xlu0 %v3116, 12
      %v3203 = vpop.permute.xlu0 %3202
      %3204 = vrot.lane.b32.xlu0 %v3117, 12
      %v3205 = vpop.permute.xlu0 %3204
      %3206 = vrot.lane.b32.xlu0 %v3118, 12
      %v3207 = vpop.permute.xlu0 %3206
      %3208 = vrot.lane.b32.xlu0 %v3119, 12
      %v3209 = vpop.permute.xlu0 %3208
      %3210 = vrot.lane.b32.xlu0 %v3120, 12
      %v3211 = vpop.permute.xlu0 %3210
      %3212 = vrot.lane.b32.xlu0 %v3121, 12
      %v3213 = vpop.permute.xlu0 %3212
      %3214 = vrot.lane.b32.xlu0 %v3122, 12
      %v3215 = vpop.permute.xlu0 %3214
      %3216 = vrot.lane.b32.xlu0 %v3123, 12
      %v3217 = vpop.permute.xlu0 %3216
      %3218 = vrot.lane.b32.xlu0 %v3124, 12
      %v3219 = vpop.permute.xlu0 %3218
      %3220 = vrot.lane.b32.xlu0 %v3125, 12
      %v3221 = vpop.permute.xlu0 %3220
      %3254 = vst.msk [vmem:[#allocation3] sm:$0xff] %vm980, %v3159
      %3255 = vst.msk [vmem:[#allocation3 + $0x8] sm:$0xff] %vm980, %v3161
      %3256 = vst.msk [vmem:[#allocation3 + $0x10] sm:$0xff] %vm980, %v3163
      %3257 = vst.msk [vmem:[#allocation3 + $0x18] sm:$0xff] %vm980, %v3165
      %3258 = vst.msk [vmem:[#allocation3 + $0x20] sm:$0xff] %vm980, %v3167
      %3259 = vst.msk [vmem:[#allocation3 + $0x28] sm:$0xff] %vm980, %v3169
      %3260 = vst.msk [vmem:[#allocation3 + $0x30] sm:$0xff] %vm980, %v3171
      %3261 = vst.msk [vmem:[#allocation3 + $0x38] sm:$0xff] %vm980, %v3173
      %3262 = vst.msk [vmem:[#allocation3 + $0x40] sm:$0xff] %vm980, %v3175
      %3263 = vst.msk [vmem:[#allocation3 + $0x48] sm:$0xff] %vm980, %v3177
      %3264 = vst.msk [vmem:[#allocation3 + $0x50] sm:$0xff] %vm980, %v3179
      %3265 = vst.msk [vmem:[#allocation3 + $0x58] sm:$0xff] %vm980, %v3181
      %3266 = vst.msk [vmem:[#allocation3 + $0x60] sm:$0xff] %vm980, %v3183
      %3267 = vst.msk [vmem:[#allocation3 + $0x68] sm:$0xff] %vm980, %v3185
      %3268 = vst.msk [vmem:[#allocation3 + $0x70] sm:$0xff] %vm980, %v3187
      %3269 = vst.msk [vmem:[#allocation3 + $0x78] sm:$0xff] %vm980, %v3189
      %3270 = vst.msk [vmem:[#allocation3 + $0x80] sm:$0xff] %vm980, %v3191
      %3271 = vst.msk [vmem:[#allocation3 + $0x88] sm:$0xff] %vm980, %v3193
      %3272 = vst.msk [vmem:[#allocation3 + $0x90] sm:$0xff] %vm980, %v3195
      %3273 = vst.msk [vmem:[#allocation3 + $0x98] sm:$0xff] %vm980, %v3197
      %3274 = vst.msk [vmem:[#allocation3 + $0xa0] sm:$0xff] %vm980, %v3199
      %3275 = vst.msk [vmem:[#allocation3 + $0xa8] sm:$0xff] %vm980, %v3201
      %3276 = vst.msk [vmem:[#allocation3 + $0xb0] sm:$0xff] %vm980, %v3203
      %3277 = vst.msk [vmem:[#allocation3 + $0xb8] sm:$0xff] %vm980, %v3205
      %3278 = vst.msk [vmem:[#allocation3 + $0xc0] sm:$0xff] %vm980, %v3207
      %3279 = vst.msk [vmem:[#allocation3 + $0xc8] sm:$0xff] %vm980, %v3209
      %3280 = vst.msk [vmem:[#allocation3 + $0xd0] sm:$0xff] %vm980, %v3211
      %3281 = vst.msk [vmem:[#allocation3 + $0xd8] sm:$0xff] %vm980, %v3213
      %3282 = vst.msk [vmem:[#allocation3 + $0xe0] sm:$0xff] %vm980, %v3215
      %3283 = vst.msk [vmem:[#allocation3 + $0xe8] sm:$0xff] %vm980, %v3217
      %3284 = vst.msk [vmem:[#allocation3 + $0xf0] sm:$0xff] %vm980, %v3219
      %3285 = vst.msk [vmem:[#allocation3 + $0xf8] sm:$0xff] %vm980, %v3221
      %v3286 = vld [vmem:[%s258 + $0x1] sm:$0xff]
      %v3287 = vld [vmem:[%s258 + $0x9] sm:$0xff]
      %v3288 = vld [vmem:[%s258 + $0x19] sm:$0xff]
      %v3289 = vld [vmem:[%s258 + $0x21] sm:$0xff]
      %v3290 = vld [vmem:[%s258 + $0x31] sm:$0xff]
      %v3291 = vld [vmem:[%s258 + $0x39] sm:$0xff]
      %v3292 = vld [vmem:[%s258 + $0x49] sm:$0xff]
      %v3293 = vld [vmem:[%s258 + $0x51] sm:$0xff]
      %v3294 = vld [vmem:[%s258 + $0x61] sm:$0xff]
      %v3295 = vld [vmem:[%s258 + $0x69] sm:$0xff]
      %v3296 = vld [vmem:[%s258 + $0x79] sm:$0xff]
      %v3297 = vld [vmem:[%s258 + $0x81] sm:$0xff]
      %v3298 = vld [vmem:[%s258 + $0x91] sm:$0xff]
      %v3299 = vld [vmem:[%s258 + $0x99] sm:$0xff]
      %v3300 = vld [vmem:[%s258 + $0xa9] sm:$0xff]
      %v3301 = vld [vmem:[%s258 + $0xb1] sm:$0xff]
      %v3302 = vld [vmem:[%s258 + $0xc1] sm:$0xff]
      %v3303 = vld [vmem:[%s258 + $0xc9] sm:$0xff]
      %v3304 = vld [vmem:[%s258 + $0xd9] sm:$0xff]
      %v3305 = vld [vmem:[%s258 + $0xe1] sm:$0xff]
      %v3306 = vld [vmem:[%s258 + $0xf1] sm:$0xff]
      %v3307 = vld [vmem:[%s258 + $0xf9] sm:$0xff]
      %v3308 = vld [vmem:[%s258 + $0x109] sm:$0xff]
      %v3309 = vld [vmem:[%s258 + $0x111] sm:$0xff]
      %v3310 = vld [vmem:[%s258 + $0x121] sm:$0xff]
      %v3311 = vld [vmem:[%s258 + $0x129] sm:$0xff]
      %v3312 = vld [vmem:[%s258 + $0x139] sm:$0xff]
      %v3313 = vld [vmem:[%s258 + $0x141] sm:$0xff]
      %v3314 = vld [vmem:[%s258 + $0x151] sm:$0xff]
      %v3315 = vld [vmem:[%s258 + $0x159] sm:$0xff]
      %v3316 = vld [vmem:[%s258 + $0x169] sm:$0xff]
      %v3317 = vld [vmem:[%s258 + $0x171] sm:$0xff]
      %3350 = vrot.lane.b32.xlu0 %v3286, 16
      %v3351 = vpop.permute.xlu0 %3350
      %3352 = vrot.lane.b32.xlu0 %v3287, 16
      %v3353 = vpop.permute.xlu0 %3352
      %3354 = vrot.lane.b32.xlu0 %v3288, 16
      %v3355 = vpop.permute.xlu0 %3354
      %3356 = vrot.lane.b32.xlu0 %v3289, 16
      %v3357 = vpop.permute.xlu0 %3356
      %3358 = vrot.lane.b32.xlu0 %v3290, 16
      %v3359 = vpop.permute.xlu0 %3358
      %3360 = vrot.lane.b32.xlu0 %v3291, 16
      %v3361 = vpop.permute.xlu0 %3360
      %3362 = vrot.lane.b32.xlu0 %v3292, 16
      %v3363 = vpop.permute.xlu0 %3362
      %3364 = vrot.lane.b32.xlu0 %v3293, 16
      %v3365 = vpop.permute.xlu0 %3364
      %3366 = vrot.lane.b32.xlu0 %v3294, 16
      %v3367 = vpop.permute.xlu0 %3366
      %3368 = vrot.lane.b32.xlu0 %v3295, 16
      %v3369 = vpop.permute.xlu0 %3368
      %3370 = vrot.lane.b32.xlu0 %v3296, 16
      %v3371 = vpop.permute.xlu0 %3370
      %3372 = vrot.lane.b32.xlu0 %v3297, 16
      %v3373 = vpop.permute.xlu0 %3372
      %3374 = vrot.lane.b32.xlu0 %v3298, 16
      %v3375 = vpop.permute.xlu0 %3374
      %3376 = vrot.lane.b32.xlu0 %v3299, 16
      %v3377 = vpop.permute.xlu0 %3376
      %3378 = vrot.lane.b32.xlu0 %v3300, 16
      %v3379 = vpop.permute.xlu0 %3378
      %3380 = vrot.lane.b32.xlu0 %v3301, 16
      %v3381 = vpop.permute.xlu0 %3380
      %3382 = vrot.lane.b32.xlu0 %v3302, 16
      %v3383 = vpop.permute.xlu0 %3382
      %3384 = vrot.lane.b32.xlu0 %v3303, 16
      %v3385 = vpop.permute.xlu0 %3384
      %3386 = vrot.lane.b32.xlu0 %v3304, 16
      %v3387 = vpop.permute.xlu0 %3386
      %3388 = vrot.lane.b32.xlu0 %v3305, 16
      %v3389 = vpop.permute.xlu0 %3388
      %3390 = vrot.lane.b32.xlu0 %v3306, 16
      %v3391 = vpop.permute.xlu0 %3390
      %3392 = vrot.lane.b32.xlu0 %v3307, 16
      %v3393 = vpop.permute.xlu0 %3392
      %3394 = vrot.lane.b32.xlu0 %v3308, 16
      %v3395 = vpop.permute.xlu0 %3394
      %3396 = vrot.lane.b32.xlu0 %v3309, 16
      %v3397 = vpop.permute.xlu0 %3396
      %3398 = vrot.lane.b32.xlu0 %v3310, 16
      %v3399 = vpop.permute.xlu0 %3398
      %3400 = vrot.lane.b32.xlu0 %v3311, 16
      %v3401 = vpop.permute.xlu0 %3400
      %3402 = vrot.lane.b32.xlu0 %v3312, 16
      %v3403 = vpop.permute.xlu0 %3402
      %3404 = vrot.lane.b32.xlu0 %v3313, 16
      %v3405 = vpop.permute.xlu0 %3404
      %3406 = vrot.lane.b32.xlu0 %v3314, 16
      %v3407 = vpop.permute.xlu0 %3406
      %3408 = vrot.lane.b32.xlu0 %v3315, 16
      %v3409 = vpop.permute.xlu0 %3408
      %3410 = vrot.lane.b32.xlu0 %v3316, 16
      %v3411 = vpop.permute.xlu0 %3410
      %3412 = vrot.lane.b32.xlu0 %v3317, 16
      %v3413 = vpop.permute.xlu0 %3412
      %3446 = vst.msk [vmem:[#allocation3] sm:$0xff] %vm1173, %v3351
      %3447 = vst.msk [vmem:[#allocation3 + $0x8] sm:$0xff] %vm1173, %v3353
      %3448 = vst.msk [vmem:[#allocation3 + $0x10] sm:$0xff] %vm1173, %v3355
      %3449 = vst.msk [vmem:[#allocation3 + $0x18] sm:$0xff] %vm1173, %v3357
      %3450 = vst.msk [vmem:[#allocation3 + $0x20] sm:$0xff] %vm1173, %v3359
      %3451 = vst.msk [vmem:[#allocation3 + $0x28] sm:$0xff] %vm1173, %v3361
      %3452 = vst.msk [vmem:[#allocation3 + $0x30] sm:$0xff] %vm1173, %v3363
      %3453 = vst.msk [vmem:[#allocation3 + $0x38] sm:$0xff] %vm1173, %v3365
      %3454 = vst.msk [vmem:[#allocation3 + $0x40] sm:$0xff] %vm1173, %v3367
      %3455 = vst.msk [vmem:[#allocation3 + $0x48] sm:$0xff] %vm1173, %v3369
      %3456 = vst.msk [vmem:[#allocation3 + $0x50] sm:$0xff] %vm1173, %v3371
      %3457 = vst.msk [vmem:[#allocation3 + $0x58] sm:$0xff] %vm1173, %v3373
      %3458 = vst.msk [vmem:[#allocation3 + $0x60] sm:$0xff] %vm1173, %v3375
      %3459 = vst.msk [vmem:[#allocation3 + $0x68] sm:$0xff] %vm1173, %v3377
      %3460 = vst.msk [vmem:[#allocation3 + $0x70] sm:$0xff] %vm1173, %v3379
      %3461 = vst.msk [vmem:[#allocation3 + $0x78] sm:$0xff] %vm1173, %v3381
      %3462 = vst.msk [vmem:[#allocation3 + $0x80] sm:$0xff] %vm1173, %v3383
      %3463 = vst.msk [vmem:[#allocation3 + $0x88] sm:$0xff] %vm1173, %v3385
      %3464 = vst.msk [vmem:[#allocation3 + $0x90] sm:$0xff] %vm1173, %v3387
      %3465 = vst.msk [vmem:[#allocation3 + $0x98] sm:$0xff] %vm1173, %v3389
      %3466 = vst.msk [vmem:[#allocation3 + $0xa0] sm:$0xff] %vm1173, %v3391
      %3467 = vst.msk [vmem:[#allocation3 + $0xa8] sm:$0xff] %vm1173, %v3393
      %3468 = vst.msk [vmem:[#allocation3 + $0xb0] sm:$0xff] %vm1173, %v3395
      %3469 = vst.msk [vmem:[#allocation3 + $0xb8] sm:$0xff] %vm1173, %v3397
      %3470 = vst.msk [vmem:[#allocation3 + $0xc0] sm:$0xff] %vm1173, %v3399
      %3471 = vst.msk [vmem:[#allocation3 + $0xc8] sm:$0xff] %vm1173, %v3401
      %3472 = vst.msk [vmem:[#allocation3 + $0xd0] sm:$0xff] %vm1173, %v3403
      %3473 = vst.msk [vmem:[#allocation3 + $0xd8] sm:$0xff] %vm1173, %v3405
      %3474 = vst.msk [vmem:[#allocation3 + $0xe0] sm:$0xff] %vm1173, %v3407
      %3475 = vst.msk [vmem:[#allocation3 + $0xe8] sm:$0xff] %vm1173, %v3409
      %3476 = vst.msk [vmem:[#allocation3 + $0xf0] sm:$0xff] %vm1173, %v3411
      %3477 = vst.msk [vmem:[#allocation3 + $0xf8] sm:$0xff] %vm1173, %v3413
      %v3478 = vld [vmem:[%s258 + $0x2] sm:$0xff]
      %v3479 = vld [vmem:[%s258 + $0xa] sm:$0xff]
      %v3480 = vld [vmem:[%s258 + $0x1a] sm:$0xff]
      %v3481 = vld [vmem:[%s258 + $0x22] sm:$0xff]
      %v3482 = vld [vmem:[%s258 + $0x32] sm:$0xff]
      %v3483 = vld [vmem:[%s258 + $0x3a] sm:$0xff]
      %v3484 = vld [vmem:[%s258 + $0x4a] sm:$0xff]
      %v3485 = vld [vmem:[%s258 + $0x52] sm:$0xff]
      %v3486 = vld [vmem:[%s258 + $0x62] sm:$0xff]
      %v3487 = vld [vmem:[%s258 + $0x6a] sm:$0xff]
      %v3488 = vld [vmem:[%s258 + $0x7a] sm:$0xff]
      %v3489 = vld [vmem:[%s258 + $0x82] sm:$0xff]
      %v3490 = vld [vmem:[%s258 + $0x92] sm:$0xff]
      %v3491 = vld [vmem:[%s258 + $0x9a] sm:$0xff]
      %v3492 = vld [vmem:[%s258 + $0xaa] sm:$0xff]
      %v3493 = vld [vmem:[%s258 + $0xb2] sm:$0xff]
      %v3494 = vld [vmem:[%s258 + $0xc2] sm:$0xff]
      %v3495 = vld [vmem:[%s258 + $0xca] sm:$0xff]
      %v3496 = vld [vmem:[%s258 + $0xda] sm:$0xff]
      %v3497 = vld [vmem:[%s258 + $0xe2] sm:$0xff]
      %v3498 = vld [vmem:[%s258 + $0xf2] sm:$0xff]
      %v3499 = vld [vmem:[%s258 + $0xfa] sm:$0xff]
      %v3500 = vld [vmem:[%s258 + $0x10a] sm:$0xff]
      %v3501 = vld [vmem:[%s258 + $0x112] sm:$0xff]
      %v3502 = vld [vmem:[%s258 + $0x122] sm:$0xff]
      %v3503 = vld [vmem:[%s258 + $0x12a] sm:$0xff]
      %v3504 = vld [vmem:[%s258 + $0x13a] sm:$0xff]
      %v3505 = vld [vmem:[%s258 + $0x142] sm:$0xff]
      %v3506 = vld [vmem:[%s258 + $0x152] sm:$0xff]
      %v3507 = vld [vmem:[%s258 + $0x15a] sm:$0xff]
      %v3508 = vld [vmem:[%s258 + $0x16a] sm:$0xff]
      %v3509 = vld [vmem:[%s258 + $0x172] sm:$0xff]
      %3542 = vrot.lane.b32.xlu0 %v3478, 20
      %v3543 = vpop.permute.xlu0 %3542
      %3544 = vrot.lane.b32.xlu0 %v3479, 20
      %v3545 = vpop.permute.xlu0 %3544
      %3546 = vrot.lane.b32.xlu0 %v3480, 20
      %v3547 = vpop.permute.xlu0 %3546
      %3548 = vrot.lane.b32.xlu0 %v3481, 20
      %v3549 = vpop.permute.xlu0 %3548
      %3550 = vrot.lane.b32.xlu0 %v3482, 20
      %v3551 = vpop.permute.xlu0 %3550
      %3552 = vrot.lane.b32.xlu0 %v3483, 20
      %v3553 = vpop.permute.xlu0 %3552
      %3554 = vrot.lane.b32.xlu0 %v3484, 20
      %v3555 = vpop.permute.xlu0 %3554
      %3556 = vrot.lane.b32.xlu0 %v3485, 20
      %v3557 = vpop.permute.xlu0 %3556
      %3558 = vrot.lane.b32.xlu0 %v3486, 20
      %v3559 = vpop.permute.xlu0 %3558
      %3560 = vrot.lane.b32.xlu0 %v3487, 20
      %v3561 = vpop.permute.xlu0 %3560
      %3562 = vrot.lane.b32.xlu0 %v3488, 20
      %v3563 = vpop.permute.xlu0 %3562
      %3564 = vrot.lane.b32.xlu0 %v3489, 20
      %v3565 = vpop.permute.xlu0 %3564
      %3566 = vrot.lane.b32.xlu0 %v3490, 20
      %v3567 = vpop.permute.xlu0 %3566
      %3568 = vrot.lane.b32.xlu0 %v3491, 20
      %v3569 = vpop.permute.xlu0 %3568
      %3570 = vrot.lane.b32.xlu0 %v3492, 20
      %v3571 = vpop.permute.xlu0 %3570
      %3572 = vrot.lane.b32.xlu0 %v3493, 20
      %v3573 = vpop.permute.xlu0 %3572
      %3574 = vrot.lane.b32.xlu0 %v3494, 20
      %v3575 = vpop.permute.xlu0 %3574
      %3576 = vrot.lane.b32.xlu0 %v3495, 20
      %v3577 = vpop.permute.xlu0 %3576
      %3578 = vrot.lane.b32.xlu0 %v3496, 20
      %v3579 = vpop.permute.xlu0 %3578
      %3580 = vrot.lane.b32.xlu0 %v3497, 20
      %v3581 = vpop.permute.xlu0 %3580
      %3582 = vrot.lane.b32.xlu0 %v3498, 20
      %v3583 = vpop.permute.xlu0 %3582
      %3584 = vrot.lane.b32.xlu0 %v3499, 20
      %v3585 = vpop.permute.xlu0 %3584
      %3586 = vrot.lane.b32.xlu0 %v3500, 20
      %v3587 = vpop.permute.xlu0 %3586
      %3588 = vrot.lane.b32.xlu0 %v3501, 20
      %v3589 = vpop.permute.xlu0 %3588
      %3590 = vrot.lane.b32.xlu0 %v3502, 20
      %v3591 = vpop.permute.xlu0 %3590
      %3592 = vrot.lane.b32.xlu0 %v3503, 20
      %v3593 = vpop.permute.xlu0 %3592
      %3594 = vrot.lane.b32.xlu0 %v3504, 20
      %v3595 = vpop.permute.xlu0 %3594
      %3596 = vrot.lane.b32.xlu0 %v3505, 20
      %v3597 = vpop.permute.xlu0 %3596
      %3598 = vrot.lane.b32.xlu0 %v3506, 20
      %v3599 = vpop.permute.xlu0 %3598
      %3600 = vrot.lane.b32.xlu0 %v3507, 20
      %v3601 = vpop.permute.xlu0 %3600
      %3602 = vrot.lane.b32.xlu0 %v3508, 20
      %v3603 = vpop.permute.xlu0 %3602
      %3604 = vrot.lane.b32.xlu0 %v3509, 20
      %v3605 = vpop.permute.xlu0 %3604
      %3638 = vst.msk [vmem:[#allocation3] sm:$0xff] %vm1366, %v3543
      %3639 = vst.msk [vmem:[#allocation3 + $0x8] sm:$0xff] %vm1366, %v3545
      %3640 = vst.msk [vmem:[#allocation3 + $0x10] sm:$0xff] %vm1366, %v3547
      %3641 = vst.msk [vmem:[#allocation3 + $0x18] sm:$0xff] %vm1366, %v3549
      %3642 = vst.msk [vmem:[#allocation3 + $0x20] sm:$0xff] %vm1366, %v3551
      %3643 = vst.msk [vmem:[#allocation3 + $0x28] sm:$0xff] %vm1366, %v3553
      %3644 = vst.msk [vmem:[#allocation3 + $0x30] sm:$0xff] %vm1366, %v3555
      %3645 = vst.msk [vmem:[#allocation3 + $0x38] sm:$0xff] %vm1366, %v3557
      %3646 = vst.msk [vmem:[#allocation3 + $0x40] sm:$0xff] %vm1366, %v3559
      %3647 = vst.msk [vmem:[#allocation3 + $0x48] sm:$0xff] %vm1366, %v3561
      %3648 = vst.msk [vmem:[#allocation3 + $0x50] sm:$0xff] %vm1366, %v3563
      %3649 = vst.msk [vmem:[#allocation3 + $0x58] sm:$0xff] %vm1366, %v3565
      %3650 = vst.msk [vmem:[#allocation3 + $0x60] sm:$0xff] %vm1366, %v3567
      %3651 = vst.msk [vmem:[#allocation3 + $0x68] sm:$0xff] %vm1366, %v3569
      %3652 = vst.msk [vmem:[#allocation3 + $0x70] sm:$0xff] %vm1366, %v3571
      %3653 = vst.msk [vmem:[#allocation3 + $0x78] sm:$0xff] %vm1366, %v3573
      %3654 = vst.msk [vmem:[#allocation3 + $0x80] sm:$0xff] %vm1366, %v3575
      %3655 = vst.msk [vmem:[#allocation3 + $0x88] sm:$0xff] %vm1366, %v3577
      %3656 = vst.msk [vmem:[#allocation3 + $0x90] sm:$0xff] %vm1366, %v3579
      %3657 = vst.msk [vmem:[#allocation3 + $0x98] sm:$0xff] %vm1366, %v3581
      %3658 = vst.msk [vmem:[#allocation3 + $0xa0] sm:$0xff] %vm1366, %v3583
      %3659 = vst.msk [vmem:[#allocation3 + $0xa8] sm:$0xff] %vm1366, %v3585
      %3660 = vst.msk [vmem:[#allocation3 + $0xb0] sm:$0xff] %vm1366, %v3587
      %3661 = vst.msk [vmem:[#allocation3 + $0xb8] sm:$0xff] %vm1366, %v3589
      %3662 = vst.msk [vmem:[#allocation3 + $0xc0] sm:$0xff] %vm1366, %v3591
      %3663 = vst.msk [vmem:[#allocation3 + $0xc8] sm:$0xff] %vm1366, %v3593
      %3664 = vst.msk [vmem:[#allocation3 + $0xd0] sm:$0xff] %vm1366, %v3595
      %3665 = vst.msk [vmem:[#allocation3 + $0xd8] sm:$0xff] %vm1366, %v3597
      %3666 = vst.msk [vmem:[#allocation3 + $0xe0] sm:$0xff] %vm1366, %v3599
      %3667 = vst.msk [vmem:[#allocation3 + $0xe8] sm:$0xff] %vm1366, %v3601
      %3668 = vst.msk [vmem:[#allocation3 + $0xf0] sm:$0xff] %vm1366, %v3603
      %3669 = vst.msk [vmem:[#allocation3 + $0xf8] sm:$0xff] %vm1366, %v3605
      %v3670 = vld [vmem:[%s1399] sm:$0xff]
      %v3671 = vld [vmem:[%s1399 + $0x8] sm:$0xff]
      %v3672 = vld [vmem:[%s1399 + $0x18] sm:$0xff]
      %v3673 = vld [vmem:[%s1399 + $0x20] sm:$0xff]
      %v3674 = vld [vmem:[%s1399 + $0x30] sm:$0xff]
      %v3675 = vld [vmem:[%s1399 + $0x38] sm:$0xff]
      %v3676 = vld [vmem:[%s1399 + $0x48] sm:$0xff]
      %v3677 = vld [vmem:[%s1399 + $0x50] sm:$0xff]
      %v3678 = vld [vmem:[%s1399 + $0x60] sm:$0xff]
      %v3679 = vld [vmem:[%s1399 + $0x68] sm:$0xff]
      %v3680 = vld [vmem:[%s1399 + $0x78] sm:$0xff]
      %v3681 = vld [vmem:[%s1399 + $0x80] sm:$0xff]
      %v3682 = vld [vmem:[%s1399 + $0x90] sm:$0xff]
      %v3683 = vld [vmem:[%s1399 + $0x98] sm:$0xff]
      %v3684 = vld [vmem:[%s1399 + $0xa8] sm:$0xff]
      %v3685 = vld [vmem:[%s1399 + $0xb0] sm:$0xff]
      %v3686 = vld [vmem:[%s1399 + $0xc0] sm:$0xff]
      %v3687 = vld [vmem:[%s1399 + $0xc8] sm:$0xff]
      %v3688 = vld [vmem:[%s1399 + $0xd8] sm:$0xff]
      %v3689 = vld [vmem:[%s1399 + $0xe0] sm:$0xff]
      %v3690 = vld [vmem:[%s1399 + $0xf0] sm:$0xff]
      %v3691 = vld [vmem:[%s1399 + $0xf8] sm:$0xff]
      %v3692 = vld [vmem:[%s1399 + $0x108] sm:$0xff]
      %v3693 = vld [vmem:[%s1399 + $0x110] sm:$0xff]
      %v3694 = vld [vmem:[%s1399 + $0x120] sm:$0xff]
      %v3695 = vld [vmem:[%s1399 + $0x128] sm:$0xff]
      %v3696 = vld [vmem:[%s1399 + $0x138] sm:$0xff]
      %v3697 = vld [vmem:[%s1399 + $0x140] sm:$0xff]
      %v3698 = vld [vmem:[%s1399 + $0x150] sm:$0xff]
      %v3699 = vld [vmem:[%s1399 + $0x158] sm:$0xff]
      %v3700 = vld [vmem:[%s1399 + $0x168] sm:$0xff]
      %v3701 = vld [vmem:[%s1399 + $0x170] sm:$0xff]
      %3734 = vrot.lane.b32.xlu0 %v3670, 24
      %v3735 = vpop.permute.xlu0 %3734
      %3736 = vrot.lane.b32.xlu0 %v3671, 24
      %v3737 = vpop.permute.xlu0 %3736
      %3738 = vrot.lane.b32.xlu0 %v3672, 24
      %v3739 = vpop.permute.xlu0 %3738
      %3740 = vrot.lane.b32.xlu0 %v3673, 24
      %v3741 = vpop.permute.xlu0 %3740
      %3742 = vrot.lane.b32.xlu0 %v3674, 24
      %v3743 = vpop.permute.xlu0 %3742
      %3744 = vrot.lane.b32.xlu0 %v3675, 24
      %v3745 = vpop.permute.xlu0 %3744
      %3746 = vrot.lane.b32.xlu0 %v3676, 24
      %v3747 = vpop.permute.xlu0 %3746
      %3748 = vrot.lane.b32.xlu0 %v3677, 24
      %v3749 = vpop.permute.xlu0 %3748
      %3750 = vrot.lane.b32.xlu0 %v3678, 24
      %v3751 = vpop.permute.xlu0 %3750
      %3752 = vrot.lane.b32.xlu0 %v3679, 24
      %v3753 = vpop.permute.xlu0 %3752
      %3754 = vrot.lane.b32.xlu0 %v3680, 24
      %v3755 = vpop.permute.xlu0 %3754
      %3756 = vrot.lane.b32.xlu0 %v3681, 24
      %v3757 = vpop.permute.xlu0 %3756
      %3758 = vrot.lane.b32.xlu0 %v3682, 24
      %v3759 = vpop.permute.xlu0 %3758
      %3760 = vrot.lane.b32.xlu0 %v3683, 24
      %v3761 = vpop.permute.xlu0 %3760
      %3762 = vrot.lane.b32.xlu0 %v3684, 24
      %v3763 = vpop.permute.xlu0 %3762
      %3764 = vrot.lane.b32.xlu0 %v3685, 24
      %v3765 = vpop.permute.xlu0 %3764
      %3766 = vrot.lane.b32.xlu0 %v3686, 24
      %v3767 = vpop.permute.xlu0 %3766
      %3768 = vrot.lane.b32.xlu0 %v3687, 24
      %v3769 = vpop.permute.xlu0 %3768
      %3770 = vrot.lane.b32.xlu0 %v3688, 24
      %v3771 = vpop.permute.xlu0 %3770
      %3772 = vrot.lane.b32.xlu0 %v3689, 24
      %v3773 = vpop.permute.xlu0 %3772
      %3774 = vrot.lane.b32.xlu0 %v3690, 24
      %v3775 = vpop.permute.xlu0 %3774
      %3776 = vrot.lane.b32.xlu0 %v3691, 24
      %v3777 = vpop.permute.xlu0 %3776
      %3778 = vrot.lane.b32.xlu0 %v3692, 24
      %v3779 = vpop.permute.xlu0 %3778
      %3780 = vrot.lane.b32.xlu0 %v3693, 24
      %v3781 = vpop.permute.xlu0 %3780
      %3782 = vrot.lane.b32.xlu0 %v3694, 24
      %v3783 = vpop.permute.xlu0 %3782
      %3784 = vrot.lane.b32.xlu0 %v3695, 24
      %v3785 = vpop.permute.xlu0 %3784
      %3786 = vrot.lane.b32.xlu0 %v3696, 24
      %v3787 = vpop.permute.xlu0 %3786
      %3788 = vrot.lane.b32.xlu0 %v3697, 24
      %v3789 = vpop.permute.xlu0 %3788
      %3790 = vrot.lane.b32.xlu0 %v3698, 24
      %v3791 = vpop.permute.xlu0 %3790
      %3792 = vrot.lane.b32.xlu0 %v3699, 24
      %v3793 = vpop.permute.xlu0 %3792
      %3794 = vrot.lane.b32.xlu0 %v3700, 24
      %v3795 = vpop.permute.xlu0 %3794
      %3796 = vrot.lane.b32.xlu0 %v3701, 24
      %v3797 = vpop.permute.xlu0 %3796
      %3830 = vst.msk [vmem:[#allocation3] sm:$0xff] %vm1560, %v3735
      %3831 = vst.msk [vmem:[#allocation3 + $0x8] sm:$0xff] %vm1560, %v3737
      %3832 = vst.msk [vmem:[#allocation3 + $0x10] sm:$0xff] %vm1560, %v3739
      %3833 = vst.msk [vmem:[#allocation3 + $0x18] sm:$0xff] %vm1560, %v3741
      %3834 = vst.msk [vmem:[#allocation3 + $0x20] sm:$0xff] %vm1560, %v3743
      %3835 = vst.msk [vmem:[#allocation3 + $0x28] sm:$0xff] %vm1560, %v3745
      %3836 = vst.msk [vmem:[#allocation3 + $0x30] sm:$0xff] %vm1560, %v3747
      %3837 = vst.msk [vmem:[#allocation3 + $0x38] sm:$0xff] %vm1560, %v3749
      %3838 = vst.msk [vmem:[#allocation3 + $0x40] sm:$0xff] %vm1560, %v3751
      %3839 = vst.msk [vmem:[#allocation3 + $0x48] sm:$0xff] %vm1560, %v3753
      %3840 = vst.msk [vmem:[#allocation3 + $0x50] sm:$0xff] %vm1560, %v3755
      %3841 = vst.msk [vmem:[#allocation3 + $0x58] sm:$0xff] %vm1560, %v3757
      %3842 = vst.msk [vmem:[#allocation3 + $0x60] sm:$0xff] %vm1560, %v3759
      %3843 = vst.msk [vmem:[#allocation3 + $0x68] sm:$0xff] %vm1560, %v3761
      %3844 = vst.msk [vmem:[#allocation3 + $0x70] sm:$0xff] %vm1560, %v3763
      %3845 = vst.msk [vmem:[#allocation3 + $0x78] sm:$0xff] %vm1560, %v3765
      %3846 = vst.msk [vmem:[#allocation3 + $0x80] sm:$0xff] %vm1560, %v3767
      %3847 = vst.msk [vmem:[#allocation3 + $0x88] sm:$0xff] %vm1560, %v3769
      %3848 = vst.msk [vmem:[#allocation3 + $0x90] sm:$0xff] %vm1560, %v3771
      %3849 = vst.msk [vmem:[#allocation3 + $0x98] sm:$0xff] %vm1560, %v3773
      %3850 = vst.msk [vmem:[#allocation3 + $0xa0] sm:$0xff] %vm1560, %v3775
      %3851 = vst.msk [vmem:[#allocation3 + $0xa8] sm:$0xff] %vm1560, %v3777
      %3852 = vst.msk [vmem:[#allocation3 + $0xb0] sm:$0xff] %vm1560, %v3779
      %3853 = vst.msk [vmem:[#allocation3 + $0xb8] sm:$0xff] %vm1560, %v3781
      %3854 = vst.msk [vmem:[#allocation3 + $0xc0] sm:$0xff] %vm1560, %v3783
      %3855 = vst.msk [vmem:[#allocation3 + $0xc8] sm:$0xff] %vm1560, %v3785
      %3856 = vst.msk [vmem:[#allocation3 + $0xd0] sm:$0xff] %vm1560, %v3787
      %3857 = vst.msk [vmem:[#allocation3 + $0xd8] sm:$0xff] %vm1560, %v3789
      %3858 = vst.msk [vmem:[#allocation3 + $0xe0] sm:$0xff] %vm1560, %v3791
      %3859 = vst.msk [vmem:[#allocation3 + $0xe8] sm:$0xff] %vm1560, %v3793
      %3860 = vst.msk [vmem:[#allocation3 + $0xf0] sm:$0xff] %vm1560, %v3795
      %3861 = vst.msk [vmem:[#allocation3 + $0xf8] sm:$0xff] %vm1560, %v3797
      %v3862 = vld [vmem:[%s1399 + $0x1] sm:$0xff]
      %v3863 = vld [vmem:[%s1399 + $0x9] sm:$0xff]
      %v3864 = vld [vmem:[%s1399 + $0x19] sm:$0xff]
      %v3865 = vld [vmem:[%s1399 + $0x21] sm:$0xff]
      %v3866 = vld [vmem:[%s1399 + $0x31] sm:$0xff]
      %v3867 = vld [vmem:[%s1399 + $0x39] sm:$0xff]
      %v3868 = vld [vmem:[%s1399 + $0x49] sm:$0xff]
      %v3869 = vld [vmem:[%s1399 + $0x51] sm:$0xff]
      %v3870 = vld [vmem:[%s1399 + $0x61] sm:$0xff]
      %v3871 = vld [vmem:[%s1399 + $0x69] sm:$0xff]
      %v3872 = vld [vmem:[%s1399 + $0x79] sm:$0xff]
      %v3873 = vld [vmem:[%s1399 + $0x81] sm:$0xff]
      %v3874 = vld [vmem:[%s1399 + $0x91] sm:$0xff]
      %v3875 = vld [vmem:[%s1399 + $0x99] sm:$0xff]
      %v3876 = vld [vmem:[%s1399 + $0xa9] sm:$0xff]
      %v3877 = vld [vmem:[%s1399 + $0xb1] sm:$0xff]
      %v3878 = vld [vmem:[%s1399 + $0xc1] sm:$0xff]
      %v3879 = vld [vmem:[%s1399 + $0xc9] sm:$0xff]
      %v3880 = vld [vmem:[%s1399 + $0xd9] sm:$0xff]
      %v3881 = vld [vmem:[%s1399 + $0xe1] sm:$0xff]
      %v3882 = vld [vmem:[%s1399 + $0xf1] sm:$0xff]
      %v3883 = vld [vmem:[%s1399 + $0xf9] sm:$0xff]
      %v3884 = vld [vmem:[%s1399 + $0x109] sm:$0xff]
      %v3885 = vld [vmem:[%s1399 + $0x111] sm:$0xff]
      %v3886 = vld [vmem:[%s1399 + $0x121] sm:$0xff]
      %v3887 = vld [vmem:[%s1399 + $0x129] sm:$0xff]
      %v3888 = vld [vmem:[%s1399 + $0x139] sm:$0xff]
      %v3889 = vld [vmem:[%s1399 + $0x141] sm:$0xff]
      %v3890 = vld [vmem:[%s1399 + $0x151] sm:$0xff]
      %v3891 = vld [vmem:[%s1399 + $0x159] sm:$0xff]
      %v3892 = vld [vmem:[%s1399 + $0x169] sm:$0xff]
      %v3893 = vld [vmem:[%s1399 + $0x171] sm:$0xff]
      %3926 = vrot.lane.b32.xlu0 %v3862, 28
      %v3927 = vpop.permute.xlu0 %3926
      %3928 = vrot.lane.b32.xlu0 %v3863, 28
      %v3929 = vpop.permute.xlu0 %3928
      %3930 = vrot.lane.b32.xlu0 %v3864, 28
      %v3931 = vpop.permute.xlu0 %3930
      %3932 = vrot.lane.b32.xlu0 %v3865, 28
      %v3933 = vpop.permute.xlu0 %3932
      %3934 = vrot.lane.b32.xlu0 %v3866, 28
      %v3935 = vpop.permute.xlu0 %3934
      %3936 = vrot.lane.b32.xlu0 %v3867, 28
      %v3937 = vpop.permute.xlu0 %3936
      %3938 = vrot.lane.b32.xlu0 %v3868, 28
      %v3939 = vpop.permute.xlu0 %3938
      %3940 = vrot.lane.b32.xlu0 %v3869, 28
      %v3941 = vpop.permute.xlu0 %3940
      %3942 = vrot.lane.b32.xlu0 %v3870, 28
      %v3943 = vpop.permute.xlu0 %3942
      %3944 = vrot.lane.b32.xlu0 %v3871, 28
      %v3945 = vpop.permute.xlu0 %3944
      %3946 = vrot.lane.b32.xlu0 %v3872, 28
      %v3947 = vpop.permute.xlu0 %3946
      %3948 = vrot.lane.b32.xlu0 %v3873, 28
      %v3949 = vpop.permute.xlu0 %3948
      %3950 = vrot.lane.b32.xlu0 %v3874, 28
      %v3951 = vpop.permute.xlu0 %3950
      %3952 = vrot.lane.b32.xlu0 %v3875, 28
      %v3953 = vpop.permute.xlu0 %3952
      %3954 = vrot.lane.b32.xlu0 %v3876, 28
      %v3955 = vpop.permute.xlu0 %3954
      %3956 = vrot.lane.b32.xlu0 %v3877, 28
      %v3957 = vpop.permute.xlu0 %3956
      %3958 = vrot.lane.b32.xlu0 %v3878, 28
      %v3959 = vpop.permute.xlu0 %3958
      %3960 = vrot.lane.b32.xlu0 %v3879, 28
      %v3961 = vpop.permute.xlu0 %3960
      %3962 = vrot.lane.b32.xlu0 %v3880, 28
      %v3963 = vpop.permute.xlu0 %3962
      %3964 = vrot.lane.b32.xlu0 %v3881, 28
      %v3965 = vpop.permute.xlu0 %3964
      %3966 = vrot.lane.b32.xlu0 %v3882, 28
      %v3967 = vpop.permute.xlu0 %3966
      %3968 = vrot.lane.b32.xlu0 %v3883, 28
      %v3969 = vpop.permute.xlu0 %3968
      %3970 = vrot.lane.b32.xlu0 %v3884, 28
      %v3971 = vpop.permute.xlu0 %3970
      %3972 = vrot.lane.b32.xlu0 %v3885, 28
      %v3973 = vpop.permute.xlu0 %3972
      %3974 = vrot.lane.b32.xlu0 %v3886, 28
      %v3975 = vpop.permute.xlu0 %3974
      %3976 = vrot.lane.b32.xlu0 %v3887, 28
      %v3977 = vpop.permute.xlu0 %3976
      %3978 = vrot.lane.b32.xlu0 %v3888, 28
      %v3979 = vpop.permute.xlu0 %3978
      %3980 = vrot.lane.b32.xlu0 %v3889, 28
      %v3981 = vpop.permute.xlu0 %3980
      %3982 = vrot.lane.b32.xlu0 %v3890, 28
      %v3983 = vpop.permute.xlu0 %3982
      %3984 = vrot.lane.b32.xlu0 %v3891, 28
      %v3985 = vpop.permute.xlu0 %3984
      %3986 = vrot.lane.b32.xlu0 %v3892, 28
      %v3987 = vpop.permute.xlu0 %3986
      %3988 = vrot.lane.b32.xlu0 %v3893, 28
      %v3989 = vpop.permute.xlu0 %3988
      %4022 = vst.msk [vmem:[#allocation3] sm:$0xff] %vm1753, %v3927
      %4023 = vst.msk [vmem:[#allocation3 + $0x8] sm:$0xff] %vm1753, %v3929
      %4024 = vst.msk [vmem:[#allocation3 + $0x10] sm:$0xff] %vm1753, %v3931
      %4025 = vst.msk [vmem:[#allocation3 + $0x18] sm:$0xff] %vm1753, %v3933
      %4026 = vst.msk [vmem:[#allocation3 + $0x20] sm:$0xff] %vm1753, %v3935
      %4027 = vst.msk [vmem:[#allocation3 + $0x28] sm:$0xff] %vm1753, %v3937
      %4028 = vst.msk [vmem:[#allocation3 + $0x30] sm:$0xff] %vm1753, %v3939
      %4029 = vst.msk [vmem:[#allocation3 + $0x38] sm:$0xff] %vm1753, %v3941
      %4030 = vst.msk [vmem:[#allocation3 + $0x40] sm:$0xff] %vm1753, %v3943
      %4031 = vst.msk [vmem:[#allocation3 + $0x48] sm:$0xff] %vm1753, %v3945
      %4032 = vst.msk [vmem:[#allocation3 + $0x50] sm:$0xff] %vm1753, %v3947
      %4033 = vst.msk [vmem:[#allocation3 + $0x58] sm:$0xff] %vm1753, %v3949
      %4034 = vst.msk [vmem:[#allocation3 + $0x60] sm:$0xff] %vm1753, %v3951
      %4035 = vst.msk [vmem:[#allocation3 + $0x68] sm:$0xff] %vm1753, %v3953
      %4036 = vst.msk [vmem:[#allocation3 + $0x70] sm:$0xff] %vm1753, %v3955
      %4037 = vst.msk [vmem:[#allocation3 + $0x78] sm:$0xff] %vm1753, %v3957
      %4038 = vst.msk [vmem:[#allocation3 + $0x80] sm:$0xff] %vm1753, %v3959
      %4039 = vst.msk [vmem:[#allocation3 + $0x88] sm:$0xff] %vm1753, %v3961
      %4040 = vst.msk [vmem:[#allocation3 + $0x90] sm:$0xff] %vm1753, %v3963
      %4041 = vst.msk [vmem:[#allocation3 + $0x98] sm:$0xff] %vm1753, %v3965
      %4042 = vst.msk [vmem:[#allocation3 + $0xa0] sm:$0xff] %vm1753, %v3967
      %4043 = vst.msk [vmem:[#allocation3 + $0xa8] sm:$0xff] %vm1753, %v3969
      %4044 = vst.msk [vmem:[#allocation3 + $0xb0] sm:$0xff] %vm1753, %v3971
      %4045 = vst.msk [vmem:[#allocation3 + $0xb8] sm:$0xff] %vm1753, %v3973
      %4046 = vst.msk [vmem:[#allocation3 + $0xc0] sm:$0xff] %vm1753, %v3975
      %4047 = vst.msk [vmem:[#allocation3 + $0xc8] sm:$0xff] %vm1753, %v3977
      %4048 = vst.msk [vmem:[#allocation3 + $0xd0] sm:$0xff] %vm1753, %v3979
      %4049 = vst.msk [vmem:[#allocation3 + $0xd8] sm:$0xff] %vm1753, %v3981
      %4050 = vst.msk [vmem:[#allocation3 + $0xe0] sm:$0xff] %vm1753, %v3983
      %4051 = vst.msk [vmem:[#allocation3 + $0xe8] sm:$0xff] %vm1753, %v3985
      %4052 = vst.msk [vmem:[#allocation3 + $0xf0] sm:$0xff] %vm1753, %v3987
      %4053 = vst.msk [vmem:[#allocation3 + $0xf8] sm:$0xff] %vm1753, %v3989
      %v4054 = vld [vmem:[%s1399 + $0x2] sm:$0xff]
      %v4055 = vld [vmem:[%s1399 + $0xa] sm:$0xff]
      %v4056 = vld [vmem:[%s1399 + $0x1a] sm:$0xff]
      %v4057 = vld [vmem:[%s1399 + $0x22] sm:$0xff]
      %v4058 = vld [vmem:[%s1399 + $0x32] sm:$0xff]
      %v4059 = vld [vmem:[%s1399 + $0x3a] sm:$0xff]
      %v4060 = vld [vmem:[%s1399 + $0x4a] sm:$0xff]
      %v4061 = vld [vmem:[%s1399 + $0x52] sm:$0xff]
      %v4062 = vld [vmem:[%s1399 + $0x62] sm:$0xff]
      %v4063 = vld [vmem:[%s1399 + $0x6a] sm:$0xff]
      %v4064 = vld [vmem:[%s1399 + $0x7a] sm:$0xff]
      %v4065 = vld [vmem:[%s1399 + $0x82] sm:$0xff]
      %v4066 = vld [vmem:[%s1399 + $0x92] sm:$0xff]
      %v4067 = vld [vmem:[%s1399 + $0x9a] sm:$0xff]
      %v4068 = vld [vmem:[%s1399 + $0xaa] sm:$0xff]
      %v4069 = vld [vmem:[%s1399 + $0xb2] sm:$0xff]
      %v4070 = vld [vmem:[%s1399 + $0xc2] sm:$0xff]
      %v4071 = vld [vmem:[%s1399 + $0xca] sm:$0xff]
      %v4072 = vld [vmem:[%s1399 + $0xda] sm:$0xff]
      %v4073 = vld [vmem:[%s1399 + $0xe2] sm:$0xff]
      %v4074 = vld [vmem:[%s1399 + $0xf2] sm:$0xff]
      %v4075 = vld [vmem:[%s1399 + $0xfa] sm:$0xff]
      %v4076 = vld [vmem:[%s1399 + $0x10a] sm:$0xff]
      %v4077 = vld [vmem:[%s1399 + $0x112] sm:$0xff]
      %v4078 = vld [vmem:[%s1399 + $0x122] sm:$0xff]
      %v4079 = vld [vmem:[%s1399 + $0x12a] sm:$0xff]
      %v4080 = vld [vmem:[%s1399 + $0x13a] sm:$0xff]
      %v4081 = vld [vmem:[%s1399 + $0x142] sm:$0xff]
      %v4082 = vld [vmem:[%s1399 + $0x152] sm:$0xff]
      %v4083 = vld [vmem:[%s1399 + $0x15a] sm:$0xff]
      %v4084 = vld [vmem:[%s1399 + $0x16a] sm:$0xff]
      %v4085 = vld [vmem:[%s1399 + $0x172] sm:$0xff]
      %4118 = vrot.lane.b32.xlu0 %v4054, 32
      %v4119 = vpop.permute.xlu0 %4118
      %4120 = vrot.lane.b32.xlu0 %v4055, 32
      %v4121 = vpop.permute.xlu0 %4120
      %4122 = vrot.lane.b32.xlu0 %v4056, 32
      %v4123 = vpop.permute.xlu0 %4122
      %4124 = vrot.lane.b32.xlu0 %v4057, 32
      %v4125 = vpop.permute.xlu0 %4124
      %4126 = vrot.lane.b32.xlu0 %v4058, 32
      %v4127 = vpop.permute.xlu0 %4126
      %4128 = vrot.lane.b32.xlu0 %v4059, 32
      %v4129 = vpop.permute.xlu0 %4128
      %4130 = vrot.lane.b32.xlu0 %v4060, 32
      %v4131 = vpop.permute.xlu0 %4130
      %4132 = vrot.lane.b32.xlu0 %v4061, 32
      %v4133 = vpop.permute.xlu0 %4132
      %4134 = vrot.lane.b32.xlu0 %v4062, 32
      %v4135 = vpop.permute.xlu0 %4134
      %4136 = vrot.lane.b32.xlu0 %v4063, 32
      %v4137 = vpop.permute.xlu0 %4136
      %4138 = vrot.lane.b32.xlu0 %v4064, 32
      %v4139 = vpop.permute.xlu0 %4138
      %4140 = vrot.lane.b32.xlu0 %v4065, 32
      %v4141 = vpop.permute.xlu0 %4140
      %4142 = vrot.lane.b32.xlu0 %v4066, 32
      %v4143 = vpop.permute.xlu0 %4142
      %4144 = vrot.lane.b32.xlu0 %v4067, 32
      %v4145 = vpop.permute.xlu0 %4144
      %4146 = vrot.lane.b32.xlu0 %v4068, 32
      %v4147 = vpop.permute.xlu0 %4146
      %4148 = vrot.lane.b32.xlu0 %v4069, 32
      %v4149 = vpop.permute.xlu0 %4148
      %4150 = vrot.lane.b32.xlu0 %v4070, 32
      %v4151 = vpop.permute.xlu0 %4150
      %4152 = vrot.lane.b32.xlu0 %v4071, 32
      %v4153 = vpop.permute.xlu0 %4152
      %4154 = vrot.lane.b32.xlu0 %v4072, 32
      %v4155 = vpop.permute.xlu0 %4154
      %4156 = vrot.lane.b32.xlu0 %v4073, 32
      %v4157 = vpop.permute.xlu0 %4156
      %4158 = vrot.lane.b32.xlu0 %v4074, 32
      %v4159 = vpop.permute.xlu0 %4158
      %4160 = vrot.lane.b32.xlu0 %v4075, 32
      %v4161 = vpop.permute.xlu0 %4160
      %4162 = vrot.lane.b32.xlu0 %v4076, 32
      %v4163 = vpop.permute.xlu0 %4162
      %4164 = vrot.lane.b32.xlu0 %v4077, 32
      %v4165 = vpop.permute.xlu0 %4164
      %4166 = vrot.lane.b32.xlu0 %v4078, 32
      %v4167 = vpop.permute.xlu0 %4166
      %4168 = vrot.lane.b32.xlu0 %v4079, 32
      %v4169 = vpop.permute.xlu0 %4168
      %4170 = vrot.lane.b32.xlu0 %v4080, 32
      %v4171 = vpop.permute.xlu0 %4170
      %4172 = vrot.lane.b32.xlu0 %v4081, 32
      %v4173 = vpop.permute.xlu0 %4172
      %4174 = vrot.lane.b32.xlu0 %v4082, 32
      %v4175 = vpop.permute.xlu0 %4174
      %4176 = vrot.lane.b32.xlu0 %v4083, 32
      %v4177 = vpop.permute.xlu0 %4176
      %4178 = vrot.lane.b32.xlu0 %v4084, 32
      %v4179 = vpop.permute.xlu0 %4178
      %4180 = vrot.lane.b32.xlu0 %v4085, 32
      %v4181 = vpop.permute.xlu0 %4180
      %4214 = vst.msk [vmem:[#allocation3] sm:$0xff] %vm1946, %v4119
      %4215 = vst.msk [vmem:[#allocation3 + $0x8] sm:$0xff] %vm1946, %v4121
      %4216 = vst.msk [vmem:[#allocation3 + $0x10] sm:$0xff] %vm1946, %v4123
      %4217 = vst.msk [vmem:[#allocation3 + $0x18] sm:$0xff] %vm1946, %v4125
      %4218 = vst.msk [vmem:[#allocation3 + $0x20] sm:$0xff] %vm1946, %v4127
      %4219 = vst.msk [vmem:[#allocation3 + $0x28] sm:$0xff] %vm1946, %v4129
      %4220 = vst.msk [vmem:[#allocation3 + $0x30] sm:$0xff] %vm1946, %v4131
      %4221 = vst.msk [vmem:[#allocation3 + $0x38] sm:$0xff] %vm1946, %v4133
      %4222 = vst.msk [vmem:[#allocation3 + $0x40] sm:$0xff] %vm1946, %v4135
      %4223 = vst.msk [vmem:[#allocation3 + $0x48] sm:$0xff] %vm1946, %v4137
      %4224 = vst.msk [vmem:[#allocation3 + $0x50] sm:$0xff] %vm1946, %v4139
      %4225 = vst.msk [vmem:[#allocation3 + $0x58] sm:$0xff] %vm1946, %v4141
      %4226 = vst.msk [vmem:[#allocation3 + $0x60] sm:$0xff] %vm1946, %v4143
      %4227 = vst.msk [vmem:[#allocation3 + $0x68] sm:$0xff] %vm1946, %v4145
      %4228 = vst.msk [vmem:[#allocation3 + $0x70] sm:$0xff] %vm1946, %v4147
      %4229 = vst.msk [vmem:[#allocation3 + $0x78] sm:$0xff] %vm1946, %v4149
      %4230 = vst.msk [vmem:[#allocation3 + $0x80] sm:$0xff] %vm1946, %v4151
      %4231 = vst.msk [vmem:[#allocation3 + $0x88] sm:$0xff] %vm1946, %v4153
      %4232 = vst.msk [vmem:[#allocation3 + $0x90] sm:$0xff] %vm1946, %v4155
      %4233 = vst.msk [vmem:[#allocation3 + $0x98] sm:$0xff] %vm1946, %v4157
      %4234 = vst.msk [vmem:[#allocation3 + $0xa0] sm:$0xff] %vm1946, %v4159
      %4235 = vst.msk [vmem:[#allocation3 + $0xa8] sm:$0xff] %vm1946, %v4161
      %4236 = vst.msk [vmem:[#allocation3 + $0xb0] sm:$0xff] %vm1946, %v4163
      %4237 = vst.msk [vmem:[#allocation3 + $0xb8] sm:$0xff] %vm1946, %v4165
      %4238 = vst.msk [vmem:[#allocation3 + $0xc0] sm:$0xff] %vm1946, %v4167
      %4239 = vst.msk [vmem:[#allocation3 + $0xc8] sm:$0xff] %vm1946, %v4169
      %4240 = vst.msk [vmem:[#allocation3 + $0xd0] sm:$0xff] %vm1946, %v4171
      %4241 = vst.msk [vmem:[#allocation3 + $0xd8] sm:$0xff] %vm1946, %v4173
      %4242 = vst.msk [vmem:[#allocation3 + $0xe0] sm:$0xff] %vm1946, %v4175
      %4243 = vst.msk [vmem:[#allocation3 + $0xe8] sm:$0xff] %vm1946, %v4177
      %4244 = vst.msk [vmem:[#allocation3 + $0xf0] sm:$0xff] %vm1946, %v4179
      %4245 = vst.msk [vmem:[#allocation3 + $0xf8] sm:$0xff] %vm1946, %v4181
      %v4246 = vld [vmem:[#allocation3] sm:$0xff]
      %v4247 = vld [vmem:[#allocation3 + $0x8] sm:$0xff]
      %v4248 = vld [vmem:[#allocation3 + $0x10] sm:$0xff]
      %v4249 = vld [vmem:[#allocation3 + $0x18] sm:$0xff]
      %v4250 = vld [vmem:[#allocation3 + $0x20] sm:$0xff]
      %v4251 = vld [vmem:[#allocation3 + $0x28] sm:$0xff]
      %v4252 = vld [vmem:[#allocation3 + $0x30] sm:$0xff]
      %v4253 = vld [vmem:[#allocation3 + $0x38] sm:$0xff]
      %v4254 = vld [vmem:[#allocation3 + $0x40] sm:$0xff]
      %v4255 = vld [vmem:[#allocation3 + $0x48] sm:$0xff]
      %v4256 = vld [vmem:[#allocation3 + $0x50] sm:$0xff]
      %v4257 = vld [vmem:[#allocation3 + $0x58] sm:$0xff]
      %v4258 = vld [vmem:[#allocation3 + $0x60] sm:$0xff]
      %v4259 = vld [vmem:[#allocation3 + $0x68] sm:$0xff]
      %v4260 = vld [vmem:[#allocation3 + $0x70] sm:$0xff]
      %v4261 = vld [vmem:[#allocation3 + $0x78] sm:$0xff]
      %v4262 = vld [vmem:[#allocation3 + $0x80] sm:$0xff]
      %v4263 = vld [vmem:[#allocation3 + $0x88] sm:$0xff]
      %v4264 = vld [vmem:[#allocation3 + $0x90] sm:$0xff]
      %v4265 = vld [vmem:[#allocation3 + $0x98] sm:$0xff]
      %v4266 = vld [vmem:[#allocation3 + $0xa0] sm:$0xff]
      %v4267 = vld [vmem:[#allocation3 + $0xa8] sm:$0xff]
      %v4268 = vld [vmem:[#allocation3 + $0xb0] sm:$0xff]
      %v4269 = vld [vmem:[#allocation3 + $0xb8] sm:$0xff]
      %v4270 = vld [vmem:[#allocation3 + $0xc0] sm:$0xff]
      %v4271 = vld [vmem:[#allocation3 + $0xc8] sm:$0xff]
      %v4272 = vld [vmem:[#allocation3 + $0xd0] sm:$0xff]
      %v4273 = vld [vmem:[#allocation3 + $0xd8] sm:$0xff]
      %v4274 = vld [vmem:[#allocation3 + $0xe0] sm:$0xff]
      %v4275 = vld [vmem:[#allocation3 + $0xe8] sm:$0xff]
      %v4276 = vld [vmem:[#allocation3 + $0xf0] sm:$0xff]
      %v4277 = vld [vmem:[#allocation3 + $0xf8] sm:$0xff]
      %v4278 = vpack.c.bf16 %v4247, %v4246
      %v4279 = vpack.c.bf16 %v4249, %v4248
      %v4280 = vpack.c.bf16 %v4251, %v4250
      %v4281 = vpack.c.bf16 %v4253, %v4252
      %v4282 = vpack.c.bf16 %v4255, %v4254
      %v4283 = vpack.c.bf16 %v4257, %v4256
      %v4284 = vpack.c.bf16 %v4259, %v4258
      %v4285 = vpack.c.bf16 %v4261, %v4260
      %v4286 = vpack.c.bf16 %v4263, %v4262
      %v4287 = vpack.c.bf16 %v4265, %v4264
      %v4288 = vpack.c.bf16 %v4267, %v4266
      %v4289 = vpack.c.bf16 %v4269, %v4268
      %v4290 = vpack.c.bf16 %v4271, %v4270
      %v4291 = vpack.c.bf16 %v4273, %v4272
      %v4292 = vpack.c.bf16 %v4275, %v4274
      %v4293 = vpack.c.bf16 %v4277, %v4276
      %v4294 = vld [vmem:[%s3] sm:$0xf]
      %v4295 = vld [vmem:[%s3 + $0x4] sm:$0xf]
      %v4296 = vld [vmem:[%s3 + $0x8] sm:$0xf]
      %v4297 = vld [vmem:[%s3 + $0xc] sm:$0xf]
      %v4298 = vld [vmem:[%s3 + $0x10] sm:$0x3]
      %v4299 = vld [vmem:[%s4] sm:$0x1]
      %v4301 = vlaneseq
      %v4302 = vshrl.u32 %v4301, 7
      %v4303 = vsub.s32 0, %v4302
      %v4304 = vrot.slane %v4299, %v4303
      %v4311 = vunpack.c.l.b16 %v4294
      %v4312 = vunpack.c.l.b16 %v4295
      %v4313 = vunpack.c.l.b16 %v4296
      %v4314 = vunpack.c.l.b16 %v4297
      %v4315 = vunpack.c.l.b16 %v4298
      %v4316 = vpack.c.b16 %v4312, %v4311
      %v4317 = vpack.c.b16 %v4314, %v4313
      %v4318 = vpack.c.b16 %v4315, %v4315
      %v4322 = vsel %vm2054, %v4278, 0
      %v4325 = vsel %vm2054, %v4279, 0
      %v4328 = vsel %vm2054, %v4280, 0
      %v4331 = vsel %vm2054, %v4281, 0
      %v4334 = vsel %vm2054, %v4282, 0
      %v4337 = vsel %vm2054, %v4283, 0
      %v4340 = vsel %vm2054, %v4284, 0
      %v4343 = vsel %vm2054, %v4285, 0
      %v4346 = vsel %vm2054, %v4286, 0
      %v4349 = vsel %vm2054, %v4287, 0
      %v4352 = vsel %vm2054, %v4288, 0
      %v4355 = vsel %vm2054, %v4289, 0
      %v4358 = vsel %vm2054, %v4290, 0
      %v4361 = vsel %vm2054, %v4291, 0
      %v4364 = vsel %vm2054, %v4292, 0
      %v4367 = vsel %vm2054, %v4293, 0
      %v4370 = vsel %vm2103, %v4318, 0
      %4372 = vmatprep.subr.bf16.mxu0 0
      %4373 = vmatpush1.bf16.msra.mxu0 0
      %4374 = vmatprep.subr.bf16.mxu0 0
      %4375 = vmatpush1.bf16.msra.mxu0 0
      %4376 = vmatprep.subr.bf16.mxu0 0
      %4377 = vmatpush1.bf16.msra.mxu0 0
      %4378 = vmatprep.subr.bf16.mxu0 0
      %4379 = vmatpush1.bf16.msra.mxu0 0
      %4380 = vmatprep.subr.bf16.mxu0 0
      %4381 = vmatpush1.bf16.msra.mxu0 0
      %4382 = vmatprep.subr.bf16.mxu0 0
      %4383 = vmatpush1.bf16.msra.mxu0 %v4370
      %4384 = vmatprep.subr.bf16.mxu0 0
      %4385 = vmatpush1.bf16.msra.mxu0 %v4317
      %4386 = vmatprep.subr.bf16.mxu0 0
      %4387 = vmatpush1.bf16.msra.mxu0 %v4316
      %4388 = vmatprep.subr.bf16.mxu0 0
      %4389 = vmatpush2.bf16.msra.mxu0 0
      %4390 = vmatprep.subr.bf16.mxu0 0
      %4391 = vmatpush2.bf16.msra.mxu0 0
      %4392 = vmatprep.subr.bf16.mxu0 0
      %4393 = vmatpush2.bf16.msra.mxu0 0
      %4394 = vmatprep.subr.bf16.mxu0 0
      %4395 = vmatpush2.bf16.msra.mxu0 0
      %4396 = vmatprep.subr.bf16.mxu0 0
      %4397 = vmatpush2.bf16.msra.mxu0 0
      %4398 = vmatprep.subr.bf16.mxu0 0
      %4399 = vmatpush2.bf16.msra.mxu0 0
      %4400 = vmatprep.subr.bf16.mxu0 0
      %4401 = vmatpush2.bf16.msra.mxu0 0
      %4402 = vmatprep.subr.bf16.mxu0 0
      %4403 = vmatpush2.bf16.msra.mxu0 0
      %4404 = vmatprep.mubr.bf16.mxu0 0
      %4405 = vmatmul.mubr.bf16.gmra.mxu0 %v4322
      %v4406 = vpop.f32.mrf.mxu0
      %v4407 = vadd.f32 %v4304, %v4406
      %v4408 = vpop.f32.mrf.mxu0
      %v4409 = vpop.f32.mrf.mxu0
      %v4410 = vadd.f32 %v4304, %v4409
      %v4411 = vpop.f32.mrf.mxu0
      %4412 = vmatprep.mubr.bf16.mxu0 0
      %4413 = vmatmul.mubr.bf16.gmra.mxu0 %v4325
      %v4414 = vpop.f32.mrf.mxu0
      %v4415 = vadd.f32 %v4304, %v4414
      %v4416 = vpop.f32.mrf.mxu0
      %v4417 = vpop.f32.mrf.mxu0
      %v4418 = vadd.f32 %v4304, %v4417
      %v4419 = vpop.f32.mrf.mxu0
      %4420 = vmatprep.mubr.bf16.mxu0 0
      %4421 = vmatmul.mubr.bf16.gmra.mxu0 %v4328
      %v4422 = vpop.f32.mrf.mxu0
      %v4423 = vadd.f32 %v4304, %v4422
      %v4424 = vpop.f32.mrf.mxu0
      %v4425 = vpop.f32.mrf.mxu0
      %v4426 = vadd.f32 %v4304, %v4425
      %v4427 = vpop.f32.mrf.mxu0
      %4428 = vmatprep.mubr.bf16.mxu0 0
      %4429 = vmatmul.mubr.bf16.gmra.mxu0 %v4331
      %v4430 = vpop.f32.mrf.mxu0
      %v4431 = vadd.f32 %v4304, %v4430
      %v4432 = vpop.f32.mrf.mxu0
      %v4433 = vpop.f32.mrf.mxu0
      %v4434 = vadd.f32 %v4304, %v4433
      %v4435 = vpop.f32.mrf.mxu0
      %4436 = vmatprep.mubr.bf16.mxu0 0
      %4437 = vmatmul.mubr.bf16.gmra.mxu0 %v4334
      %v4438 = vpop.f32.mrf.mxu0
      %v4439 = vadd.f32 %v4304, %v4438
      %v4440 = vpop.f32.mrf.mxu0
      %v4441 = vpop.f32.mrf.mxu0
      %v4442 = vadd.f32 %v4304, %v4441
      %v4443 = vpop.f32.mrf.mxu0
      %4444 = vmatprep.mubr.bf16.mxu0 0
      %4445 = vmatmul.mubr.bf16.gmra.mxu0 %v4337
      %v4446 = vpop.f32.mrf.mxu0
      %v4447 = vadd.f32 %v4304, %v4446
      %v4448 = vpop.f32.mrf.mxu0
      %v4449 = vpop.f32.mrf.mxu0
      %v4450 = vadd.f32 %v4304, %v4449
      %v4451 = vpop.f32.mrf.mxu0
      %4452 = vmatprep.mubr.bf16.mxu0 0
      %4453 = vmatmul.mubr.bf16.gmra.mxu0 %v4340
      %v4454 = vpop.f32.mrf.mxu0
      %v4455 = vadd.f32 %v4304, %v4454
      %v4456 = vpop.f32.mrf.mxu0
      %v4457 = vpop.f32.mrf.mxu0
      %v4458 = vadd.f32 %v4304, %v4457
      %v4459 = vpop.f32.mrf.mxu0
      %4460 = vmatprep.mubr.bf16.mxu0 0
      %4461 = vmatmul.mubr.bf16.gmra.mxu0 %v4343
      %v4462 = vpop.f32.mrf.mxu0
      %v4463 = vadd.f32 %v4304, %v4462
      %v4464 = vpop.f32.mrf.mxu0
      %v4465 = vpop.f32.mrf.mxu0
      %v4466 = vadd.f32 %v4304, %v4465
      %v4467 = vpop.f32.mrf.mxu0
      %4468 = vmatprep.mubr.bf16.mxu0 0
      %4469 = vmatmul.mubr.bf16.gmra.mxu0 %v4346
      %v4470 = vpop.f32.mrf.mxu0
      %v4471 = vadd.f32 %v4304, %v4470
      %v4472 = vpop.f32.mrf.mxu0
      %v4473 = vpop.f32.mrf.mxu0
      %v4474 = vadd.f32 %v4304, %v4473
      %v4475 = vpop.f32.mrf.mxu0
      %4476 = vmatprep.mubr.bf16.mxu0 0
      %4477 = vmatmul.mubr.bf16.gmra.mxu0 %v4349
      %v4478 = vpop.f32.mrf.mxu0
      %v4479 = vadd.f32 %v4304, %v4478
      %v4480 = vpop.f32.mrf.mxu0
      %v4481 = vpop.f32.mrf.mxu0
      %v4482 = vadd.f32 %v4304, %v4481
      %v4483 = vpop.f32.mrf.mxu0
      %4484 = vmatprep.mubr.bf16.mxu0 0
      %4485 = vmatmul.mubr.bf16.gmra.mxu0 %v4352
      %v4486 = vpop.f32.mrf.mxu0
      %v4487 = vadd.f32 %v4304, %v4486
      %v4488 = vpop.f32.mrf.mxu0
      %v4489 = vpop.f32.mrf.mxu0
      %v4490 = vadd.f32 %v4304, %v4489
      %v4491 = vpop.f32.mrf.mxu0
      %4492 = vmatprep.mubr.bf16.mxu0 0
      %4493 = vmatmul.mubr.bf16.gmra.mxu0 %v4355
      %v4494 = vpop.f32.mrf.mxu0
      %v4495 = vadd.f32 %v4304, %v4494
      %v4496 = vpop.f32.mrf.mxu0
      %v4497 = vpop.f32.mrf.mxu0
      %v4498 = vadd.f32 %v4304, %v4497
      %v4499 = vpop.f32.mrf.mxu0
      %4500 = vmatprep.mubr.bf16.mxu0 0
      %4501 = vmatmul.mubr.bf16.gmra.mxu0 %v4358
      %v4502 = vpop.f32.mrf.mxu0
      %v4503 = vadd.f32 %v4304, %v4502
      %v4504 = vpop.f32.mrf.mxu0
      %v4505 = vpop.f32.mrf.mxu0
      %v4506 = vadd.f32 %v4304, %v4505
      %v4507 = vpop.f32.mrf.mxu0
      %4508 = vmatprep.mubr.bf16.mxu0 0
      %4509 = vmatmul.mubr.bf16.gmra.mxu0 %v4361
      %v4510 = vpop.f32.mrf.mxu0
      %v4511 = vadd.f32 %v4304, %v4510
      %v4512 = vpop.f32.mrf.mxu0
      %v4513 = vpop.f32.mrf.mxu0
      %v4514 = vadd.f32 %v4304, %v4513
      %v4515 = vpop.f32.mrf.mxu0
      %4516 = vmatprep.mubr.bf16.mxu0 0
      %4517 = vmatmul.mubr.bf16.gmra.mxu0 %v4364
      %v4518 = vpop.f32.mrf.mxu0
      %v4519 = vadd.f32 %v4304, %v4518
      %v4520 = vpop.f32.mrf.mxu0
      %v4521 = vpop.f32.mrf.mxu0
      %v4522 = vadd.f32 %v4304, %v4521
      %v4523 = vpop.f32.mrf.mxu0
      %4524 = vmatprep.mubr.bf16.mxu0 0
      %4525 = vmatmul.mubr.bf16.gmra.mxu0 %v4367
      %v4526 = vpop.f32.mrf.mxu0
      %v4527 = vadd.f32 %v4304, %v4526
      %v4528 = vpop.f32.mrf.mxu0
      %v4529 = vpop.f32.mrf.mxu0
      %v4530 = vadd.f32 %v4304, %v4529
      %v4531 = vpop.f32.mrf.mxu0
      %4532 = vdwg.mxu0
      %v4533 = vsel %vm259, %v4407, 0.0
      %v4534 = vsel %vm259, %v4410, 0.0
      %v4535 = vadd.f32 %v4533, %v4534
      %v4536 = vsel %vm259, %v4415, 0.0
      %v4537 = vadd.f32 %v4535, %v4536
      %v4538 = vsel %vm259, %v4418, 0.0
      %v4539 = vadd.f32 %v4537, %v4538
      %v4540 = vsel %vm259, %v4423, 0.0
      %v4541 = vadd.f32 %v4539, %v4540
      %v4542 = vsel %vm259, %v4426, 0.0
      %v4543 = vadd.f32 %v4541, %v4542
      %v4544 = vsel %vm259, %v4431, 0.0
      %v4545 = vadd.f32 %v4543, %v4544
      %v4546 = vsel %vm259, %v4434, 0.0
      %v4547 = vadd.f32 %v4545, %v4546
      %v4548 = vsel %vm259, %v4439, 0.0
      %v4549 = vadd.f32 %v4547, %v4548
      %v4550 = vsel %vm259, %v4442, 0.0
      %v4551 = vadd.f32 %v4549, %v4550
      %v4552 = vsel %vm259, %v4447, 0.0
      %v4553 = vadd.f32 %v4551, %v4552
      %v4554 = vsel %vm259, %v4450, 0.0
      %v4555 = vadd.f32 %v4553, %v4554
      %v4556 = vsel %vm259, %v4455, 0.0
      %v4557 = vadd.f32 %v4555, %v4556
      %v4558 = vsel %vm259, %v4458, 0.0
      %v4559 = vadd.f32 %v4557, %v4558
      %v4560 = vsel %vm259, %v4463, 0.0
      %v4561 = vadd.f32 %v4559, %v4560
      %v4562 = vsel %vm259, %v4466, 0.0
      %v4563 = vadd.f32 %v4561, %v4562
      %v4564 = vsel %vm259, %v4471, 0.0
      %v4565 = vadd.f32 %v4563, %v4564
      %v4566 = vsel %vm259, %v4474, 0.0
      %v4567 = vadd.f32 %v4565, %v4566
      %v4568 = vsel %vm259, %v4479, 0.0
      %v4569 = vadd.f32 %v4567, %v4568
      %v4570 = vsel %vm259, %v4482, 0.0
      %v4571 = vadd.f32 %v4569, %v4570
      %v4572 = vsel %vm259, %v4487, 0.0
      %v4573 = vadd.f32 %v4571, %v4572
      %v4574 = vsel %vm259, %v4490, 0.0
      %v4575 = vadd.f32 %v4573, %v4574
      %v4576 = vsel %vm259, %v4495, 0.0
      %v4577 = vadd.f32 %v4575, %v4576
      %v4578 = vsel %vm259, %v4498, 0.0
      %v4579 = vadd.f32 %v4577, %v4578
      %v4580 = vsel %vm259, %v4503, 0.0
      %v4581 = vadd.f32 %v4579, %v4580
      %v4582 = vsel %vm259, %v4506, 0.0
      %v4583 = vadd.f32 %v4581, %v4582
      %v4584 = vsel %vm259, %v4511, 0.0
      %v4585 = vadd.f32 %v4583, %v4584
      %v4586 = vsel %vm259, %v4514, 0.0
      %v4587 = vadd.f32 %v4585, %v4586
      %v4588 = vsel %vm259, %v4519, 0.0
      %v4589 = vadd.f32 %v4587, %v4588
      %v4590 = vsel %vm259, %v4522, 0.0
      %v4591 = vadd.f32 %v4589, %v4590
      %v4592 = vsel %vm259, %v4527, 0.0
      %v4593 = vadd.f32 %v4591, %v4592
      %v4594 = vsel %vm259, %v4530, 0.0
      %v4595 = vadd.f32 %v4593, %v4594
      %v4596 = vrot.slane %v4595, 4
      %v4597 = vadd.f32 %v4595, %v4596
      %v4598 = vrot.slane %v4597, 2
      %v4599 = vadd.f32 %v4597, %v4598
      %v4600 = vrot.slane %v4599, 1
      %v4601 = vadd.f32 %v4599, %v4600
      %v4602 = vmul.f32 %v4601, 0.00390625
      %v4603 = vsub.f32 %v4407, %v4602
      %v4604 = vsub.f32 %v4410, %v4602
      %v4605 = vsub.f32 %v4415, %v4602
      %v4606 = vsub.f32 %v4418, %v4602
      %v4607 = vsub.f32 %v4423, %v4602
      %v4608 = vsub.f32 %v4426, %v4602
      %v4609 = vsub.f32 %v4431, %v4602
      %v4610 = vsub.f32 %v4434, %v4602
      %v4611 = vsub.f32 %v4439, %v4602
      %v4612 = vsub.f32 %v4442, %v4602
      %v4613 = vsub.f32 %v4447, %v4602
      %v4614 = vsub.f32 %v4450, %v4602
      %v4615 = vsub.f32 %v4455, %v4602
      %v4616 = vsub.f32 %v4458, %v4602
      %v4617 = vsub.f32 %v4463, %v4602
      %v4618 = vsub.f32 %v4466, %v4602
      %v4619 = vsub.f32 %v4471, %v4602
      %v4620 = vsub.f32 %v4474, %v4602
      %v4621 = vsub.f32 %v4479, %v4602
      %v4622 = vsub.f32 %v4482, %v4602
      %v4623 = vsub.f32 %v4487, %v4602
      %v4624 = vsub.f32 %v4490, %v4602
      %v4625 = vsub.f32 %v4495, %v4602
      %v4626 = vsub.f32 %v4498, %v4602
      %v4627 = vsub.f32 %v4503, %v4602
      %v4628 = vsub.f32 %v4506, %v4602
      %v4629 = vsub.f32 %v4511, %v4602
      %v4630 = vsub.f32 %v4514, %v4602
      %v4631 = vsub.f32 %v4519, %v4602
      %v4632 = vsub.f32 %v4522, %v4602
      %v4633 = vsub.f32 %v4527, %v4602
      %v4634 = vsub.f32 %v4530, %v4602
      %v4635 = vmul.f32 %v4603, %v4603
      %v4636 = vmul.f32 %v4604, %v4604
      %v4637 = vmul.f32 %v4605, %v4605
      %v4638 = vmul.f32 %v4606, %v4606
      %v4639 = vmul.f32 %v4607, %v4607
      %v4640 = vmul.f32 %v4608, %v4608
      %v4641 = vmul.f32 %v4609, %v4609
      %v4642 = vmul.f32 %v4610, %v4610
      %v4643 = vmul.f32 %v4611, %v4611
      %v4644 = vmul.f32 %v4612, %v4612
      %v4645 = vmul.f32 %v4613, %v4613
      %v4646 = vmul.f32 %v4614, %v4614
      %v4647 = vmul.f32 %v4615, %v4615
      %v4648 = vmul.f32 %v4616, %v4616
      %v4649 = vmul.f32 %v4617, %v4617
      %v4650 = vmul.f32 %v4618, %v4618
      %v4651 = vmul.f32 %v4619, %v4619
      %v4652 = vmul.f32 %v4620, %v4620
      %v4653 = vmul.f32 %v4621, %v4621
      %v4654 = vmul.f32 %v4622, %v4622
      %v4655 = vmul.f32 %v4623, %v4623
      %v4656 = vmul.f32 %v4624, %v4624
      %v4657 = vmul.f32 %v4625, %v4625
      %v4658 = vmul.f32 %v4626, %v4626
      %v4659 = vmul.f32 %v4627, %v4627
      %v4660 = vmul.f32 %v4628, %v4628
      %v4661 = vmul.f32 %v4629, %v4629
      %v4662 = vmul.f32 %v4630, %v4630
      %v4663 = vmul.f32 %v4631, %v4631
      %v4664 = vmul.f32 %v4632, %v4632
      %v4665 = vmul.f32 %v4633, %v4633
      %v4666 = vmul.f32 %v4634, %v4634
      %v4667 = vsel %vm259, %v4635, 0.0
      %v4668 = vsel %vm259, %v4636, 0.0
      %v4669 = vadd.f32 %v4667, %v4668
      %v4670 = vsel %vm259, %v4637, 0.0
      %v4671 = vadd.f32 %v4669, %v4670
      %v4672 = vsel %vm259, %v4638, 0.0
      %v4673 = vadd.f32 %v4671, %v4672
      %v4674 = vsel %vm259, %v4639, 0.0
      %v4675 = vadd.f32 %v4673, %v4674
      %v4676 = vsel %vm259, %v4640, 0.0
      %v4677 = vadd.f32 %v4675, %v4676
      %v4678 = vsel %vm259, %v4641, 0.0
      %v4679 = vadd.f32 %v4677, %v4678
      %v4680 = vsel %vm259, %v4642, 0.0
      %v4681 = vadd.f32 %v4679, %v4680
      %v4682 = vsel %vm259, %v4643, 0.0
      %v4683 = vadd.f32 %v4681, %v4682
      %v4684 = vsel %vm259, %v4644, 0.0
      %v4685 = vadd.f32 %v4683, %v4684
      %v4686 = vsel %vm259, %v4645, 0.0
      %v4687 = vadd.f32 %v4685, %v4686
      %v4688 = vsel %vm259, %v4646, 0.0
      %v4689 = vadd.f32 %v4687, %v4688
      %v4690 = vsel %vm259, %v4647, 0.0
      %v4691 = vadd.f32 %v4689, %v4690
      %v4692 = vsel %vm259, %v4648, 0.0
      %v4693 = vadd.f32 %v4691, %v4692
      %v4694 = vsel %vm259, %v4649, 0.0
      %v4695 = vadd.f32 %v4693, %v4694
      %v4696 = vsel %vm259, %v4650, 0.0
      %v4697 = vadd.f32 %v4695, %v4696
      %v4698 = vsel %vm259, %v4651, 0.0
      %v4699 = vadd.f32 %v4697, %v4698
      %v4700 = vsel %vm259, %v4652, 0.0
      %v4701 = vadd.f32 %v4699, %v4700
      %v4702 = vsel %vm259, %v4653, 0.0
      %v4703 = vadd.f32 %v4701, %v4702
      %v4704 = vsel %vm259, %v4654, 0.0
      %v4705 = vadd.f32 %v4703, %v4704
      %v4706 = vsel %vm259, %v4655, 0.0
      %v4707 = vadd.f32 %v4705, %v4706
      %v4708 = vsel %vm259, %v4656, 0.0
      %v4709 = vadd.f32 %v4707, %v4708
      %v4710 = vsel %vm259, %v4657, 0.0
      %v4711 = vadd.f32 %v4709, %v4710
      %v4712 = vsel %vm259, %v4658, 0.0
      %v4713 = vadd.f32 %v4711, %v4712
      %v4714 = vsel %vm259, %v4659, 0.0
      %v4715 = vadd.f32 %v4713, %v4714
      %v4716 = vsel %vm259, %v4660, 0.0
      %v4717 = vadd.f32 %v4715, %v4716
      %v4718 = vsel %vm259, %v4661, 0.0
      %v4719 = vadd.f32 %v4717, %v4718
      %v4720 = vsel %vm259, %v4662, 0.0
      %v4721 = vadd.f32 %v4719, %v4720
      %v4722 = vsel %vm259, %v4663, 0.0
      %v4723 = vadd.f32 %v4721, %v4722
      %v4724 = vsel %vm259, %v4664, 0.0
      %v4725 = vadd.f32 %v4723, %v4724
      %v4726 = vsel %vm259, %v4665, 0.0
      %v4727 = vadd.f32 %v4725, %v4726
      %v4728 = vsel %vm259, %v4666, 0.0
      %v4729 = vadd.f32 %v4727, %v4728
      %v4730 = vrot.slane %v4729, 4
      %v4731 = vadd.f32 %v4729, %v4730
      %v4732 = vrot.slane %v4731, 2
      %v4733 = vadd.f32 %v4731, %v4732
      %v4734 = vrot.slane %v4733, 1
      %v4735 = vadd.f32 %v4733, %v4734
      %v4736 = vmul.f32 %v4735, 0.00390625
      %v4737 = vadd.f32 %v4736, 1e-05
      %v4738 = vrsqrt.pop %v4737
      %v4739 = vmul.f32 %v4603, %v4738
      %v4740 = vmul.f32 %v4604, %v4738
      %v4741 = vmul.f32 %v4605, %v4738
      %v4742 = vmul.f32 %v4606, %v4738
      %v4743 = vmul.f32 %v4607, %v4738
      %v4744 = vmul.f32 %v4608, %v4738
      %v4745 = vmul.f32 %v4609, %v4738
      %v4746 = vmul.f32 %v4610, %v4738
      %v4747 = vmul.f32 %v4611, %v4738
      %v4748 = vmul.f32 %v4612, %v4738
      %v4749 = vmul.f32 %v4613, %v4738
      %v4750 = vmul.f32 %v4614, %v4738
      %v4751 = vmul.f32 %v4615, %v4738
      %v4752 = vmul.f32 %v4616, %v4738
      %v4753 = vmul.f32 %v4617, %v4738
      %v4754 = vmul.f32 %v4618, %v4738
      %v4755 = vmul.f32 %v4619, %v4738
      %v4756 = vmul.f32 %v4620, %v4738
      %v4757 = vmul.f32 %v4621, %v4738
      %v4758 = vmul.f32 %v4622, %v4738
      %v4759 = vmul.f32 %v4623, %v4738
      %v4760 = vmul.f32 %v4624, %v4738
      %v4761 = vmul.f32 %v4625, %v4738
      %v4762 = vmul.f32 %v4626, %v4738
      %v4763 = vmul.f32 %v4627, %v4738
      %v4764 = vmul.f32 %v4628, %v4738
      %v4765 = vmul.f32 %v4629, %v4738
      %v4766 = vmul.f32 %v4630, %v4738
      %v4767 = vmul.f32 %v4631, %v4738
      %v4768 = vmul.f32 %v4632, %v4738
      %v4769 = vmul.f32 %v4633, %v4738
      %v4770 = vmul.f32 %v4634, %v4738
      %v4771 = vadd.f32 %v226, %v4739
      %v4772 = vadd.f32 %v227, %v4740
      %v4773 = vadd.f32 %v228, %v4741
      %v4774 = vadd.f32 %v229, %v4742
      %v4775 = vadd.f32 %v230, %v4743
      %v4776 = vadd.f32 %v231, %v4744
      %v4777 = vadd.f32 %v232, %v4745
      %v4778 = vadd.f32 %v233, %v4746
      %v4779 = vadd.f32 %v234, %v4747
      %v4780 = vadd.f32 %v235, %v4748
      %v4781 = vadd.f32 %v236, %v4749
      %v4782 = vadd.f32 %v237, %v4750
      %v4783 = vadd.f32 %v238, %v4751
      %v4784 = vadd.f32 %v239, %v4752
      %v4785 = vadd.f32 %v240, %v4753
      %v4786 = vadd.f32 %v241, %v4754
      %v4787 = vadd.f32 %v242, %v4755
      %v4788 = vadd.f32 %v243, %v4756
      %v4789 = vadd.f32 %v244, %v4757
      %v4790 = vadd.f32 %v245, %v4758
      %v4791 = vadd.f32 %v246, %v4759
      %v4792 = vadd.f32 %v247, %v4760
      %v4793 = vadd.f32 %v248, %v4761
      %v4794 = vadd.f32 %v249, %v4762
      %v4795 = vadd.f32 %v250, %v4763
      %v4796 = vadd.f32 %v251, %v4764
      %v4797 = vadd.f32 %v252, %v4765
      %v4798 = vadd.f32 %v253, %v4766
      %v4799 = vadd.f32 %v254, %v4767
      %v4800 = vadd.f32 %v255, %v4768
      %v4801 = vadd.f32 %v256, %v4769
      %v4802 = vadd.f32 %v257, %v4770
      %4803 = vst.msk [vmem:[%s224] sm:$0xff] %vm259, %v4771
      %4804 = vst.msk [vmem:[%s224 + $0x8] sm:$0xff] %vm259, %v4772
      %4805 = vst.msk [vmem:[%s224 + $0x10] sm:$0xff] %vm259, %v4773
      %4806 = vst.msk [vmem:[%s224 + $0x18] sm:$0xff] %vm259, %v4774
      %4807 = vst.msk [vmem:[%s224 + $0x20] sm:$0xff] %vm259, %v4775
      %4808 = vst.msk [vmem:[%s224 + $0x28] sm:$0xff] %vm259, %v4776
      %4809 = vst.msk [vmem:[%s224 + $0x30] sm:$0xff] %vm259, %v4777
      %4810 = vst.msk [vmem:[%s224 + $0x38] sm:$0xff] %vm259, %v4778
      %4811 = vst.msk [vmem:[%s224 + $0x40] sm:$0xff] %vm259, %v4779
      %4812 = vst.msk [vmem:[%s224 + $0x48] sm:$0xff] %vm259, %v4780
      %4813 = vst.msk [vmem:[%s224 + $0x50] sm:$0xff] %vm259, %v4781
      %4814 = vst.msk [vmem:[%s224 + $0x58] sm:$0xff] %vm259, %v4782
      %4815 = vst.msk [vmem:[%s224 + $0x60] sm:$0xff] %vm259, %v4783
      %4816 = vst.msk [vmem:[%s224 + $0x68] sm:$0xff] %vm259, %v4784
      %4817 = vst.msk [vmem:[%s224 + $0x70] sm:$0xff] %vm259, %v4785
      %4818 = vst.msk [vmem:[%s224 + $0x78] sm:$0xff] %vm259, %v4786
      %4819 = vst.msk [vmem:[%s224 + $0x80] sm:$0xff] %vm259, %v4787
      %4820 = vst.msk [vmem:[%s224 + $0x88] sm:$0xff] %vm259, %v4788
      %4821 = vst.msk [vmem:[%s224 + $0x90] sm:$0xff] %vm259, %v4789
      %4822 = vst.msk [vmem:[%s224 + $0x98] sm:$0xff] %vm259, %v4790
      %4823 = vst.msk [vmem:[%s224 + $0xa0] sm:$0xff] %vm259, %v4791
      %4824 = vst.msk [vmem:[%s224 + $0xa8] sm:$0xff] %vm259, %v4792
      %4825 = vst.msk [vmem:[%s224 + $0xb0] sm:$0xff] %vm259, %v4793
      %4826 = vst.msk [vmem:[%s224 + $0xb8] sm:$0xff] %vm259, %v4794
      %4827 = vst.msk [vmem:[%s224 + $0xc0] sm:$0xff] %vm259, %v4795
      %4828 = vst.msk [vmem:[%s224 + $0xc8] sm:$0xff] %vm259, %v4796
      %4829 = vst.msk [vmem:[%s224 + $0xd0] sm:$0xff] %vm259, %v4797
      %4830 = vst.msk [vmem:[%s224 + $0xd8] sm:$0xff] %vm259, %v4798
      %4831 = vst.msk [vmem:[%s224 + $0xe0] sm:$0xff] %vm259, %v4799
      %4832 = vst.msk [vmem:[%s224 + $0xe8] sm:$0xff] %vm259, %v4800
      %4833 = vst.msk [vmem:[%s224 + $0xf0] sm:$0xff] %vm259, %v4801
      %4834 = vst.msk [vmem:[%s224 + $0xf8] sm:$0xff] %vm259, %v4802
      %p4835 = scmp.lt.s32.totalorder %s16, 1
      %s4836 = scalar_select %p4835, %s16, 1
      %s4837 = smul.addr %s4836, 32
      %s4838 = smul.addr %s4837, 8
      %s4839 = scalar_lea.vmem %s5, %s4838
      // Predicated region
      $region41: #{residual_block.1} parent=39 // pred_check
        %p4840 = pneg %p144
      $region42: #{residual_block.1} parent=39 // pred_check_branch
        %4842 = sbr.rel (%p4840) target = $region44
      $region43: #{residual_block.1} parent=39 // pred_region
        _
      $region44: #{residual_block.1} parent=39 // pred_fallthru
        _
    $region40: #{residual_block.1} parent=5 // pred_fallthru
      _
    %p4843 = scmp.le.s32.totalorder 2, %s11
    // Predicated region
    $region45: #{residual_block.1} parent=5 // pred_check
      %p4844 = pneg %p4843
    $region46: #{residual_block.1} parent=5 // pred_check_branch
      %4846 = sbr.rel (%p4844) target = $region48
    $region47: #{residual_block.1} parent=5 // pred_region
      %s4847 = ssub.s32 %s11, 2
      // Predicated region
      $region49: #{residual_block.1} parent=47 // pred_check
        %p4848 = pneg %p150
      $region50: #{residual_block.1} parent=47 // pred_check_branch
        %4850 = sbr.rel (%p4848) target = $region52
      $region51: #{residual_block.1} parent=47 // pred_region
        %p4851 = scmp.lt.s32.totalorder %s17, 1
        %s4852 = scalar_select %p4851, %s17, 1
        %s4853 = smul.addr %s4852, 32
        %s4854 = smul.addr %s4853, 8
        %s4855 = scalar_lea.vmem %s5, %s4854
      $region52: #{residual_block.1} parent=47 // pred_fallthru
        _
    $region48: #{residual_block.1} parent=5 // pred_fallthru
      _
  $region6: #{residual_block.1} parent=0 // loop_footer
    %s15 = sadd.s32 1, %s11
  $region7: #{residual_block.1} parent=0 // loop_footer_branch
    %10 = sbr.rel target = $region3
  $region8: #{residual_block.1} parent=0 // loop_exit
    _

</llo_original>
